<compile_context>
chip_gen: v7x
topology: tpu7x:2x2x1
jax: 0.10.0
libtpu: 0.0.40
codegen_flags: <defaults>
</compile_context>

<pallas_src>
import numpy as np
import jax
import jax.numpy as jnp
from jax.experimental import pallas as pl
from jax.experimental.pallas import tpu as pltpu  # noqa: F401  (kept for TPU-specific tweaks)

X_DIM = 8
H_DIM = 32
Z_DIM = 16
BATCH = 8
SEQ = 6


# ----------------------------- math helpers (same formulas used in kernel & ref)
def _relu(a):
    return jnp.maximum(a, 0.0)


def _sigmoid(a):
    return 1.0 / (1.0 + jnp.exp(-a))


def _softplus(a):
    # matches torch.nn.Softplus(beta=1, threshold=20)
    return jnp.where(a > 20.0, a, jnp.log(1.0 + jnp.exp(jnp.minimum(a, 20.0))))


# ----------------------------- deterministic parameter init (shapes from __init__)
def init_params(key, x_dim=X_DIM, h_dim=H_DIM, z_dim=Z_DIM):
    keys = iter(jax.random.split(key, 64))

    def linear(fan_in, fan_out):
        s = 1.0 / np.sqrt(fan_in)
        w = jax.random.uniform(next(keys), (fan_in, fan_out), jnp.float32, -s, s)
        b = jax.random.uniform(next(keys), (1, fan_out), jnp.float32, -s, s)
        return w, b

    p = {}
    # phi_x / phi_z: 4 x (Linear + ReLU)
    for i, d in enumerate([x_dim, h_dim, h_dim, h_dim]):
        p[f"phix_w{i}"], p[f"phix_b{i}"] = linear(d, h_dim)
    for i, d in enumerate([z_dim, h_dim, h_dim, h_dim]):
        p[f"phiz_w{i}"], p[f"phiz_b{i}"] = linear(d, h_dim)
    # prior feature + mean/std heads, encoder mean/std heads
    p["priorfea_w"], p["priorfea_b"] = linear(h_dim, h_dim)
    for name in ("priormean", "priorstd", "encmean", "encstd"):
        p[f"{name}_w0"], p[f"{name}_b0"] = linear(h_dim, h_dim)
        p[f"{name}_w1"], p[f"{name}_b1"] = linear(h_dim, h_dim)
        p[f"{name}_w2"], p[f"{name}_b2"] = linear(h_dim, z_dim)
    # decoder mean head (ends in x_dim, Sigmoid)
    p["decmean_w0"], p["decmean_b0"] = linear(h_dim, h_dim)
    p["decmean_w1"], p["decmean_b1"] = linear(h_dim, h_dim)
    p["decmean_w2"], p["decmean_b2"] = linear(h_dim, x_dim)
    # encoder / decoder_fea first layer takes a concat of size 2*h_dim; store the
    # weight split in two (h_dim, h_dim) halves (re-packed for the kernel below).
    w, b = linear(2 * h_dim, h_dim)
    p["enc_w0a"], p["enc_w0b"], p["enc_b0"] = w[:h_dim], w[h_dim:], b   # [phi_x ; h]
    p["enc_w1"], p["enc_b1"] = linear(h_dim, h_dim)
    w, b = linear(2 * h_dim, h_dim)
    p["dec_w0a"], p["dec_w0b"], p["dec_b0"] = w[:h_dim], w[h_dim:], b   # [phi_z ; h]
    p["dec_w1"], p["dec_b1"] = linear(h_dim, h_dim)
    # GRUCell(2*h_dim, h_dim): weight_ih (3H, 2H), weight_hh (3H, H), biases (3H,)
    s = 1.0 / np.sqrt(h_dim)
    w_ih = jax.random.uniform(next(keys), (2 * h_dim, 3 * h_dim), jnp.float32, -s, s)
    w_hh = jax.random.uniform(next(keys), (h_dim, 3 * h_dim), jnp.float32, -s, s)
    b_ih = jax.random.uniform(next(keys), (1, 3 * h_dim), jnp.float32, -s, s)
    b_hh = jax.random.uniform(next(keys), (1, 3 * h_dim), jnp.float32, -s, s)
    for gi, g in enumerate(("r", "z", "n")):
        sl = slice(gi * h_dim, (gi + 1) * h_dim)
        p[f"gru_wi{g}_x"] = w_ih[:h_dim, sl]     # input = cat([phi_x, phi_z])
        p[f"gru_wi{g}_z"] = w_ih[h_dim:, sl]
        p[f"gru_wh{g}"] = w_hh[:, sl]
        p[f"gru_bi{g}"] = b_ih[:, sl]
        p[f"gru_bh{g}"] = b_hh[:, sl]
    # TODO(synk): the decoder_std branch of the reference is computed but never used
    # in the returned losses; it is omitted here (no effect on outputs).
    return p


# ----------------------------- host-side packing into ONE (R,128) slab
def build_param_slab(params, vmax):
    """Pack every weight / bias (plus vmax) into a single (R,128) f32 slab.

    Each entry starts on an 8-row (sublane tile) aligned offset so every
    in-kernel `slab_ref[off:off+k, :n]` slice is tile aligned.  Returns the
    slab plus a static {name: (row_offset, (rows, cols))} metadata dict.
    """
    H = H_DIM
    p = {k: np.asarray(v, np.float32) for k, v in params.items()}

    def cat1(*xs):
        return np.concatenate(xs, axis=1)

    def cat0(*xs):
        return np.concatenate(xs, axis=0)

    def bdiag(wa, wb):  # block-diagonal [[wa, 0], [0, wb]]
        out = np.zeros((wa.shape[0] + wb.shape[0], wa.shape[1] + wb.shape[1]), np.float32)
        out[:wa.shape[0], :wa.shape[1]] = wa
        out[wa.shape[0]:, wa.shape[1]:] = wb
        return out

    mats = {}
    # ---- weights (row counts are all multiples of 8)
    for i in range(4):
        mats[f"phix_w{i}"] = p[f"phix_w{i}"]
        mats[f"phiz_w{i}"] = p[f"phiz_w{i}"]
    # phi_x-side fusion: encoder first-layer term + GRU input-gate term, (H, 4H)
    mats["w_px"] = cat1(p["enc_w0a"], *[p[f"gru_wi{g}_x"] for g in "rzn"])
    # h-side fusion: encoder first-layer term + GRU hidden-gate term, (H, 4H)
    mats["w_h"] = cat1(p["enc_w0b"], *[p[f"gru_wh{g}"] for g in "rzn"])
    mats["enc_w1"] = p["enc_w1"]
    mats["gru_wiz"] = cat1(*[p[f"gru_wi{g}_z"] for g in "rzn"])          # (H, 3H)
    # fused mean/std head pairs (share the same input)
    for out, m, s in (("ench", "encmean", "encstd"), ("priorh", "priormean", "priorstd")):
        mats[f"{out}_w0"] = cat1(p[f"{m}_w0"], p[f"{s}_w0"])             # (H, 2H)
        mats[f"{out}_w1"] = bdiag(p[f"{m}_w1"], p[f"{s}_w1"])            # (2H, 2H)
        mats[f"{out}_w2"] = bdiag(p[f"{m}_w2"], p[f"{s}_w2"])            # (2H, 2Z)
    mats["priorfea_w"] = p["priorfea_w"]
    mats["dec_w0a"] = p["dec_w0a"]
    mats["dec_w0b"] = p["dec_w0b"]
    mats["dec_w1"] = p["dec_w1"]
    mats["decm_w0"] = p["decmean_w0"]
    mats["decm_w1"] = p["decmean_w1"]
    mats["decm_w2"] = p["decmean_w2"]
    # ---- biases (one row each; stored lane-padded)
    for i in range(4):
        mats[f"phix_b{i}"] = p[f"phix_b{i}"]
        mats[f"phiz_b{i}"] = p[f"phiz_b{i}"]
    mats["b_px"] = cat1(p["enc_b0"], *[p[f"gru_bi{g}"] for g in "rzn"])  # (1, 4H)
    mats["b_h"] = cat1(np.zeros((1, H), np.float32), *[p[f"gru_bh{g}"] for g in "rzn"])
    mats["enc_b1"] = p["enc_b1"]
    for out, m, s in (("ench", "encmean", "encstd"), ("priorh", "priormean", "priorstd")):
        for i in range(3):
            mats[f"{out}_b{i}"] = cat1(p[f"{m}_b{i}"], p[f"{s}_b{i}"])
    mats["priorfea_b"] = p["priorfea_b"]
    mats["dec_b0"] = p["dec_b0"]
    mats["dec_b1"] = p["dec_b1"]
    mats["decm_b0"] = p["decmean_b0"]
    mats["decm_b1"] = p["decmean_b1"]
    mats["decm_b2"] = p["decmean_b2"]
    mats["vmax"] = np.asarray(vmax, np.float32).reshape(1, -1)

    offsets, rows = {}, 0
    for name, a in mats.items():
        offsets[name] = rows
        rows += ((a.shape[0] + 7) // 8) * 8          # keep every entry 8-aligned
    slab = np.zeros((rows, 128), np.float32)
    for name, a in mats.items():
        slab[offsets[name]:offsets[name] + a.shape[0], :a.shape[1]] = a
    meta = {name: (offsets[name], a.shape) for name, a in mats.items()}
    return jnp.asarray(slab), meta


# ----------------------------- Pallas kernel + wrapper
def vrnn_pallas(x_bt, noise_tb, vmax, vmin, params):
    """x_bt: (B, T, x_dim) float32 (PyTorch layout).  Returns (kld_loss, mse_loss)."""
    del vmin  # (dec*max+min) - (x*max+min) == (dec - x)*max: vmin cancels exactly.
    B, T, X = x_bt.shape
    H = params["phix_w0"].shape[1]
    Z = params["phiz_w0"].shape[0]

    # time-major flattening: row t*B + b  <->  x[b, t]
    x_flat = jnp.transpose(x_bt, (1, 0, 2)).reshape(T * B, X)
    noise_flat = noise_tb.reshape(T * B, Z)
    slab, meta = build_param_slab(params, vmax)

    bf16 = jnp.bfloat16

    def kernel(x_ref, eps_ref, p_ref, out_ref):
        def ld(name):                       # f32 view of one packed parameter
            off, (k, n) = meta[name]
            return p_ref[off:off + k, :n]

        def ldw(name):                      # bf16 MXU operand (single-pass matmuls)
            return ld(name).astype(bf16)

        def ldb(name):                      # bias pre-broadcast to B rows (hoisted)
            b = ld(name)
            return jnp.broadcast_to(b, (B, b.shape[1]))

        def mm(a, w):                       # bf16 x bf16 -> f32 MXU dot
            return jnp.dot(a.astype(bf16), w, preferred_element_type=jnp.float32)

        def sigmoid(a):                     # EUP reciprocal instead of a dependent divide
            return pl.reciprocal(1.0 + jnp.exp(-a), approx=True)

        # ---- hoisted parameter loads (the unrolled time loop re-uses these values)
        w_phix = [ldw(f"phix_w{i}") for i in range(4)]
        b_phix = [ld(f"phix_b{i}") for i in range(4)]
        w_px, b_px = ldw("w_px"), ld("b_px")
        w_h, b_h = ldw("w_h"), ldb("b_h")
        w_enc1, b_enc1 = ldw("enc_w1"), ldb("enc_b1")
        w_ench = [ldw(f"ench_w{i}") for i in range(3)]
        b_ench = [ldb(f"ench_b{i}") for i in range(3)]
        w_phiz = [ldw(f"phiz_w{i}") for i in range(4)]
        b_phiz = [ldb(f"phiz_b{i}") for i in range(4)]
        w_giz = ldw("gru_wiz")
        w_pfea, b_pfea = ldw("priorfea_w"), ld("priorfea_b")
        w_prh = [ldw(f"priorh_w{i}") for i in range(3)]
        b_prh = [ld(f"priorh_b{i}") for i in range(3)]
        w_dec0a, w_dec0b, b_dec0 = ldw("dec_w0a"), ldw("dec_w0b"), ld("dec_b0")
        w_dec1, b_dec1 = ldw("dec_w1"), ld("dec_b1")
        w_dm0, b_dm0 = ldw("decm_w0"), ld("decm_b0")
        w_dm1, b_dm1 = ldw("decm_w1"), ld("decm_b1")
        w_dm2, b_dm2 = ldw("decm_w2"), ld("decm_b2")
        vmax_row = ld("vmax")                           # (1, X)

        x_all = x_ref[...]                              # (T*B, X)
        eps_all = eps_ref[...]                          # (T*B, Z)

        # ---- batched pre-pass over all T*B rows: phi_x and its fused consumers
        a = _relu(mm(x_all, w_phix[0]) + b_phix[0])
        for i in range(1, 4):
            a = _relu(mm(a, w_phix[i]) + b_phix[i])
        # [phi_x@enc_w0a + enc_b0 | phi_x@gru_wi_x + gru_bi]  -> (T*B, 4H)
        px_all = mm(a, w_px) + b_px

        # ---- recurrence (static unroll).  Only what z_t / h_t need stays serial;
        # the prior and decoder heads are deferred and run batched after the loop.
        h = jnp.zeros((B, H), jnp.float32)
        h_prev_l, phi_z_l, enc_mean_l, enc_std_l = [], [], [], []
        for t in range(T):
            r0 = t * B
            h_prev_l.append(h)
            px = px_all[r0:r0 + B, :]                   # (B, 4H)
            eps = eps_all[r0:r0 + B, :]                 # (B, Z)

            # single fused dot for everything that consumes h this step
            hf = mm(h, w_h) + b_h                       # (B, 4H): [enc | gru r|z|n]

            # encoder -> z_t
            e = _relu(px[:, :H] + hf[:, :H])
            e = _relu(mm(e, w_enc1) + b_enc1)
            a0 = _relu(mm(e, w_ench[0]) + b_ench[0])
            a1 = _relu(mm(a0, w_ench[1]) + b_ench[1])
            a2 = mm(a1, w_ench[2]) + b_ench[2]          # (B, 2Z) = [mean | std pre-act]
            enc_mean = a2[:, :Z]
            enc_std = _softplus(a2[:, Z:])
            z = eps * enc_std + enc_mean

            # phi_z
            pz = _relu(mm(z, w_phiz[0]) + b_phiz[0])
            for i in range(1, 4):
                pz = _relu(mm(pz, w_phiz[i]) + b_phiz[i])

            # GRU cell (input/hidden biases already folded into px / hf)
            gi = px[:, H:] + mm(pz, w_giz)              # (B, 3H)
            gh = hf[:, H:]                              # (B, 3H)
            rz = sigmoid(gi[:, :2 * H] + gh[:, :2 * H])
            r, zg = rz[:, :H], rz[:, H:]
            n = jnp.tanh(gi[:, 2 * H:] + r * gh[:, 2 * H:])
            h = (1.0 - zg) * n + zg * h

            phi_z_l.append(pz)
            enc_mean_l.append(enc_mean)
            enc_std_l.append(enc_std)

        h_prev = jnp.concatenate(h_prev_l, axis=0)      # (T*B, H)
        phi_z = jnp.concatenate(phi_z_l, axis=0)        # (T*B, H)
        enc_mean = jnp.concatenate(enc_mean_l, axis=0)  # (T*B, Z)
        enc_std = jnp.concatenate(enc_std_l, axis=0)    # (T*B, Z)

        # ---- deferred prior path (feeds only the KLD), batched on 48 rows
        pf = _relu(mm(h_prev, w_pfea) + b_pfea)
        q = _relu(mm(pf, w_prh[0]) + b_prh[0])
        q = _relu(mm(q, w_prh[1]) + b_prh[1])
        q = mm(q, w_prh[2]) + b_prh[2]                  # (T*B, 2Z)
        prior_mean = q[:, :Z]
        prior_std = _softplus(q[:, Z:])

        # ---- deferred decoder-mean path (feeds only the MSE), batched on 48 rows
        d = _relu(mm(phi_z, w_dec0a) + mm(h_prev, w_dec0b) + b_dec0)
        d = _relu(mm(d, w_dec1) + b_dec1)
        dm = _relu(mm(d, w_dm0) + b_dm0)
        dm = _relu(mm(dm, w_dm1) + b_dm1)
        dec_mean = sigmoid(mm(dm, w_dm2) + b_dm2)       # (T*B, X)

        # ---- losses (reduced once, written to one small output)
        kld_el = (2.0 * jnp.log(prior_std / enc_std)
                  + (enc_std ** 2 + (enc_mean - prior_mean) ** 2) / (prior_std ** 2) - 1.0)
        diff = (dec_mean - x_all) * vmax_row
        kld = 0.5 * jnp.sum(kld_el, axis=(0, 1), keepdims=True)                   # (1,1)
        mse = jnp.sum(diff * diff, axis=(0, 1), keepdims=True) / float(B * X)     # (1,1)
        out_ref[0:1, :] = jnp.broadcast_to(kld, (1, 128))
        out_ref[1:2, :] = jnp.broadcast_to(mse, (1, 128))

    out = pl.pallas_call(
        kernel,
        out_shape=jax.ShapeDtypeStruct((2, 128), jnp.float32),
    )(x_flat, noise_flat, slab)
    return out[0, 0], out[1, 0]


# ----------------------------- pure-JAX reference (mirrors the torch forward, f32)
def vrnn_reference(x_bt, noise_tb, vmax, vmin, P):
    B, T, _ = x_bt.shape
    H = P["phix_w0"].shape[1]
    h = jnp.zeros((B, H), jnp.float32)
    kld = jnp.float32(0.0)
    mse = jnp.float32(0.0)

    def lin(a, wn, bn):
        return a @ P[wn] + P[bn]

    def seq_relu(a, prefix, n):
        for i in range(n):
            a = _relu(lin(a, f"{prefix}_w{i}", f"{prefix}_b{i}"))
        return a

    def head(a, prefix):
        a = _relu(lin(a, f"{prefix}_w0", f"{prefix}_b0"))
        a = _relu(lin(a, f"{prefix}_w1", f"{prefix}_b1"))
        return lin(a, f"{prefix}_w2", f"{prefix}_b2")

    for t in range(T):
        x_t = x_bt[:, t, :]
        eps = noise_tb[t]
        phi_x = seq_relu(x_t, "phix", 4)
        pf = _relu(lin(h, "priorfea_w", "priorfea_b"))
        prior_mean = head(pf, "priormean")
        prior_std = _softplus(head(pf, "priorstd"))
        e = _relu(phi_x @ P["enc_w0a"] + h @ P["enc_w0b"] + P["enc_b0"])
        e = _relu(lin(e, "enc_w1", "enc_b1"))
        enc_mean = head(e, "encmean")
        enc_std = _softplus(head(e, "encstd"))
        z_t = eps * enc_std + enc_mean
        phi_z = seq_relu(z_t, "phiz", 4)
        d = _relu(phi_z @ P["dec_w0a"] + h @ P["dec_w0b"] + P["dec_b0"])
        d = _relu(lin(d, "dec_w1", "dec_b1"))
        dec_mean = _sigmoid(head(d, "decmean"))
        gi = lambda g: phi_x @ P[f"gru_wi{g}_x"] + phi_z @ P[f"gru_wi{g}_z"] + P[f"gru_bi{g}"]
        gh = lambda g: h @ P[f"gru_wh{g}"] + P[f"gru_bh{g}"]
        r = _sigmoid(gi("r") + gh("r"))
        zg = _sigmoid(gi("z") + gh("z"))
        nn_ = jnp.tanh(gi("n") + r * gh("n"))
        h = (1.0 - zg) * nn_ + zg * h
        kld_el = (2.0 * jnp.log(prior_std) - 2.0 * jnp.log(enc_std)
                  + (enc_std ** 2 + (enc_mean - prior_mean) ** 2) / (prior_std ** 2) - 1.0)
        kld = kld + 0.5 * jnp.sum(kld_el)
        diff = (dec_mean * vmax + vmin) - (x_t * vmax + vmin)
        mse = mse + jnp.mean(diff * diff)
    return kld, mse


if __name__ == "__main__":
    key = jax.random.PRNGKey(0)
    kp, kx, kn, kmax, kmin = jax.random.split(key, 5)
    params = init_params(kp)
    x = jax.random.uniform(kx, (BATCH, SEQ, X_DIM), jnp.float32)          # data in [0,1)
    noise = jax.random.normal(kn, (SEQ, BATCH, Z_DIM), jnp.float32)       # reparam noise
    vmax = jax.random.uniform(kmax, (1, X_DIM), jnp.float32, 1.0, 2.0)
    vmin = jax.random.uniform(kmin, (1, X_DIM), jnp.float32, 0.0, 1.0)

    kld, mse = vrnn_pallas(x, noise, vmax, vmin, params)
    jax.block_until_ready((kld, mse))

    kld_ref, mse_ref = vrnn_reference(x, noise, vmax, vmin, params)
    # kernel uses bf16 MXU operands + approx reciprocal sigmoid -> slightly looser tol
    assert np.allclose(float(kld), float(kld_ref), rtol=3e-2, atol=3e-3), (float(kld), float(kld_ref))
    assert np.allclose(float(mse), float(mse_ref), rtol=3e-2, atol=3e-3), (float(mse), float(mse_ref))
    print("KERNEL_OK")
</pallas_src>

<mosaic_0001>
module attributes {stable_mosaic.version = 11 : i64} {
  func.func @kernel(%arg0: memref<48x8xf32, #tpu.memory_space<vmem>>, %arg1: memref<48x16xf32, #tpu.memory_space<vmem>>, %arg2: memref<1080x128xf32, #tpu.memory_space<vmem>>, %arg3: memref<2x128xf32, #tpu.memory_space<vmem>>) attributes {dimension_semantics = [], scalar_prefetch = 0 : i64, scratch_operands = 0 : i64, tpu.core_type = #tpu.core_type<tc>} {
    %c0 = arith.constant 0 : index
    %c0_0 = arith.constant 0 : index
    %0 = vector.load %arg2[%c0, %c0_0] : memref<1080x128xf32, #tpu.memory_space<vmem>>, vector<8x32xf32>
    %1 = arith.truncf %0 : vector<8x32xf32> to vector<8x32xbf16>
    %c24 = arith.constant 24 : index
    %c0_1 = arith.constant 0 : index
    %2 = vector.load %arg2[%c24, %c0_1] : memref<1080x128xf32, #tpu.memory_space<vmem>>, vector<32x32xf32>
    %3 = arith.truncf %2 : vector<32x32xf32> to vector<32x32xbf16>
    %c88 = arith.constant 88 : index
    %c0_2 = arith.constant 0 : index
    %4 = vector.load %arg2[%c88, %c0_2] : memref<1080x128xf32, #tpu.memory_space<vmem>>, vector<32x32xf32>
    %5 = arith.truncf %4 : vector<32x32xf32> to vector<32x32xbf16>
    %c152 = arith.constant 152 : index
    %c0_3 = arith.constant 0 : index
    %6 = vector.load %arg2[%c152, %c0_3] : memref<1080x128xf32, #tpu.memory_space<vmem>>, vector<32x32xf32>
    %7 = arith.truncf %6 : vector<32x32xf32> to vector<32x32xbf16>
    %c888 = arith.constant 888 : index
    %c0_4 = arith.constant 0 : index
    %8 = vector.load %arg2[%c888, %c0_4] : memref<1080x128xf32, #tpu.memory_space<vmem>>, vector<1x32xf32>
    %c904 = arith.constant 904 : index
    %c0_5 = arith.constant 0 : index
    %9 = vector.load %arg2[%c904, %c0_5] : memref<1080x128xf32, #tpu.memory_space<vmem>>, vector<1x32xf32>
    %c920 = arith.constant 920 : index
    %c0_6 = arith.constant 0 : index
    %10 = vector.load %arg2[%c920, %c0_6] : memref<1080x128xf32, #tpu.memory_space<vmem>>, vector<1x32xf32>
    %c936 = arith.constant 936 : index
    %c0_7 = arith.constant 0 : index
    %11 = vector.load %arg2[%c936, %c0_7] : memref<1080x128xf32, #tpu.memory_space<vmem>>, vector<1x32xf32>
    %c216 = arith.constant 216 : index
    %c0_8 = arith.constant 0 : index
    %12 = vector.load %arg2[%c216, %c0_8] : memref<1080x128xf32, #tpu.memory_space<vmem>>, vector<32x128xf32>
    %13 = arith.truncf %12 : vector<32x128xf32> to vector<32x128xbf16>
    %c952 = arith.constant 952 : index
    %c0_9 = arith.constant 0 : index
    %14 = vector.load %arg2[%c952, %c0_9] : memref<1080x128xf32, #tpu.memory_space<vmem>>, vector<1x128xf32>
    %c248 = arith.constant 248 : index
    %c0_10 = arith.constant 0 : index
    %15 = vector.load %arg2[%c248, %c0_10] : memref<1080x128xf32, #tpu.memory_space<vmem>>, vector<32x128xf32>
    %16 = arith.truncf %15 : vector<32x128xf32> to vector<32x128xbf16>
    %c960 = arith.constant 960 : index
    %c0_11 = arith.constant 0 : index
    %17 = vector.load %arg2[%c960, %c0_11] : memref<1080x128xf32, #tpu.memory_space<vmem>>, vector<1x128xf32>
    %18 = vector.shape_cast %17 : vector<1x128xf32> to vector<1x128xf32>
    %19 = vector.broadcast %18 : vector<1x128xf32> to vector<8x128xf32>
    %c280 = arith.constant 280 : index
    %c0_12 = arith.constant 0 : index
    %20 = vector.load %arg2[%c280, %c0_12] : memref<1080x128xf32, #tpu.memory_space<vmem>>, vector<32x32xf32>
    %21 = arith.truncf %20 : vector<32x32xf32> to vector<32x32xbf16>
    %c968 = arith.constant 968 : index
    %c0_13 = arith.constant 0 : index
    %22 = vector.load %arg2[%c968, %c0_13] : memref<1080x128xf32, #tpu.memory_space<vmem>>, vector<1x32xf32>
    %23 = vector.shape_cast %22 : vector<1x32xf32> to vector<1x32xf32>
    %24 = vector.broadcast %23 : vector<1x32xf32> to vector<8x32xf32>
    %c344 = arith.constant 344 : index
    %c0_14 = arith.constant 0 : index
    %25 = vector.load %arg2[%c344, %c0_14] : memref<1080x128xf32, #tpu.memory_space<vmem>>, vector<32x64xf32>
    %26 = arith.truncf %25 : vector<32x64xf32> to vector<32x64xbf16>
    %c376 = arith.constant 376 : index
    %c0_15 = arith.constant 0 : index
    %27 = vector.load %arg2[%c376, %c0_15] : memref<1080x128xf32, #tpu.memory_space<vmem>>, vector<64x64xf32>
    %28 = arith.truncf %27 : vector<64x64xf32> to vector<64x64xbf16>
    %c440 = arith.constant 440 : index
    %c0_16 = arith.constant 0 : index
    %29 = vector.load %arg2[%c440, %c0_16] : memref<1080x128xf32, #tpu.memory_space<vmem>>, vector<64x32xf32>
    %30 = arith.truncf %29 : vector<64x32xf32> to vector<64x32xbf16>
    %c976 = arith.constant 976 : index
    %c0_17 = arith.constant 0 : index
    %31 = vector.load %arg2[%c976, %c0_17] : memref<1080x128xf32, #tpu.memory_space<vmem>>, vector<1x64xf32>
    %32 = vector.shape_cast %31 : vector<1x64xf32> to vector<1x64xf32>
    %33 = vector.broadcast %32 : vector<1x64xf32> to vector<8x64xf32>
    %c984 = arith.constant 984 : index
    %c0_18 = arith.constant 0 : index
    %34 = vector.load %arg2[%c984, %c0_18] : memref<1080x128xf32, #tpu.memory_space<vmem>>, vector<1x64xf32>
    %35 = vector.shape_cast %34 : vector<1x64xf32> to vector<1x64xf32>
    %36 = vector.broadcast %35 : vector<1x64xf32> to vector<8x64xf32>
    %c992 = arith.constant 992 : index
    %c0_19 = arith.constant 0 : index
    %37 = vector.load %arg2[%c992, %c0_19] : memref<1080x128xf32, #tpu.memory_space<vmem>>, vector<1x32xf32>
    %38 = vector.shape_cast %37 : vector<1x32xf32> to vector<1x32xf32>
    %39 = vector.broadcast %38 : vector<1x32xf32> to vector<8x32xf32>
    %c8 = arith.constant 8 : index
    %c0_20 = arith.constant 0 : index
    %40 = vector.load %arg2[%c8, %c0_20] : memref<1080x128xf32, #tpu.memory_space<vmem>>, vector<16x32xf32>
    %41 = arith.truncf %40 : vector<16x32xf32> to vector<16x32xbf16>
    %c56 = arith.constant 56 : index
    %c0_21 = arith.constant 0 : index
    %42 = vector.load %arg2[%c56, %c0_21] : memref<1080x128xf32, #tpu.memory_space<vmem>>, vector<32x32xf32>
    %43 = arith.truncf %42 : vector<32x32xf32> to vector<32x32xbf16>
    %c120 = arith.constant 120 : index
    %c0_22 = arith.constant 0 : index
    %44 = vector.load %arg2[%c120, %c0_22] : memref<1080x128xf32, #tpu.memory_space<vmem>>, vector<32x32xf32>
    %45 = arith.truncf %44 : vector<32x32xf32> to vector<32x32xbf16>
    %c184 = arith.constant 184 : index
    %c0_23 = arith.constant 0 : index
    %46 = vector.load %arg2[%c184, %c0_23] : memref<1080x128xf32, #tpu.memory_space<vmem>>, vector<32x32xf32>
    %47 = arith.truncf %46 : vector<32x32xf32> to vector<32x32xbf16>
    %c896 = arith.constant 896 : index
    %c0_24 = arith.constant 0 : index
    %48 = vector.load %arg2[%c896, %c0_24] : memref<1080x128xf32, #tpu.memory_space<vmem>>, vector<1x32xf32>
    %49 = vector.shape_cast %48 : vector<1x32xf32> to vector<1x32xf32>
    %50 = vector.broadcast %49 : vector<1x32xf32> to vector<8x32xf32>
    %c912 = arith.constant 912 : index
    %c0_25 = arith.constant 0 : index
    %51 = vector.load %arg2[%c912, %c0_25] : memref<1080x128xf32, #tpu.memory_space<vmem>>, vector<1x32xf32>
    %52 = vector.shape_cast %51 : vector<1x32xf32> to vector<1x32xf32>
    %53 = vector.broadcast %52 : vector<1x32xf32> to vector<8x32xf32>
    %c928 = arith.constant 928 : index
    %c0_26 = arith.constant 0 : index
    %54 = vector.load %arg2[%c928, %c0_26] : memref<1080x128xf32, #tpu.memory_space<vmem>>, vector<1x32xf32>
    %55 = vector.shape_cast %54 : vector<1x32xf32> to vector<1x32xf32>
    %56 = vector.broadcast %55 : vector<1x32xf32> to vector<8x32xf32>
    %c944 = arith.constant 944 : index
    %c0_27 = arith.constant 0 : index
    %57 = vector.load %arg2[%c944, %c0_27] : memref<1080x128xf32, #tpu.memory_space<vmem>>, vector<1x32xf32>
    %58 = vector.shape_cast %57 : vector<1x32xf32> to vector<1x32xf32>
    %59 = vector.broadcast %58 : vector<1x32xf32> to vector<8x32xf32>
    %c312 = arith.constant 312 : index
    %c0_28 = arith.constant 0 : index
    %60 = vector.load %arg2[%c312, %c0_28] : memref<1080x128xf32, #tpu.memory_space<vmem>>, vector<32x96xf32>
    %61 = arith.truncf %60 : vector<32x96xf32> to vector<32x96xbf16>
    %c664 = arith.constant 664 : index
    %c0_29 = arith.constant 0 : index
    %62 = vector.load %arg2[%c664, %c0_29] : memref<1080x128xf32, #tpu.memory_space<vmem>>, vector<32x32xf32>
    %63 = arith.truncf %62 : vector<32x32xf32> to vector<32x32xbf16>
    %c1024 = arith.constant 1024 : index
    %c0_30 = arith.constant 0 : index
    %64 = vector.load %arg2[%c1024, %c0_30] : memref<1080x128xf32, #tpu.memory_space<vmem>>, vector<1x32xf32>
    %c504 = arith.constant 504 : index
    %c0_31 = arith.constant 0 : index
    %65 = vector.load %arg2[%c504, %c0_31] : memref<1080x128xf32, #tpu.memory_space<vmem>>, vector<32x64xf32>
    %66 = arith.truncf %65 : vector<32x64xf32> to vector<32x64xbf16>
    %c536 = arith.constant 536 : index
    %c0_32 = arith.constant 0 : index
    %67 = vector.load %arg2[%c536, %c0_32] : memref<1080x128xf32, #tpu.memory_space<vmem>>, vector<64x64xf32>
    %68 = arith.truncf %67 : vector<64x64xf32> to vector<64x64xbf16>
    %c600 = arith.constant 600 : index
    %c0_33 = arith.constant 0 : index
    %69 = vector.load %arg2[%c600, %c0_33] : memref<1080x128xf32, #tpu.memory_space<vmem>>, vector<64x32xf32>
    %70 = arith.truncf %69 : vector<64x32xf32> to vector<64x32xbf16>
    %c1000 = arith.constant 1000 : index
    %c0_34 = arith.constant 0 : index
    %71 = vector.load %arg2[%c1000, %c0_34] : memref<1080x128xf32, #tpu.memory_space<vmem>>, vector<1x64xf32>
    %c1008 = arith.constant 1008 : index
    %c0_35 = arith.constant 0 : index
    %72 = vector.load %arg2[%c1008, %c0_35] : memref<1080x128xf32, #tpu.memory_space<vmem>>, vector<1x64xf32>
    %c1016 = arith.constant 1016 : index
    %c0_36 = arith.constant 0 : index
    %73 = vector.load %arg2[%c1016, %c0_36] : memref<1080x128xf32, #tpu.memory_space<vmem>>, vector<1x32xf32>
    %c696 = arith.constant 696 : index
    %c0_37 = arith.constant 0 : index
    %74 = vector.load %arg2[%c696, %c0_37] : memref<1080x128xf32, #tpu.memory_space<vmem>>, vector<32x32xf32>
    %75 = arith.truncf %74 : vector<32x32xf32> to vector<32x32xbf16>
    %c728 = arith.constant 728 : index
    %c0_38 = arith.constant 0 : index
    %76 = vector.load %arg2[%c728, %c0_38] : memref<1080x128xf32, #tpu.memory_space<vmem>>, vector<32x32xf32>
    %77 = arith.truncf %76 : vector<32x32xf32> to vector<32x32xbf16>
    %c1032 = arith.constant 1032 : index
    %c0_39 = arith.constant 0 : index
    %78 = vector.load %arg2[%c1032, %c0_39] : memref<1080x128xf32, #tpu.memory_space<vmem>>, vector<1x32xf32>
    %c760 = arith.constant 760 : index
    %c0_40 = arith.constant 0 : index
    %79 = vector.load %arg2[%c760, %c0_40] : memref<1080x128xf32, #tpu.memory_space<vmem>>, vector<32x32xf32>
    %80 = arith.truncf %79 : vector<32x32xf32> to vector<32x32xbf16>
    %c1040 = arith.constant 1040 : index
    %c0_41 = arith.constant 0 : index
    %81 = vector.load %arg2[%c1040, %c0_41] : memref<1080x128xf32, #tpu.memory_space<vmem>>, vector<1x32xf32>
    %c792 = arith.constant 792 : index
    %c0_42 = arith.constant 0 : index
    %82 = vector.load %arg2[%c792, %c0_42] : memref<1080x128xf32, #tpu.memory_space<vmem>>, vector<32x32xf32>
    %83 = arith.truncf %82 : vector<32x32xf32> to vector<32x32xbf16>
    %c1048 = arith.constant 1048 : index
    %c0_43 = arith.constant 0 : index
    %84 = vector.load %arg2[%c1048, %c0_43] : memref<1080x128xf32, #tpu.memory_space<vmem>>, vector<1x32xf32>
    %c824 = arith.constant 824 : index
    %c0_44 = arith.constant 0 : index
    %85 = vector.load %arg2[%c824, %c0_44] : memref<1080x128xf32, #tpu.memory_space<vmem>>, vector<32x32xf32>
    %86 = arith.truncf %85 : vector<32x32xf32> to vector<32x32xbf16>
    %c1056 = arith.constant 1056 : index
    %c0_45 = arith.constant 0 : index
    %87 = vector.load %arg2[%c1056, %c0_45] : memref<1080x128xf32, #tpu.memory_space<vmem>>, vector<1x32xf32>
    %c856 = arith.constant 856 : index
    %c0_46 = arith.constant 0 : index
    %88 = vector.load %arg2[%c856, %c0_46] : memref<1080x128xf32, #tpu.memory_space<vmem>>, vector<32x8xf32>
    %89 = arith.truncf %88 : vector<32x8xf32> to vector<32x8xbf16>
    %c1064 = arith.constant 1064 : index
    %c0_47 = arith.constant 0 : index
    %90 = vector.load %arg2[%c1064, %c0_47] : memref<1080x128xf32, #tpu.memory_space<vmem>>, vector<1x8xf32>
    %c1072 = arith.constant 1072 : index
    %c0_48 = arith.constant 0 : index
    %91 = vector.load %arg2[%c1072, %c0_48] : memref<1080x128xf32, #tpu.memory_space<vmem>>, vector<1x8xf32>
    %c0_49 = arith.constant 0 : index
    %c0_50 = arith.constant 0 : index
    %92 = vector.load %arg0[%c0_49, %c0_50] : memref<48x8xf32, #tpu.memory_space<vmem>>, vector<48x8xf32>
    %c0_51 = arith.constant 0 : index
    %c0_52 = arith.constant 0 : index
    %93 = vector.load %arg1[%c0_51, %c0_52] : memref<48x16xf32, #tpu.memory_space<vmem>>, vector<48x16xf32>
    %94 = arith.truncf %92 : vector<48x8xf32> to vector<48x8xbf16>
    %cst = arith.constant dense<0.000000e+00> : vector<48x32xf32>
    %95 = tpu.matmul %94, %1, %cst {dimension_numbers = #tpu.dot_dimension_numbers<[1], [0], [0], [1], [0, 0, 1, 1], [], []>} : vector<48x8xbf16>, vector<8x32xbf16>, vector<48x32xf32> -> vector<48x32xf32>
    %96 = vector.broadcast %8 : vector<1x32xf32> to vector<48x32xf32>
    %97 = arith.addf %95, %96 : vector<48x32xf32>
    %cst_53 = arith.constant 0.000000e+00 : f32
    %98 = vector.broadcast %cst_53 : f32 to vector<48x32xf32>
    %99 = arith.maximumf %97, %98 : vector<48x32xf32>
    %100 = arith.truncf %99 : vector<48x32xf32> to vector<48x32xbf16>
    %cst_54 = arith.constant dense<0.000000e+00> : vector<48x32xf32>
    %101 = tpu.matmul %100, %3, %cst_54 {dimension_numbers = #tpu.dot_dimension_numbers<[1], [0], [0], [1], [0, 0, 1, 1], [], []>} : vector<48x32xbf16>, vector<32x32xbf16>, vector<48x32xf32> -> vector<48x32xf32>
    %102 = vector.broadcast %9 : vector<1x32xf32> to vector<48x32xf32>
    %103 = arith.addf %101, %102 : vector<48x32xf32>
    %cst_55 = arith.constant 0.000000e+00 : f32
    %104 = vector.broadcast %cst_55 : f32 to vector<48x32xf32>
    %105 = arith.maximumf %103, %104 : vector<48x32xf32>
    %106 = arith.truncf %105 : vector<48x32xf32> to vector<48x32xbf16>
    %cst_56 = arith.constant dense<0.000000e+00> : vector<48x32xf32>
    %107 = tpu.matmul %106, %5, %cst_56 {dimension_numbers = #tpu.dot_dimension_numbers<[1], [0], [0], [1], [0, 0, 1, 1], [], []>} : vector<48x32xbf16>, vector<32x32xbf16>, vector<48x32xf32> -> vector<48x32xf32>
    %108 = vector.broadcast %10 : vector<1x32xf32> to vector<48x32xf32>
    %109 = arith.addf %107, %108 : vector<48x32xf32>
    %cst_57 = arith.constant 0.000000e+00 : f32
    %110 = vector.broadcast %cst_57 : f32 to vector<48x32xf32>
    %111 = arith.maximumf %109, %110 : vector<48x32xf32>
    %112 = arith.truncf %111 : vector<48x32xf32> to vector<48x32xbf16>
    %cst_58 = arith.constant dense<0.000000e+00> : vector<48x32xf32>
    %113 = tpu.matmul %112, %7, %cst_58 {dimension_numbers = #tpu.dot_dimension_numbers<[1], [0], [0], [1], [0, 0, 1, 1], [], []>} : vector<48x32xbf16>, vector<32x32xbf16>, vector<48x32xf32> -> vector<48x32xf32>
    %114 = vector.broadcast %11 : vector<1x32xf32> to vector<48x32xf32>
    %115 = arith.addf %113, %114 : vector<48x32xf32>
    %cst_59 = arith.constant 0.000000e+00 : f32
    %116 = vector.broadcast %cst_59 : f32 to vector<48x32xf32>
    %117 = arith.maximumf %115, %116 : vector<48x32xf32>
    %118 = arith.truncf %117 : vector<48x32xf32> to vector<48x32xbf16>
    %cst_60 = arith.constant dense<0.000000e+00> : vector<48x128xf32>
    %119 = tpu.matmul %118, %13, %cst_60 {dimension_numbers = #tpu.dot_dimension_numbers<[1], [0], [0], [1], [0, 0, 1, 1], [], []>} : vector<48x32xbf16>, vector<32x128xbf16>, vector<48x128xf32> -> vector<48x128xf32>
    %120 = vector.broadcast %14 : vector<1x128xf32> to vector<48x128xf32>
    %121 = arith.addf %119, %120 : vector<48x128xf32>
    %cst_61 = arith.constant 0.000000e+00 : f32
    %122 = vector.broadcast %cst_61 : f32 to vector<8x32xf32>
    %123 = vector.extract_strided_slice %121 {offsets = [0, 0], sizes = [8, 128], strides = [1, 1]} : vector<48x128xf32> to vector<8x128xf32>
    %124 = vector.extract_strided_slice %93 {offsets = [0, 0], sizes = [8, 16], strides = [1, 1]} : vector<48x16xf32> to vector<8x16xf32>
    %125 = arith.truncf %122 : vector<8x32xf32> to vector<8x32xbf16>
    %cst_62 = arith.constant dense<0.000000e+00> : vector<8x128xf32>
    %126 = tpu.matmul %125, %16, %cst_62 {dimension_numbers = #tpu.dot_dimension_numbers<[1], [0], [0], [1], [0, 0, 1, 1], [], []>} : vector<8x32xbf16>, vector<32x128xbf16>, vector<8x128xf32> -> vector<8x128xf32>
    %127 = arith.addf %126, %19 : vector<8x128xf32>
    %128 = vector.extract_strided_slice %123 {offsets = [0, 0], sizes = [8, 32], strides = [1, 1]} : vector<8x128xf32> to vector<8x32xf32>
    %129 = vector.extract_strided_slice %127 {offsets = [0, 0], sizes = [8, 32], strides = [1, 1]} : vector<8x128xf32> to vector<8x32xf32>
    %130 = arith.addf %128, %129 : vector<8x32xf32>
    %cst_63 = arith.constant 0.000000e+00 : f32
    %131 = vector.broadcast %cst_63 : f32 to vector<8x32xf32>
    %132 = arith.maximumf %130, %131 : vector<8x32xf32>
    %133 = arith.truncf %132 : vector<8x32xf32> to vector<8x32xbf16>
    %cst_64 = arith.constant dense<0.000000e+00> : vector<8x32xf32>
    %134 = tpu.matmul %133, %21, %cst_64 {dimension_numbers = #tpu.dot_dimension_numbers<[1], [0], [0], [1], [0, 0, 1, 1], [], []>} : vector<8x32xbf16>, vector<32x32xbf16>, vector<8x32xf32> -> vector<8x32xf32>
    %135 = arith.addf %134, %24 : vector<8x32xf32>
    %cst_65 = arith.constant 0.000000e+00 : f32
    %136 = vector.broadcast %cst_65 : f32 to vector<8x32xf32>
    %137 = arith.maximumf %135, %136 : vector<8x32xf32>
    %138 = arith.truncf %137 : vector<8x32xf32> to vector<8x32xbf16>
    %cst_66 = arith.constant dense<0.000000e+00> : vector<8x64xf32>
    %139 = tpu.matmul %138, %26, %cst_66 {dimension_numbers = #tpu.dot_dimension_numbers<[1], [0], [0], [1], [0, 0, 1, 1], [], []>} : vector<8x32xbf16>, vector<32x64xbf16>, vector<8x64xf32> -> vector<8x64xf32>
    %140 = arith.addf %139, %33 : vector<8x64xf32>
    %cst_67 = arith.constant 0.000000e+00 : f32
    %141 = vector.broadcast %cst_67 : f32 to vector<8x64xf32>
    %142 = arith.maximumf %140, %141 : vector<8x64xf32>
    %143 = arith.truncf %142 : vector<8x64xf32> to vector<8x64xbf16>
    %cst_68 = arith.constant dense<0.000000e+00> : vector<8x64xf32>
    %144 = tpu.matmul %143, %28, %cst_68 {dimension_numbers = #tpu.dot_dimension_numbers<[1], [0], [0], [1], [0, 0, 1, 1], [], []>} : vector<8x64xbf16>, vector<64x64xbf16>, vector<8x64xf32> -> vector<8x64xf32>
    %145 = arith.addf %144, %36 : vector<8x64xf32>
    %cst_69 = arith.constant 0.000000e+00 : f32
    %146 = vector.broadcast %cst_69 : f32 to vector<8x64xf32>
    %147 = arith.maximumf %145, %146 : vector<8x64xf32>
    %148 = arith.truncf %147 : vector<8x64xf32> to vector<8x64xbf16>
    %cst_70 = arith.constant dense<0.000000e+00> : vector<8x32xf32>
    %149 = tpu.matmul %148, %30, %cst_70 {dimension_numbers = #tpu.dot_dimension_numbers<[1], [0], [0], [1], [0, 0, 1, 1], [], []>} : vector<8x64xbf16>, vector<64x32xbf16>, vector<8x32xf32> -> vector<8x32xf32>
    %150 = arith.addf %149, %39 : vector<8x32xf32>
    %151 = vector.extract_strided_slice %150 {offsets = [0, 0], sizes = [8, 16], strides = [1, 1]} : vector<8x32xf32> to vector<8x16xf32>
    %152 = vector.extract_strided_slice %150 {offsets = [0, 16], sizes = [8, 16], strides = [1, 1]} : vector<8x32xf32> to vector<8x16xf32>
    %cst_71 = arith.constant 2.000000e+01 : f32
    %153 = vector.broadcast %cst_71 : f32 to vector<8x16xf32>
    %154 = arith.cmpf ogt, %152, %153 : vector<8x16xf32>
    %cst_72 = arith.constant 2.000000e+01 : f32
    %155 = vector.broadcast %cst_72 : f32 to vector<8x16xf32>
    %156 = arith.minimumf %152, %155 : vector<8x16xf32>
    %157 = math.exp %156 : vector<8x16xf32>
    %cst_73 = arith.constant 1.000000e+00 : f32
    %158 = vector.broadcast %cst_73 : f32 to vector<8x16xf32>
    %159 = arith.addf %158, %157 : vector<8x16xf32>
    %160 = math.log %159 : vector<8x16xf32>
    %161 = arith.select %154, %152, %160 : vector<8x16xi1>, vector<8x16xf32>
    %162 = arith.mulf %124, %161 : vector<8x16xf32>
    %163 = arith.addf %162, %151 : vector<8x16xf32>
    %164 = arith.truncf %163 : vector<8x16xf32> to vector<8x16xbf16>
    %cst_74 = arith.constant dense<0.000000e+00> : vector<8x32xf32>
    %165 = tpu.matmul %164, %41, %cst_74 {dimension_numbers = #tpu.dot_dimension_numbers<[1], [0], [0], [1], [0, 0, 1, 1], [], []>} : vector<8x16xbf16>, vector<16x32xbf16>, vector<8x32xf32> -> vector<8x32xf32>
    %166 = arith.addf %165, %50 : vector<8x32xf32>
    %cst_75 = arith.constant 0.000000e+00 : f32
    %167 = vector.broadcast %cst_75 : f32 to vector<8x32xf32>
    %168 = arith.maximumf %166, %167 : vector<8x32xf32>
    %169 = arith.truncf %168 : vector<8x32xf32> to vector<8x32xbf16>
    %cst_76 = arith.constant dense<0.000000e+00> : vector<8x32xf32>
    %170 = tpu.matmul %169, %43, %cst_76 {dimension_numbers = #tpu.dot_dimension_numbers<[1], [0], [0], [1], [0, 0, 1, 1], [], []>} : vector<8x32xbf16>, vector<32x32xbf16>, vector<8x32xf32> -> vector<8x32xf32>
    %171 = arith.addf %170, %53 : vector<8x32xf32>
    %cst_77 = arith.constant 0.000000e+00 : f32
    %172 = vector.broadcast %cst_77 : f32 to vector<8x32xf32>
    %173 = arith.maximumf %171, %172 : vector<8x32xf32>
    %174 = arith.truncf %173 : vector<8x32xf32> to vector<8x32xbf16>
    %cst_78 = arith.constant dense<0.000000e+00> : vector<8x32xf32>
    %175 = tpu.matmul %174, %45, %cst_78 {dimension_numbers = #tpu.dot_dimension_numbers<[1], [0], [0], [1], [0, 0, 1, 1], [], []>} : vector<8x32xbf16>, vector<32x32xbf16>, vector<8x32xf32> -> vector<8x32xf32>
    %176 = arith.addf %175, %56 : vector<8x32xf32>
    %cst_79 = arith.constant 0.000000e+00 : f32
    %177 = vector.broadcast %cst_79 : f32 to vector<8x32xf32>
    %178 = arith.maximumf %176, %177 : vector<8x32xf32>
    %179 = arith.truncf %178 : vector<8x32xf32> to vector<8x32xbf16>
    %cst_80 = arith.constant dense<0.000000e+00> : vector<8x32xf32>
    %180 = tpu.matmul %179, %47, %cst_80 {dimension_numbers = #tpu.dot_dimension_numbers<[1], [0], [0], [1], [0, 0, 1, 1], [], []>} : vector<8x32xbf16>, vector<32x32xbf16>, vector<8x32xf32> -> vector<8x32xf32>
    %181 = arith.addf %180, %59 : vector<8x32xf32>
    %cst_81 = arith.constant 0.000000e+00 : f32
    %182 = vector.broadcast %cst_81 : f32 to vector<8x32xf32>
    %183 = arith.maximumf %181, %182 : vector<8x32xf32>
    %184 = vector.extract_strided_slice %123 {offsets = [0, 32], sizes = [8, 96], strides = [1, 1]} : vector<8x128xf32> to vector<8x96xf32>
    %185 = arith.truncf %183 : vector<8x32xf32> to vector<8x32xbf16>
    %cst_82 = arith.constant dense<0.000000e+00> : vector<8x96xf32>
    %186 = tpu.matmul %185, %61, %cst_82 {dimension_numbers = #tpu.dot_dimension_numbers<[1], [0], [0], [1], [0, 0, 1, 1], [], []>} : vector<8x32xbf16>, vector<32x96xbf16>, vector<8x96xf32> -> vector<8x96xf32>
    %187 = arith.addf %184, %186 : vector<8x96xf32>
    %188 = vector.extract_strided_slice %127 {offsets = [0, 32], sizes = [8, 96], strides = [1, 1]} : vector<8x128xf32> to vector<8x96xf32>
    %189 = vector.extract_strided_slice %187 {offsets = [0, 0], sizes = [8, 64], strides = [1, 1]} : vector<8x96xf32> to vector<8x64xf32>
    %190 = vector.extract_strided_slice %188 {offsets = [0, 0], sizes = [8, 64], strides = [1, 1]} : vector<8x96xf32> to vector<8x64xf32>
    %191 = arith.addf %189, %190 : vector<8x64xf32>
    %cst_83 = arith.constant 0.000000e+00 : f32
    %192 = vector.broadcast %cst_83 : f32 to vector<8x64xf32>
    %193 = arith.subf %192, %191 : vector<8x64xf32>
    %194 = math.exp %193 : vector<8x64xf32>
    %cst_84 = arith.constant 1.000000e+00 : f32
    %195 = vector.broadcast %cst_84 : f32 to vector<8x64xf32>
    %196 = arith.addf %195, %194 : vector<8x64xf32>
    %197 = tpu.reciprocal %196 {approx = true} : vector<8x64xf32> -> vector<8x64xf32>
    %198 = vector.extract_strided_slice %197 {offsets = [0, 0], sizes = [8, 32], strides = [1, 1]} : vector<8x64xf32> to vector<8x32xf32>
    %199 = vector.extract_strided_slice %197 {offsets = [0, 32], sizes = [8, 32], strides = [1, 1]} : vector<8x64xf32> to vector<8x32xf32>
    %200 = vector.extract_strided_slice %187 {offsets = [0, 64], sizes = [8, 32], strides = [1, 1]} : vector<8x96xf32> to vector<8x32xf32>
    %201 = vector.extract_strided_slice %188 {offsets = [0, 64], sizes = [8, 32], strides = [1, 1]} : vector<8x96xf32> to vector<8x32xf32>
    %202 = arith.mulf %198, %201 : vector<8x32xf32>
    %203 = arith.addf %200, %202 : vector<8x32xf32>
    %204 = math.tanh %203 : vector<8x32xf32>
    %cst_85 = arith.constant 1.000000e+00 : f32
    %205 = vector.broadcast %cst_85 : f32 to vector<8x32xf32>
    %206 = arith.subf %205, %199 : vector<8x32xf32>
    %207 = arith.mulf %206, %204 : vector<8x32xf32>
    %208 = arith.mulf %199, %122 : vector<8x32xf32>
    %209 = arith.addf %207, %208 : vector<8x32xf32>
    %210 = vector.extract_strided_slice %121 {offsets = [8, 0], sizes = [8, 128], strides = [1, 1]} : vector<48x128xf32> to vector<8x128xf32>
    %211 = vector.extract_strided_slice %93 {offsets = [8, 0], sizes = [8, 16], strides = [1, 1]} : vector<48x16xf32> to vector<8x16xf32>
    %212 = arith.truncf %209 : vector<8x32xf32> to vector<8x32xbf16>
    %cst_86 = arith.constant dense<0.000000e+00> : vector<8x128xf32>
    %213 = tpu.matmul %212, %16, %cst_86 {dimension_numbers = #tpu.dot_dimension_numbers<[1], [0], [0], [1], [0, 0, 1, 1], [], []>} : vector<8x32xbf16>, vector<32x128xbf16>, vector<8x128xf32> -> vector<8x128xf32>
    %214 = arith.addf %213, %19 : vector<8x128xf32>
    %215 = vector.extract_strided_slice %210 {offsets = [0, 0], sizes = [8, 32], strides = [1, 1]} : vector<8x128xf32> to vector<8x32xf32>
    %216 = vector.extract_strided_slice %214 {offsets = [0, 0], sizes = [8, 32], strides = [1, 1]} : vector<8x128xf32> to vector<8x32xf32>
    %217 = arith.addf %215, %216 : vector<8x32xf32>
    %cst_87 = arith.constant 0.000000e+00 : f32
    %218 = vector.broadcast %cst_87 : f32 to vector<8x32xf32>
    %219 = arith.maximumf %217, %218 : vector<8x32xf32>
    %220 = arith.truncf %219 : vector<8x32xf32> to vector<8x32xbf16>
    %cst_88 = arith.constant dense<0.000000e+00> : vector<8x32xf32>
    %221 = tpu.matmul %220, %21, %cst_88 {dimension_numbers = #tpu.dot_dimension_numbers<[1], [0], [0], [1], [0, 0, 1, 1], [], []>} : vector<8x32xbf16>, vector<32x32xbf16>, vector<8x32xf32> -> vector<8x32xf32>
    %222 = arith.addf %221, %24 : vector<8x32xf32>
    %cst_89 = arith.constant 0.000000e+00 : f32
    %223 = vector.broadcast %cst_89 : f32 to vector<8x32xf32>
    %224 = arith.maximumf %222, %223 : vector<8x32xf32>
    %225 = arith.truncf %224 : vector<8x32xf32> to vector<8x32xbf16>
    %cst_90 = arith.constant dense<0.000000e+00> : vector<8x64xf32>
    %226 = tpu.matmul %225, %26, %cst_90 {dimension_numbers = #tpu.dot_dimension_numbers<[1], [0], [0], [1], [0, 0, 1, 1], [], []>} : vector<8x32xbf16>, vector<32x64xbf16>, vector<8x64xf32> -> vector<8x64xf32>
    %227 = arith.addf %226, %33 : vector<8x64xf32>
    %cst_91 = arith.constant 0.000000e+00 : f32
    %228 = vector.broadcast %cst_91 : f32 to vector<8x64xf32>
    %229 = arith.maximumf %227, %228 : vector<8x64xf32>
    %230 = arith.truncf %229 : vector<8x64xf32> to vector<8x64xbf16>
    %cst_92 = arith.constant dense<0.000000e+00> : vector<8x64xf32>
    %231 = tpu.matmul %230, %28, %cst_92 {dimension_numbers = #tpu.dot_dimension_numbers<[1], [0], [0], [1], [0, 0, 1, 1], [], []>} : vector<8x64xbf16>, vector<64x64xbf16>, vector<8x64xf32> -> vector<8x64xf32>
    %232 = arith.addf %231, %36 : vector<8x64xf32>
    %cst_93 = arith.constant 0.000000e+00 : f32
    %233 = vector.broadcast %cst_93 : f32 to vector<8x64xf32>
    %234 = arith.maximumf %232, %233 : vector<8x64xf32>
    %235 = arith.truncf %234 : vector<8x64xf32> to vector<8x64xbf16>
    %cst_94 = arith.constant dense<0.000000e+00> : vector<8x32xf32>
    %236 = tpu.matmul %235, %30, %cst_94 {dimension_numbers = #tpu.dot_dimension_numbers<[1], [0], [0], [1], [0, 0, 1, 1], [], []>} : vector<8x64xbf16>, vector<64x32xbf16>, vector<8x32xf32> -> vector<8x32xf32>
    %237 = arith.addf %236, %39 : vector<8x32xf32>
    %238 = vector.extract_strided_slice %237 {offsets = [0, 0], sizes = [8, 16], strides = [1, 1]} : vector<8x32xf32> to vector<8x16xf32>
    %239 = vector.extract_strided_slice %237 {offsets = [0, 16], sizes = [8, 16], strides = [1, 1]} : vector<8x32xf32> to vector<8x16xf32>
    %cst_95 = arith.constant 2.000000e+01 : f32
    %240 = vector.broadcast %cst_95 : f32 to vector<8x16xf32>
    %241 = arith.cmpf ogt, %239, %240 : vector<8x16xf32>
    %cst_96 = arith.constant 2.000000e+01 : f32
    %242 = vector.broadcast %cst_96 : f32 to vector<8x16xf32>
    %243 = arith.minimumf %239, %242 : vector<8x16xf32>
    %244 = math.exp %243 : vector<8x16xf32>
    %cst_97 = arith.constant 1.000000e+00 : f32
    %245 = vector.broadcast %cst_97 : f32 to vector<8x16xf32>
    %246 = arith.addf %245, %244 : vector<8x16xf32>
    %247 = math.log %246 : vector<8x16xf32>
    %248 = arith.select %241, %239, %247 : vector<8x16xi1>, vector<8x16xf32>
    %249 = arith.mulf %211, %248 : vector<8x16xf32>
    %250 = arith.addf %249, %238 : vector<8x16xf32>
    %251 = arith.truncf %250 : vector<8x16xf32> to vector<8x16xbf16>
    %cst_98 = arith.constant dense<0.000000e+00> : vector<8x32xf32>
    %252 = tpu.matmul %251, %41, %cst_98 {dimension_numbers = #tpu.dot_dimension_numbers<[1], [0], [0], [1], [0, 0, 1, 1], [], []>} : vector<8x16xbf16>, vector<16x32xbf16>, vector<8x32xf32> -> vector<8x32xf32>
    %253 = arith.addf %252, %50 : vector<8x32xf32>
    %cst_99 = arith.constant 0.000000e+00 : f32
    %254 = vector.broadcast %cst_99 : f32 to vector<8x32xf32>
    %255 = arith.maximumf %253, %254 : vector<8x32xf32>
    %256 = arith.truncf %255 : vector<8x32xf32> to vector<8x32xbf16>
    %cst_100 = arith.constant dense<0.000000e+00> : vector<8x32xf32>
    %257 = tpu.matmul %256, %43, %cst_100 {dimension_numbers = #tpu.dot_dimension_numbers<[1], [0], [0], [1], [0, 0, 1, 1], [], []>} : vector<8x32xbf16>, vector<32x32xbf16>, vector<8x32xf32> -> vector<8x32xf32>
    %258 = arith.addf %257, %53 : vector<8x32xf32>
    %cst_101 = arith.constant 0.000000e+00 : f32
    %259 = vector.broadcast %cst_101 : f32 to vector<8x32xf32>
    %260 = arith.maximumf %258, %259 : vector<8x32xf32>
    %261 = arith.truncf %260 : vector<8x32xf32> to vector<8x32xbf16>
    %cst_102 = arith.constant dense<0.000000e+00> : vector<8x32xf32>
    %262 = tpu.matmul %261, %45, %cst_102 {dimension_numbers = #tpu.dot_dimension_numbers<[1], [0], [0], [1], [0, 0, 1, 1], [], []>} : vector<8x32xbf16>, vector<32x32xbf16>, vector<8x32xf32> -> vector<8x32xf32>
    %263 = arith.addf %262, %56 : vector<8x32xf32>
    %cst_103 = arith.constant 0.000000e+00 : f32
    %264 = vector.broadcast %cst_103 : f32 to vector<8x32xf32>
    %265 = arith.maximumf %263, %264 : vector<8x32xf32>
    %266 = arith.truncf %265 : vector<8x32xf32> to vector<8x32xbf16>
    %cst_104 = arith.constant dense<0.000000e+00> : vector<8x32xf32>
    %267 = tpu.matmul %266, %47, %cst_104 {dimension_numbers = #tpu.dot_dimension_numbers<[1], [0], [0], [1], [0, 0, 1, 1], [], []>} : vector<8x32xbf16>, vector<32x32xbf16>, vector<8x32xf32> -> vector<8x32xf32>
    %268 = arith.addf %267, %59 : vector<8x32xf32>
    %cst_105 = arith.constant 0.000000e+00 : f32
    %269 = vector.broadcast %cst_105 : f32 to vector<8x32xf32>
    %270 = arith.maximumf %268, %269 : vector<8x32xf32>
    %271 = vector.extract_strided_slice %210 {offsets = [0, 32], sizes = [8, 96], strides = [1, 1]} : vector<8x128xf32> to vector<8x96xf32>
    %272 = arith.truncf %270 : vector<8x32xf32> to vector<8x32xbf16>
    %cst_106 = arith.constant dense<0.000000e+00> : vector<8x96xf32>
    %273 = tpu.matmul %272, %61, %cst_106 {dimension_numbers = #tpu.dot_dimension_numbers<[1], [0], [0], [1], [0, 0, 1, 1], [], []>} : vector<8x32xbf16>, vector<32x96xbf16>, vector<8x96xf32> -> vector<8x96xf32>
    %274 = arith.addf %271, %273 : vector<8x96xf32>
    %275 = vector.extract_strided_slice %214 {offsets = [0, 32], sizes = [8, 96], strides = [1, 1]} : vector<8x128xf32> to vector<8x96xf32>
    %276 = vector.extract_strided_slice %274 {offsets = [0, 0], sizes = [8, 64], strides = [1, 1]} : vector<8x96xf32> to vector<8x64xf32>
    %277 = vector.extract_strided_slice %275 {offsets = [0, 0], sizes = [8, 64], strides = [1, 1]} : vector<8x96xf32> to vector<8x64xf32>
    %278 = arith.addf %276, %277 : vector<8x64xf32>
    %cst_107 = arith.constant 0.000000e+00 : f32
    %279 = vector.broadcast %cst_107 : f32 to vector<8x64xf32>
    %280 = arith.subf %279, %278 : vector<8x64xf32>
    %281 = math.exp %280 : vector<8x64xf32>
    %cst_108 = arith.constant 1.000000e+00 : f32
    %282 = vector.broadcast %cst_108 : f32 to vector<8x64xf32>
    %283 = arith.addf %282, %281 : vector<8x64xf32>
    %284 = tpu.reciprocal %283 {approx = true} : vector<8x64xf32> -> vector<8x64xf32>
    %285 = vector.extract_strided_slice %284 {offsets = [0, 0], sizes = [8, 32], strides = [1, 1]} : vector<8x64xf32> to vector<8x32xf32>
    %286 = vector.extract_strided_slice %284 {offsets = [0, 32], sizes = [8, 32], strides = [1, 1]} : vector<8x64xf32> to vector<8x32xf32>
    %287 = vector.extract_strided_slice %274 {offsets = [0, 64], sizes = [8, 32], strides = [1, 1]} : vector<8x96xf32> to vector<8x32xf32>
    %288 = vector.extract_strided_slice %275 {offsets = [0, 64], sizes = [8, 32], strides = [1, 1]} : vector<8x96xf32> to vector<8x32xf32>
    %289 = arith.mulf %285, %288 : vector<8x32xf32>
    %290 = arith.addf %287, %289 : vector<8x32xf32>
    %291 = math.tanh %290 : vector<8x32xf32>
    %cst_109 = arith.constant 1.000000e+00 : f32
    %292 = vector.broadcast %cst_109 : f32 to vector<8x32xf32>
    %293 = arith.subf %292, %286 : vector<8x32xf32>
    %294 = arith.mulf %293, %291 : vector<8x32xf32>
    %295 = arith.mulf %286, %209 : vector<8x32xf32>
    %296 = arith.addf %294, %295 : vector<8x32xf32>
    %297 = vector.extract_strided_slice %121 {offsets = [16, 0], sizes = [8, 128], strides = [1, 1]} : vector<48x128xf32> to vector<8x128xf32>
    %298 = vector.extract_strided_slice %93 {offsets = [16, 0], sizes = [8, 16], strides = [1, 1]} : vector<48x16xf32> to vector<8x16xf32>
    %299 = arith.truncf %296 : vector<8x32xf32> to vector<8x32xbf16>
    %cst_110 = arith.constant dense<0.000000e+00> : vector<8x128xf32>
    %300 = tpu.matmul %299, %16, %cst_110 {dimension_numbers = #tpu.dot_dimension_numbers<[1], [0], [0], [1], [0, 0, 1, 1], [], []>} : vector<8x32xbf16>, vector<32x128xbf16>, vector<8x128xf32> -> vector<8x128xf32>
    %301 = arith.addf %300, %19 : vector<8x128xf32>
    %302 = vector.extract_strided_slice %297 {offsets = [0, 0], sizes = [8, 32], strides = [1, 1]} : vector<8x128xf32> to vector<8x32xf32>
    %303 = vector.extract_strided_slice %301 {offsets = [0, 0], sizes = [8, 32], strides = [1, 1]} : vector<8x128xf32> to vector<8x32xf32>
    %304 = arith.addf %302, %303 : vector<8x32xf32>
    %cst_111 = arith.constant 0.000000e+00 : f32
    %305 = vector.broadcast %cst_111 : f32 to vector<8x32xf32>
    %306 = arith.maximumf %304, %305 : vector<8x32xf32>
    %307 = arith.truncf %306 : vector<8x32xf32> to vector<8x32xbf16>
    %cst_112 = arith.constant dense<0.000000e+00> : vector<8x32xf32>
    %308 = tpu.matmul %307, %21, %cst_112 {dimension_numbers = #tpu.dot_dimension_numbers<[1], [0], [0], [1], [0, 0, 1, 1], [], []>} : vector<8x32xbf16>, vector<32x32xbf16>, vector<8x32xf32> -> vector<8x32xf32>
    %309 = arith.addf %308, %24 : vector<8x32xf32>
    %cst_113 = arith.constant 0.000000e+00 : f32
    %310 = vector.broadcast %cst_113 : f32 to vector<8x32xf32>
    %311 = arith.maximumf %309, %310 : vector<8x32xf32>
    %312 = arith.truncf %311 : vector<8x32xf32> to vector<8x32xbf16>
    %cst_114 = arith.constant dense<0.000000e+00> : vector<8x64xf32>
    %313 = tpu.matmul %312, %26, %cst_114 {dimension_numbers = #tpu.dot_dimension_numbers<[1], [0], [0], [1], [0, 0, 1, 1], [], []>} : vector<8x32xbf16>, vector<32x64xbf16>, vector<8x64xf32> -> vector<8x64xf32>
    %314 = arith.addf %313, %33 : vector<8x64xf32>
    %cst_115 = arith.constant 0.000000e+00 : f32
    %315 = vector.broadcast %cst_115 : f32 to vector<8x64xf32>
    %316 = arith.maximumf %314, %315 : vector<8x64xf32>
    %317 = arith.truncf %316 : vector<8x64xf32> to vector<8x64xbf16>
    %cst_116 = arith.constant dense<0.000000e+00> : vector<8x64xf32>
    %318 = tpu.matmul %317, %28, %cst_116 {dimension_numbers = #tpu.dot_dimension_numbers<[1], [0], [0], [1], [0, 0, 1, 1], [], []>} : vector<8x64xbf16>, vector<64x64xbf16>, vector<8x64xf32> -> vector<8x64xf32>
    %319 = arith.addf %318, %36 : vector<8x64xf32>
    %cst_117 = arith.constant 0.000000e+00 : f32
    %320 = vector.broadcast %cst_117 : f32 to vector<8x64xf32>
    %321 = arith.maximumf %319, %320 : vector<8x64xf32>
    %322 = arith.truncf %321 : vector<8x64xf32> to vector<8x64xbf16>
    %cst_118 = arith.constant dense<0.000000e+00> : vector<8x32xf32>
    %323 = tpu.matmul %322, %30, %cst_118 {dimension_numbers = #tpu.dot_dimension_numbers<[1], [0], [0], [1], [0, 0, 1, 1], [], []>} : vector<8x64xbf16>, vector<64x32xbf16>, vector<8x32xf32> -> vector<8x32xf32>
    %324 = arith.addf %323, %39 : vector<8x32xf32>
    %325 = vector.extract_strided_slice %324 {offsets = [0, 0], sizes = [8, 16], strides = [1, 1]} : vector<8x32xf32> to vector<8x16xf32>
    %326 = vector.extract_strided_slice %324 {offsets = [0, 16], sizes = [8, 16], strides = [1, 1]} : vector<8x32xf32> to vector<8x16xf32>
    %cst_119 = arith.constant 2.000000e+01 : f32
    %327 = vector.broadcast %cst_119 : f32 to vector<8x16xf32>
    %328 = arith.cmpf ogt, %326, %327 : vector<8x16xf32>
    %cst_120 = arith.constant 2.000000e+01 : f32
    %329 = vector.broadcast %cst_120 : f32 to vector<8x16xf32>
    %330 = arith.minimumf %326, %329 : vector<8x16xf32>
    %331 = math.exp %330 : vector<8x16xf32>
    %cst_121 = arith.constant 1.000000e+00 : f32
    %332 = vector.broadcast %cst_121 : f32 to vector<8x16xf32>
    %333 = arith.addf %332, %331 : vector<8x16xf32>
    %334 = math.log %333 : vector<8x16xf32>
    %335 = arith.select %328, %326, %334 : vector<8x16xi1>, vector<8x16xf32>
    %336 = arith.mulf %298, %335 : vector<8x16xf32>
    %337 = arith.addf %336, %325 : vector<8x16xf32>
    %338 = arith.truncf %337 : vector<8x16xf32> to vector<8x16xbf16>
    %cst_122 = arith.constant dense<0.000000e+00> : vector<8x32xf32>
    %339 = tpu.matmul %338, %41, %cst_122 {dimension_numbers = #tpu.dot_dimension_numbers<[1], [0], [0], [1], [0, 0, 1, 1], [], []>} : vector<8x16xbf16>, vector<16x32xbf16>, vector<8x32xf32> -> vector<8x32xf32>
    %340 = arith.addf %339, %50 : vector<8x32xf32>
    %cst_123 = arith.constant 0.000000e+00 : f32
    %341 = vector.broadcast %cst_123 : f32 to vector<8x32xf32>
    %342 = arith.maximumf %340, %341 : vector<8x32xf32>
    %343 = arith.truncf %342 : vector<8x32xf32> to vector<8x32xbf16>
    %cst_124 = arith.constant dense<0.000000e+00> : vector<8x32xf32>
    %344 = tpu.matmul %343, %43, %cst_124 {dimension_numbers = #tpu.dot_dimension_numbers<[1], [0], [0], [1], [0, 0, 1, 1], [], []>} : vector<8x32xbf16>, vector<32x32xbf16>, vector<8x32xf32> -> vector<8x32xf32>
    %345 = arith.addf %344, %53 : vector<8x32xf32>
    %cst_125 = arith.constant 0.000000e+00 : f32
    %346 = vector.broadcast %cst_125 : f32 to vector<8x32xf32>
    %347 = arith.maximumf %345, %346 : vector<8x32xf32>
    %348 = arith.truncf %347 : vector<8x32xf32> to vector<8x32xbf16>
    %cst_126 = arith.constant dense<0.000000e+00> : vector<8x32xf32>
    %349 = tpu.matmul %348, %45, %cst_126 {dimension_numbers = #tpu.dot_dimension_numbers<[1], [0], [0], [1], [0, 0, 1, 1], [], []>} : vector<8x32xbf16>, vector<32x32xbf16>, vector<8x32xf32> -> vector<8x32xf32>
    %350 = arith.addf %349, %56 : vector<8x32xf32>
    %cst_127 = arith.constant 0.000000e+00 : f32
    %351 = vector.broadcast %cst_127 : f32 to vector<8x32xf32>
    %352 = arith.maximumf %350, %351 : vector<8x32xf32>
    %353 = arith.truncf %352 : vector<8x32xf32> to vector<8x32xbf16>
    %cst_128 = arith.constant dense<0.000000e+00> : vector<8x32xf32>
    %354 = tpu.matmul %353, %47, %cst_128 {dimension_numbers = #tpu.dot_dimension_numbers<[1], [0], [0], [1], [0, 0, 1, 1], [], []>} : vector<8x32xbf16>, vector<32x32xbf16>, vector<8x32xf32> -> vector<8x32xf32>
    %355 = arith.addf %354, %59 : vector<8x32xf32>
    %cst_129 = arith.constant 0.000000e+00 : f32
    %356 = vector.broadcast %cst_129 : f32 to vector<8x32xf32>
    %357 = arith.maximumf %355, %356 : vector<8x32xf32>
    %358 = vector.extract_strided_slice %297 {offsets = [0, 32], sizes = [8, 96], strides = [1, 1]} : vector<8x128xf32> to vector<8x96xf32>
    %359 = arith.truncf %357 : vector<8x32xf32> to vector<8x32xbf16>
    %cst_130 = arith.constant dense<0.000000e+00> : vector<8x96xf32>
    %360 = tpu.matmul %359, %61, %cst_130 {dimension_numbers = #tpu.dot_dimension_numbers<[1], [0], [0], [1], [0, 0, 1, 1], [], []>} : vector<8x32xbf16>, vector<32x96xbf16>, vector<8x96xf32> -> vector<8x96xf32>
    %361 = arith.addf %358, %360 : vector<8x96xf32>
    %362 = vector.extract_strided_slice %301 {offsets = [0, 32], sizes = [8, 96], strides = [1, 1]} : vector<8x128xf32> to vector<8x96xf32>
    %363 = vector.extract_strided_slice %361 {offsets = [0, 0], sizes = [8, 64], strides = [1, 1]} : vector<8x96xf32> to vector<8x64xf32>
    %364 = vector.extract_strided_slice %362 {offsets = [0, 0], sizes = [8, 64], strides = [1, 1]} : vector<8x96xf32> to vector<8x64xf32>
    %365 = arith.addf %363, %364 : vector<8x64xf32>
    %cst_131 = arith.constant 0.000000e+00 : f32
    %366 = vector.broadcast %cst_131 : f32 to vector<8x64xf32>
    %367 = arith.subf %366, %365 : vector<8x64xf32>
    %368 = math.exp %367 : vector<8x64xf32>
    %cst_132 = arith.constant 1.000000e+00 : f32
    %369 = vector.broadcast %cst_132 : f32 to vector<8x64xf32>
    %370 = arith.addf %369, %368 : vector<8x64xf32>
    %371 = tpu.reciprocal %370 {approx = true} : vector<8x64xf32> -> vector<8x64xf32>
    %372 = vector.extract_strided_slice %371 {offsets = [0, 0], sizes = [8, 32], strides = [1, 1]} : vector<8x64xf32> to vector<8x32xf32>
    %373 = vector.extract_strided_slice %371 {offsets = [0, 32], sizes = [8, 32], strides = [1, 1]} : vector<8x64xf32> to vector<8x32xf32>
    %374 = vector.extract_strided_slice %361 {offsets = [0, 64], sizes = [8, 32], strides = [1, 1]} : vector<8x96xf32> to vector<8x32xf32>
    %375 = vector.extract_strided_slice %362 {offsets = [0, 64], sizes = [8, 32], strides = [1, 1]} : vector<8x96xf32> to vector<8x32xf32>
    %376 = arith.mulf %372, %375 : vector<8x32xf32>
    %377 = arith.addf %374, %376 : vector<8x32xf32>
    %378 = math.tanh %377 : vector<8x32xf32>
    %cst_133 = arith.constant 1.000000e+00 : f32
    %379 = vector.broadcast %cst_133 : f32 to vector<8x32xf32>
    %380 = arith.subf %379, %373 : vector<8x32xf32>
    %381 = arith.mulf %380, %378 : vector<8x32xf32>
    %382 = arith.mulf %373, %296 : vector<8x32xf32>
    %383 = arith.addf %381, %382 : vector<8x32xf32>
    %384 = vector.extract_strided_slice %121 {offsets = [24, 0], sizes = [8, 128], strides = [1, 1]} : vector<48x128xf32> to vector<8x128xf32>
    %385 = vector.extract_strided_slice %93 {offsets = [24, 0], sizes = [8, 16], strides = [1, 1]} : vector<48x16xf32> to vector<8x16xf32>
    %386 = arith.truncf %383 : vector<8x32xf32> to vector<8x32xbf16>
    %cst_134 = arith.constant dense<0.000000e+00> : vector<8x128xf32>
    %387 = tpu.matmul %386, %16, %cst_134 {dimension_numbers = #tpu.dot_dimension_numbers<[1], [0], [0], [1], [0, 0, 1, 1], [], []>} : vector<8x32xbf16>, vector<32x128xbf16>, vector<8x128xf32> -> vector<8x128xf32>
    %388 = arith.addf %387, %19 : vector<8x128xf32>
    %389 = vector.extract_strided_slice %384 {offsets = [0, 0], sizes = [8, 32], strides = [1, 1]} : vector<8x128xf32> to vector<8x32xf32>
    %390 = vector.extract_strided_slice %388 {offsets = [0, 0], sizes = [8, 32], strides = [1, 1]} : vector<8x128xf32> to vector<8x32xf32>
    %391 = arith.addf %389, %390 : vector<8x32xf32>
    %cst_135 = arith.constant 0.000000e+00 : f32
    %392 = vector.broadcast %cst_135 : f32 to vector<8x32xf32>
    %393 = arith.maximumf %391, %392 : vector<8x32xf32>
    %394 = arith.truncf %393 : vector<8x32xf32> to vector<8x32xbf16>
    %cst_136 = arith.constant dense<0.000000e+00> : vector<8x32xf32>
    %395 = tpu.matmul %394, %21, %cst_136 {dimension_numbers = #tpu.dot_dimension_numbers<[1], [0], [0], [1], [0, 0, 1, 1], [], []>} : vector<8x32xbf16>, vector<32x32xbf16>, vector<8x32xf32> -> vector<8x32xf32>
    %396 = arith.addf %395, %24 : vector<8x32xf32>
    %cst_137 = arith.constant 0.000000e+00 : f32
    %397 = vector.broadcast %cst_137 : f32 to vector<8x32xf32>
    %398 = arith.maximumf %396, %397 : vector<8x32xf32>
    %399 = arith.truncf %398 : vector<8x32xf32> to vector<8x32xbf16>
    %cst_138 = arith.constant dense<0.000000e+00> : vector<8x64xf32>
    %400 = tpu.matmul %399, %26, %cst_138 {dimension_numbers = #tpu.dot_dimension_numbers<[1], [0], [0], [1], [0, 0, 1, 1], [], []>} : vector<8x32xbf16>, vector<32x64xbf16>, vector<8x64xf32> -> vector<8x64xf32>
    %401 = arith.addf %400, %33 : vector<8x64xf32>
    %cst_139 = arith.constant 0.000000e+00 : f32
    %402 = vector.broadcast %cst_139 : f32 to vector<8x64xf32>
    %403 = arith.maximumf %401, %402 : vector<8x64xf32>
    %404 = arith.truncf %403 : vector<8x64xf32> to vector<8x64xbf16>
    %cst_140 = arith.constant dense<0.000000e+00> : vector<8x64xf32>
    %405 = tpu.matmul %404, %28, %cst_140 {dimension_numbers = #tpu.dot_dimension_numbers<[1], [0], [0], [1], [0, 0, 1, 1], [], []>} : vector<8x64xbf16>, vector<64x64xbf16>, vector<8x64xf32> -> vector<8x64xf32>
    %406 = arith.addf %405, %36 : vector<8x64xf32>
    %cst_141 = arith.constant 0.000000e+00 : f32
    %407 = vector.broadcast %cst_141 : f32 to vector<8x64xf32>
    %408 = arith.maximumf %406, %407 : vector<8x64xf32>
    %409 = arith.truncf %408 : vector<8x64xf32> to vector<8x64xbf16>
    %cst_142 = arith.constant dense<0.000000e+00> : vector<8x32xf32>
    %410 = tpu.matmul %409, %30, %cst_142 {dimension_numbers = #tpu.dot_dimension_numbers<[1], [0], [0], [1], [0, 0, 1, 1], [], []>} : vector<8x64xbf16>, vector<64x32xbf16>, vector<8x32xf32> -> vector<8x32xf32>
    %411 = arith.addf %410, %39 : vector<8x32xf32>
    %412 = vector.extract_strided_slice %411 {offsets = [0, 0], sizes = [8, 16], strides = [1, 1]} : vector<8x32xf32> to vector<8x16xf32>
    %413 = vector.extract_strided_slice %411 {offsets = [0, 16], sizes = [8, 16], strides = [1, 1]} : vector<8x32xf32> to vector<8x16xf32>
    %cst_143 = arith.constant 2.000000e+01 : f32
    %414 = vector.broadcast %cst_143 : f32 to vector<8x16xf32>
    %415 = arith.cmpf ogt, %413, %414 : vector<8x16xf32>
    %cst_144 = arith.constant 2.000000e+01 : f32
    %416 = vector.broadcast %cst_144 : f32 to vector<8x16xf32>
    %417 = arith.minimumf %413, %416 : vector<8x16xf32>
    %418 = math.exp %417 : vector<8x16xf32>
    %cst_145 = arith.constant 1.000000e+00 : f32
    %419 = vector.broadcast %cst_145 : f32 to vector<8x16xf32>
    %420 = arith.addf %419, %418 : vector<8x16xf32>
    %421 = math.log %420 : vector<8x16xf32>
    %422 = arith.select %415, %413, %421 : vector<8x16xi1>, vector<8x16xf32>
    %423 = arith.mulf %385, %422 : vector<8x16xf32>
    %424 = arith.addf %423, %412 : vector<8x16xf32>
    %425 = arith.truncf %424 : vector<8x16xf32> to vector<8x16xbf16>
    %cst_146 = arith.constant dense<0.000000e+00> : vector<8x32xf32>
    %426 = tpu.matmul %425, %41, %cst_146 {dimension_numbers = #tpu.dot_dimension_numbers<[1], [0], [0], [1], [0, 0, 1, 1], [], []>} : vector<8x16xbf16>, vector<16x32xbf16>, vector<8x32xf32> -> vector<8x32xf32>
    %427 = arith.addf %426, %50 : vector<8x32xf32>
    %cst_147 = arith.constant 0.000000e+00 : f32
    %428 = vector.broadcast %cst_147 : f32 to vector<8x32xf32>
    %429 = arith.maximumf %427, %428 : vector<8x32xf32>
    %430 = arith.truncf %429 : vector<8x32xf32> to vector<8x32xbf16>
    %cst_148 = arith.constant dense<0.000000e+00> : vector<8x32xf32>
    %431 = tpu.matmul %430, %43, %cst_148 {dimension_numbers = #tpu.dot_dimension_numbers<[1], [0], [0], [1], [0, 0, 1, 1], [], []>} : vector<8x32xbf16>, vector<32x32xbf16>, vector<8x32xf32> -> vector<8x32xf32>
    %432 = arith.addf %431, %53 : vector<8x32xf32>
    %cst_149 = arith.constant 0.000000e+00 : f32
    %433 = vector.broadcast %cst_149 : f32 to vector<8x32xf32>
    %434 = arith.maximumf %432, %433 : vector<8x32xf32>
    %435 = arith.truncf %434 : vector<8x32xf32> to vector<8x32xbf16>
    %cst_150 = arith.constant dense<0.000000e+00> : vector<8x32xf32>
    %436 = tpu.matmul %435, %45, %cst_150 {dimension_numbers = #tpu.dot_dimension_numbers<[1], [0], [0], [1], [0, 0, 1, 1], [], []>} : vector<8x32xbf16>, vector<32x32xbf16>, vector<8x32xf32> -> vector<8x32xf32>
    %437 = arith.addf %436, %56 : vector<8x32xf32>
    %cst_151 = arith.constant 0.000000e+00 : f32
    %438 = vector.broadcast %cst_151 : f32 to vector<8x32xf32>
    %439 = arith.maximumf %437, %438 : vector<8x32xf32>
    %440 = arith.truncf %439 : vector<8x32xf32> to vector<8x32xbf16>
    %cst_152 = arith.constant dense<0.000000e+00> : vector<8x32xf32>
    %441 = tpu.matmul %440, %47, %cst_152 {dimension_numbers = #tpu.dot_dimension_numbers<[1], [0], [0], [1], [0, 0, 1, 1], [], []>} : vector<8x32xbf16>, vector<32x32xbf16>, vector<8x32xf32> -> vector<8x32xf32>
    %442 = arith.addf %441, %59 : vector<8x32xf32>
    %cst_153 = arith.constant 0.000000e+00 : f32
    %443 = vector.broadcast %cst_153 : f32 to vector<8x32xf32>
    %444 = arith.maximumf %442, %443 : vector<8x32xf32>
    %445 = vector.extract_strided_slice %384 {offsets = [0, 32], sizes = [8, 96], strides = [1, 1]} : vector<8x128xf32> to vector<8x96xf32>
    %446 = arith.truncf %444 : vector<8x32xf32> to vector<8x32xbf16>
    %cst_154 = arith.constant dense<0.000000e+00> : vector<8x96xf32>
    %447 = tpu.matmul %446, %61, %cst_154 {dimension_numbers = #tpu.dot_dimension_numbers<[1], [0], [0], [1], [0, 0, 1, 1], [], []>} : vector<8x32xbf16>, vector<32x96xbf16>, vector<8x96xf32> -> vector<8x96xf32>
    %448 = arith.addf %445, %447 : vector<8x96xf32>
    %449 = vector.extract_strided_slice %388 {offsets = [0, 32], sizes = [8, 96], strides = [1, 1]} : vector<8x128xf32> to vector<8x96xf32>
    %450 = vector.extract_strided_slice %448 {offsets = [0, 0], sizes = [8, 64], strides = [1, 1]} : vector<8x96xf32> to vector<8x64xf32>
    %451 = vector.extract_strided_slice %449 {offsets = [0, 0], sizes = [8, 64], strides = [1, 1]} : vector<8x96xf32> to vector<8x64xf32>
    %452 = arith.addf %450, %451 : vector<8x64xf32>
    %cst_155 = arith.constant 0.000000e+00 : f32
    %453 = vector.broadcast %cst_155 : f32 to vector<8x64xf32>
    %454 = arith.subf %453, %452 : vector<8x64xf32>
    %455 = math.exp %454 : vector<8x64xf32>
    %cst_156 = arith.constant 1.000000e+00 : f32
    %456 = vector.broadcast %cst_156 : f32 to vector<8x64xf32>
    %457 = arith.addf %456, %455 : vector<8x64xf32>
    %458 = tpu.reciprocal %457 {approx = true} : vector<8x64xf32> -> vector<8x64xf32>
    %459 = vector.extract_strided_slice %458 {offsets = [0, 0], sizes = [8, 32], strides = [1, 1]} : vector<8x64xf32> to vector<8x32xf32>
    %460 = vector.extract_strided_slice %458 {offsets = [0, 32], sizes = [8, 32], strides = [1, 1]} : vector<8x64xf32> to vector<8x32xf32>
    %461 = vector.extract_strided_slice %448 {offsets = [0, 64], sizes = [8, 32], strides = [1, 1]} : vector<8x96xf32> to vector<8x32xf32>
    %462 = vector.extract_strided_slice %449 {offsets = [0, 64], sizes = [8, 32], strides = [1, 1]} : vector<8x96xf32> to vector<8x32xf32>
    %463 = arith.mulf %459, %462 : vector<8x32xf32>
    %464 = arith.addf %461, %463 : vector<8x32xf32>
    %465 = math.tanh %464 : vector<8x32xf32>
    %cst_157 = arith.constant 1.000000e+00 : f32
    %466 = vector.broadcast %cst_157 : f32 to vector<8x32xf32>
    %467 = arith.subf %466, %460 : vector<8x32xf32>
    %468 = arith.mulf %467, %465 : vector<8x32xf32>
    %469 = arith.mulf %460, %383 : vector<8x32xf32>
    %470 = arith.addf %468, %469 : vector<8x32xf32>
    %471 = vector.extract_strided_slice %121 {offsets = [32, 0], sizes = [8, 128], strides = [1, 1]} : vector<48x128xf32> to vector<8x128xf32>
    %472 = vector.extract_strided_slice %93 {offsets = [32, 0], sizes = [8, 16], strides = [1, 1]} : vector<48x16xf32> to vector<8x16xf32>
    %473 = arith.truncf %470 : vector<8x32xf32> to vector<8x32xbf16>
    %cst_158 = arith.constant dense<0.000000e+00> : vector<8x128xf32>
    %474 = tpu.matmul %473, %16, %cst_158 {dimension_numbers = #tpu.dot_dimension_numbers<[1], [0], [0], [1], [0, 0, 1, 1], [], []>} : vector<8x32xbf16>, vector<32x128xbf16>, vector<8x128xf32> -> vector<8x128xf32>
    %475 = arith.addf %474, %19 : vector<8x128xf32>
    %476 = vector.extract_strided_slice %471 {offsets = [0, 0], sizes = [8, 32], strides = [1, 1]} : vector<8x128xf32> to vector<8x32xf32>
    %477 = vector.extract_strided_slice %475 {offsets = [0, 0], sizes = [8, 32], strides = [1, 1]} : vector<8x128xf32> to vector<8x32xf32>
    %478 = arith.addf %476, %477 : vector<8x32xf32>
    %cst_159 = arith.constant 0.000000e+00 : f32
    %479 = vector.broadcast %cst_159 : f32 to vector<8x32xf32>
    %480 = arith.maximumf %478, %479 : vector<8x32xf32>
    %481 = arith.truncf %480 : vector<8x32xf32> to vector<8x32xbf16>
    %cst_160 = arith.constant dense<0.000000e+00> : vector<8x32xf32>
    %482 = tpu.matmul %481, %21, %cst_160 {dimension_numbers = #tpu.dot_dimension_numbers<[1], [0], [0], [1], [0, 0, 1, 1], [], []>} : vector<8x32xbf16>, vector<32x32xbf16>, vector<8x32xf32> -> vector<8x32xf32>
    %483 = arith.addf %482, %24 : vector<8x32xf32>
    %cst_161 = arith.constant 0.000000e+00 : f32
    %484 = vector.broadcast %cst_161 : f32 to vector<8x32xf32>
    %485 = arith.maximumf %483, %484 : vector<8x32xf32>
    %486 = arith.truncf %485 : vector<8x32xf32> to vector<8x32xbf16>
    %cst_162 = arith.constant dense<0.000000e+00> : vector<8x64xf32>
    %487 = tpu.matmul %486, %26, %cst_162 {dimension_numbers = #tpu.dot_dimension_numbers<[1], [0], [0], [1], [0, 0, 1, 1], [], []>} : vector<8x32xbf16>, vector<32x64xbf16>, vector<8x64xf32> -> vector<8x64xf32>
    %488 = arith.addf %487, %33 : vector<8x64xf32>
    %cst_163 = arith.constant 0.000000e+00 : f32
    %489 = vector.broadcast %cst_163 : f32 to vector<8x64xf32>
    %490 = arith.maximumf %488, %489 : vector<8x64xf32>
    %491 = arith.truncf %490 : vector<8x64xf32> to vector<8x64xbf16>
    %cst_164 = arith.constant dense<0.000000e+00> : vector<8x64xf32>
    %492 = tpu.matmul %491, %28, %cst_164 {dimension_numbers = #tpu.dot_dimension_numbers<[1], [0], [0], [1], [0, 0, 1, 1], [], []>} : vector<8x64xbf16>, vector<64x64xbf16>, vector<8x64xf32> -> vector<8x64xf32>
    %493 = arith.addf %492, %36 : vector<8x64xf32>
    %cst_165 = arith.constant 0.000000e+00 : f32
    %494 = vector.broadcast %cst_165 : f32 to vector<8x64xf32>
    %495 = arith.maximumf %493, %494 : vector<8x64xf32>
    %496 = arith.truncf %495 : vector<8x64xf32> to vector<8x64xbf16>
    %cst_166 = arith.constant dense<0.000000e+00> : vector<8x32xf32>
    %497 = tpu.matmul %496, %30, %cst_166 {dimension_numbers = #tpu.dot_dimension_numbers<[1], [0], [0], [1], [0, 0, 1, 1], [], []>} : vector<8x64xbf16>, vector<64x32xbf16>, vector<8x32xf32> -> vector<8x32xf32>
    %498 = arith.addf %497, %39 : vector<8x32xf32>
    %499 = vector.extract_strided_slice %498 {offsets = [0, 0], sizes = [8, 16], strides = [1, 1]} : vector<8x32xf32> to vector<8x16xf32>
    %500 = vector.extract_strided_slice %498 {offsets = [0, 16], sizes = [8, 16], strides = [1, 1]} : vector<8x32xf32> to vector<8x16xf32>
    %cst_167 = arith.constant 2.000000e+01 : f32
    %501 = vector.broadcast %cst_167 : f32 to vector<8x16xf32>
    %502 = arith.cmpf ogt, %500, %501 : vector<8x16xf32>
    %cst_168 = arith.constant 2.000000e+01 : f32
    %503 = vector.broadcast %cst_168 : f32 to vector<8x16xf32>
    %504 = arith.minimumf %500, %503 : vector<8x16xf32>
    %505 = math.exp %504 : vector<8x16xf32>
    %cst_169 = arith.constant 1.000000e+00 : f32
    %506 = vector.broadcast %cst_169 : f32 to vector<8x16xf32>
    %507 = arith.addf %506, %505 : vector<8x16xf32>
    %508 = math.log %507 : vector<8x16xf32>
    %509 = arith.select %502, %500, %508 : vector<8x16xi1>, vector<8x16xf32>
    %510 = arith.mulf %472, %509 : vector<8x16xf32>
    %511 = arith.addf %510, %499 : vector<8x16xf32>
    %512 = arith.truncf %511 : vector<8x16xf32> to vector<8x16xbf16>
    %cst_170 = arith.constant dense<0.000000e+00> : vector<8x32xf32>
    %513 = tpu.matmul %512, %41, %cst_170 {dimension_numbers = #tpu.dot_dimension_numbers<[1], [0], [0], [1], [0, 0, 1, 1], [], []>} : vector<8x16xbf16>, vector<16x32xbf16>, vector<8x32xf32> -> vector<8x32xf32>
    %514 = arith.addf %513, %50 : vector<8x32xf32>
    %cst_171 = arith.constant 0.000000e+00 : f32
    %515 = vector.broadcast %cst_171 : f32 to vector<8x32xf32>
    %516 = arith.maximumf %514, %515 : vector<8x32xf32>
    %517 = arith.truncf %516 : vector<8x32xf32> to vector<8x32xbf16>
    %cst_172 = arith.constant dense<0.000000e+00> : vector<8x32xf32>
    %518 = tpu.matmul %517, %43, %cst_172 {dimension_numbers = #tpu.dot_dimension_numbers<[1], [0], [0], [1], [0, 0, 1, 1], [], []>} : vector<8x32xbf16>, vector<32x32xbf16>, vector<8x32xf32> -> vector<8x32xf32>
    %519 = arith.addf %518, %53 : vector<8x32xf32>
    %cst_173 = arith.constant 0.000000e+00 : f32
    %520 = vector.broadcast %cst_173 : f32 to vector<8x32xf32>
    %521 = arith.maximumf %519, %520 : vector<8x32xf32>
    %522 = arith.truncf %521 : vector<8x32xf32> to vector<8x32xbf16>
    %cst_174 = arith.constant dense<0.000000e+00> : vector<8x32xf32>
    %523 = tpu.matmul %522, %45, %cst_174 {dimension_numbers = #tpu.dot_dimension_numbers<[1], [0], [0], [1], [0, 0, 1, 1], [], []>} : vector<8x32xbf16>, vector<32x32xbf16>, vector<8x32xf32> -> vector<8x32xf32>
    %524 = arith.addf %523, %56 : vector<8x32xf32>
    %cst_175 = arith.constant 0.000000e+00 : f32
    %525 = vector.broadcast %cst_175 : f32 to vector<8x32xf32>
    %526 = arith.maximumf %524, %525 : vector<8x32xf32>
    %527 = arith.truncf %526 : vector<8x32xf32> to vector<8x32xbf16>
    %cst_176 = arith.constant dense<0.000000e+00> : vector<8x32xf32>
    %528 = tpu.matmul %527, %47, %cst_176 {dimension_numbers = #tpu.dot_dimension_numbers<[1], [0], [0], [1], [0, 0, 1, 1], [], []>} : vector<8x32xbf16>, vector<32x32xbf16>, vector<8x32xf32> -> vector<8x32xf32>
    %529 = arith.addf %528, %59 : vector<8x32xf32>
    %cst_177 = arith.constant 0.000000e+00 : f32
    %530 = vector.broadcast %cst_177 : f32 to vector<8x32xf32>
    %531 = arith.maximumf %529, %530 : vector<8x32xf32>
    %532 = vector.extract_strided_slice %471 {offsets = [0, 32], sizes = [8, 96], strides = [1, 1]} : vector<8x128xf32> to vector<8x96xf32>
    %533 = arith.truncf %531 : vector<8x32xf32> to vector<8x32xbf16>
    %cst_178 = arith.constant dense<0.000000e+00> : vector<8x96xf32>
    %534 = tpu.matmul %533, %61, %cst_178 {dimension_numbers = #tpu.dot_dimension_numbers<[1], [0], [0], [1], [0, 0, 1, 1], [], []>} : vector<8x32xbf16>, vector<32x96xbf16>, vector<8x96xf32> -> vector<8x96xf32>
    %535 = arith.addf %532, %534 : vector<8x96xf32>
    %536 = vector.extract_strided_slice %475 {offsets = [0, 32], sizes = [8, 96], strides = [1, 1]} : vector<8x128xf32> to vector<8x96xf32>
    %537 = vector.extract_strided_slice %535 {offsets = [0, 0], sizes = [8, 64], strides = [1, 1]} : vector<8x96xf32> to vector<8x64xf32>
    %538 = vector.extract_strided_slice %536 {offsets = [0, 0], sizes = [8, 64], strides = [1, 1]} : vector<8x96xf32> to vector<8x64xf32>
    %539 = arith.addf %537, %538 : vector<8x64xf32>
    %cst_179 = arith.constant 0.000000e+00 : f32
    %540 = vector.broadcast %cst_179 : f32 to vector<8x64xf32>
    %541 = arith.subf %540, %539 : vector<8x64xf32>
    %542 = math.exp %541 : vector<8x64xf32>
    %cst_180 = arith.constant 1.000000e+00 : f32
    %543 = vector.broadcast %cst_180 : f32 to vector<8x64xf32>
    %544 = arith.addf %543, %542 : vector<8x64xf32>
    %545 = tpu.reciprocal %544 {approx = true} : vector<8x64xf32> -> vector<8x64xf32>
    %546 = vector.extract_strided_slice %545 {offsets = [0, 0], sizes = [8, 32], strides = [1, 1]} : vector<8x64xf32> to vector<8x32xf32>
    %547 = vector.extract_strided_slice %545 {offsets = [0, 32], sizes = [8, 32], strides = [1, 1]} : vector<8x64xf32> to vector<8x32xf32>
    %548 = vector.extract_strided_slice %535 {offsets = [0, 64], sizes = [8, 32], strides = [1, 1]} : vector<8x96xf32> to vector<8x32xf32>
    %549 = vector.extract_strided_slice %536 {offsets = [0, 64], sizes = [8, 32], strides = [1, 1]} : vector<8x96xf32> to vector<8x32xf32>
    %550 = arith.mulf %546, %549 : vector<8x32xf32>
    %551 = arith.addf %548, %550 : vector<8x32xf32>
    %552 = math.tanh %551 : vector<8x32xf32>
    %cst_181 = arith.constant 1.000000e+00 : f32
    %553 = vector.broadcast %cst_181 : f32 to vector<8x32xf32>
    %554 = arith.subf %553, %547 : vector<8x32xf32>
    %555 = arith.mulf %554, %552 : vector<8x32xf32>
    %556 = arith.mulf %547, %470 : vector<8x32xf32>
    %557 = arith.addf %555, %556 : vector<8x32xf32>
    %558 = vector.extract_strided_slice %121 {offsets = [40, 0], sizes = [8, 128], strides = [1, 1]} : vector<48x128xf32> to vector<8x128xf32>
    %559 = vector.extract_strided_slice %93 {offsets = [40, 0], sizes = [8, 16], strides = [1, 1]} : vector<48x16xf32> to vector<8x16xf32>
    %560 = arith.truncf %557 : vector<8x32xf32> to vector<8x32xbf16>
    %cst_182 = arith.constant dense<0.000000e+00> : vector<8x128xf32>
    %561 = tpu.matmul %560, %16, %cst_182 {dimension_numbers = #tpu.dot_dimension_numbers<[1], [0], [0], [1], [0, 0, 1, 1], [], []>} : vector<8x32xbf16>, vector<32x128xbf16>, vector<8x128xf32> -> vector<8x128xf32>
    %562 = arith.addf %561, %19 : vector<8x128xf32>
    %563 = vector.extract_strided_slice %558 {offsets = [0, 0], sizes = [8, 32], strides = [1, 1]} : vector<8x128xf32> to vector<8x32xf32>
    %564 = vector.extract_strided_slice %562 {offsets = [0, 0], sizes = [8, 32], strides = [1, 1]} : vector<8x128xf32> to vector<8x32xf32>
    %565 = arith.addf %563, %564 : vector<8x32xf32>
    %cst_183 = arith.constant 0.000000e+00 : f32
    %566 = vector.broadcast %cst_183 : f32 to vector<8x32xf32>
    %567 = arith.maximumf %565, %566 : vector<8x32xf32>
    %568 = arith.truncf %567 : vector<8x32xf32> to vector<8x32xbf16>
    %cst_184 = arith.constant dense<0.000000e+00> : vector<8x32xf32>
    %569 = tpu.matmul %568, %21, %cst_184 {dimension_numbers = #tpu.dot_dimension_numbers<[1], [0], [0], [1], [0, 0, 1, 1], [], []>} : vector<8x32xbf16>, vector<32x32xbf16>, vector<8x32xf32> -> vector<8x32xf32>
    %570 = arith.addf %569, %24 : vector<8x32xf32>
    %cst_185 = arith.constant 0.000000e+00 : f32
    %571 = vector.broadcast %cst_185 : f32 to vector<8x32xf32>
    %572 = arith.maximumf %570, %571 : vector<8x32xf32>
    %573 = arith.truncf %572 : vector<8x32xf32> to vector<8x32xbf16>
    %cst_186 = arith.constant dense<0.000000e+00> : vector<8x64xf32>
    %574 = tpu.matmul %573, %26, %cst_186 {dimension_numbers = #tpu.dot_dimension_numbers<[1], [0], [0], [1], [0, 0, 1, 1], [], []>} : vector<8x32xbf16>, vector<32x64xbf16>, vector<8x64xf32> -> vector<8x64xf32>
    %575 = arith.addf %574, %33 : vector<8x64xf32>
    %cst_187 = arith.constant 0.000000e+00 : f32
    %576 = vector.broadcast %cst_187 : f32 to vector<8x64xf32>
    %577 = arith.maximumf %575, %576 : vector<8x64xf32>
    %578 = arith.truncf %577 : vector<8x64xf32> to vector<8x64xbf16>
    %cst_188 = arith.constant dense<0.000000e+00> : vector<8x64xf32>
    %579 = tpu.matmul %578, %28, %cst_188 {dimension_numbers = #tpu.dot_dimension_numbers<[1], [0], [0], [1], [0, 0, 1, 1], [], []>} : vector<8x64xbf16>, vector<64x64xbf16>, vector<8x64xf32> -> vector<8x64xf32>
    %580 = arith.addf %579, %36 : vector<8x64xf32>
    %cst_189 = arith.constant 0.000000e+00 : f32
    %581 = vector.broadcast %cst_189 : f32 to vector<8x64xf32>
    %582 = arith.maximumf %580, %581 : vector<8x64xf32>
    %583 = arith.truncf %582 : vector<8x64xf32> to vector<8x64xbf16>
    %cst_190 = arith.constant dense<0.000000e+00> : vector<8x32xf32>
    %584 = tpu.matmul %583, %30, %cst_190 {dimension_numbers = #tpu.dot_dimension_numbers<[1], [0], [0], [1], [0, 0, 1, 1], [], []>} : vector<8x64xbf16>, vector<64x32xbf16>, vector<8x32xf32> -> vector<8x32xf32>
    %585 = arith.addf %584, %39 : vector<8x32xf32>
    %586 = vector.extract_strided_slice %585 {offsets = [0, 0], sizes = [8, 16], strides = [1, 1]} : vector<8x32xf32> to vector<8x16xf32>
    %587 = vector.extract_strided_slice %585 {offsets = [0, 16], sizes = [8, 16], strides = [1, 1]} : vector<8x32xf32> to vector<8x16xf32>
    %cst_191 = arith.constant 2.000000e+01 : f32
    %588 = vector.broadcast %cst_191 : f32 to vector<8x16xf32>
    %589 = arith.cmpf ogt, %587, %588 : vector<8x16xf32>
    %cst_192 = arith.constant 2.000000e+01 : f32
    %590 = vector.broadcast %cst_192 : f32 to vector<8x16xf32>
    %591 = arith.minimumf %587, %590 : vector<8x16xf32>
    %592 = math.exp %591 : vector<8x16xf32>
    %cst_193 = arith.constant 1.000000e+00 : f32
    %593 = vector.broadcast %cst_193 : f32 to vector<8x16xf32>
    %594 = arith.addf %593, %592 : vector<8x16xf32>
    %595 = math.log %594 : vector<8x16xf32>
    %596 = arith.select %589, %587, %595 : vector<8x16xi1>, vector<8x16xf32>
    %597 = arith.mulf %559, %596 : vector<8x16xf32>
    %598 = arith.addf %597, %586 : vector<8x16xf32>
    %599 = arith.truncf %598 : vector<8x16xf32> to vector<8x16xbf16>
    %cst_194 = arith.constant dense<0.000000e+00> : vector<8x32xf32>
    %600 = tpu.matmul %599, %41, %cst_194 {dimension_numbers = #tpu.dot_dimension_numbers<[1], [0], [0], [1], [0, 0, 1, 1], [], []>} : vector<8x16xbf16>, vector<16x32xbf16>, vector<8x32xf32> -> vector<8x32xf32>
    %601 = arith.addf %600, %50 : vector<8x32xf32>
    %cst_195 = arith.constant 0.000000e+00 : f32
    %602 = vector.broadcast %cst_195 : f32 to vector<8x32xf32>
    %603 = arith.maximumf %601, %602 : vector<8x32xf32>
    %604 = arith.truncf %603 : vector<8x32xf32> to vector<8x32xbf16>
    %cst_196 = arith.constant dense<0.000000e+00> : vector<8x32xf32>
    %605 = tpu.matmul %604, %43, %cst_196 {dimension_numbers = #tpu.dot_dimension_numbers<[1], [0], [0], [1], [0, 0, 1, 1], [], []>} : vector<8x32xbf16>, vector<32x32xbf16>, vector<8x32xf32> -> vector<8x32xf32>
    %606 = arith.addf %605, %53 : vector<8x32xf32>
    %cst_197 = arith.constant 0.000000e+00 : f32
    %607 = vector.broadcast %cst_197 : f32 to vector<8x32xf32>
    %608 = arith.maximumf %606, %607 : vector<8x32xf32>
    %609 = arith.truncf %608 : vector<8x32xf32> to vector<8x32xbf16>
    %cst_198 = arith.constant dense<0.000000e+00> : vector<8x32xf32>
    %610 = tpu.matmul %609, %45, %cst_198 {dimension_numbers = #tpu.dot_dimension_numbers<[1], [0], [0], [1], [0, 0, 1, 1], [], []>} : vector<8x32xbf16>, vector<32x32xbf16>, vector<8x32xf32> -> vector<8x32xf32>
    %611 = arith.addf %610, %56 : vector<8x32xf32>
    %cst_199 = arith.constant 0.000000e+00 : f32
    %612 = vector.broadcast %cst_199 : f32 to vector<8x32xf32>
    %613 = arith.maximumf %611, %612 : vector<8x32xf32>
    %614 = arith.truncf %613 : vector<8x32xf32> to vector<8x32xbf16>
    %cst_200 = arith.constant dense<0.000000e+00> : vector<8x32xf32>
    %615 = tpu.matmul %614, %47, %cst_200 {dimension_numbers = #tpu.dot_dimension_numbers<[1], [0], [0], [1], [0, 0, 1, 1], [], []>} : vector<8x32xbf16>, vector<32x32xbf16>, vector<8x32xf32> -> vector<8x32xf32>
    %616 = arith.addf %615, %59 : vector<8x32xf32>
    %cst_201 = arith.constant 0.000000e+00 : f32
    %617 = vector.broadcast %cst_201 : f32 to vector<8x32xf32>
    %618 = arith.maximumf %616, %617 : vector<8x32xf32>
    %619 = tpu.concatenate %122, %209, %296, %383, %470, %557 in 0 : vector<8x32xf32>, vector<8x32xf32>, vector<8x32xf32>, vector<8x32xf32>, vector<8x32xf32>, vector<8x32xf32> -> vector<48x32xf32>
    %620 = tpu.concatenate %183, %270, %357, %444, %531, %618 in 0 : vector<8x32xf32>, vector<8x32xf32>, vector<8x32xf32>, vector<8x32xf32>, vector<8x32xf32>, vector<8x32xf32> -> vector<48x32xf32>
    %621 = tpu.concatenate %151, %238, %325, %412, %499, %586 in 0 : vector<8x16xf32>, vector<8x16xf32>, vector<8x16xf32>, vector<8x16xf32>, vector<8x16xf32>, vector<8x16xf32> -> vector<48x16xf32>
    %622 = tpu.concatenate %161, %248, %335, %422, %509, %596 in 0 : vector<8x16xf32>, vector<8x16xf32>, vector<8x16xf32>, vector<8x16xf32>, vector<8x16xf32>, vector<8x16xf32> -> vector<48x16xf32>
    %623 = arith.truncf %619 : vector<48x32xf32> to vector<48x32xbf16>
    %cst_202 = arith.constant dense<0.000000e+00> : vector<48x32xf32>
    %624 = tpu.matmul %623, %63, %cst_202 {dimension_numbers = #tpu.dot_dimension_numbers<[1], [0], [0], [1], [0, 0, 1, 1], [], []>} : vector<48x32xbf16>, vector<32x32xbf16>, vector<48x32xf32> -> vector<48x32xf32>
    %625 = vector.broadcast %64 : vector<1x32xf32> to vector<48x32xf32>
    %626 = arith.addf %624, %625 : vector<48x32xf32>
    %cst_203 = arith.constant 0.000000e+00 : f32
    %627 = vector.broadcast %cst_203 : f32 to vector<48x32xf32>
    %628 = arith.maximumf %626, %627 : vector<48x32xf32>
    %629 = arith.truncf %628 : vector<48x32xf32> to vector<48x32xbf16>
    %cst_204 = arith.constant dense<0.000000e+00> : vector<48x64xf32>
    %630 = tpu.matmul %629, %66, %cst_204 {dimension_numbers = #tpu.dot_dimension_numbers<[1], [0], [0], [1], [0, 0, 1, 1], [], []>} : vector<48x32xbf16>, vector<32x64xbf16>, vector<48x64xf32> -> vector<48x64xf32>
    %631 = vector.broadcast %71 : vector<1x64xf32> to vector<48x64xf32>
    %632 = arith.addf %630, %631 : vector<48x64xf32>
    %cst_205 = arith.constant 0.000000e+00 : f32
    %633 = vector.broadcast %cst_205 : f32 to vector<48x64xf32>
    %634 = arith.maximumf %632, %633 : vector<48x64xf32>
    %635 = arith.truncf %634 : vector<48x64xf32> to vector<48x64xbf16>
    %cst_206 = arith.constant dense<0.000000e+00> : vector<48x64xf32>
    %636 = tpu.matmul %635, %68, %cst_206 {dimension_numbers = #tpu.dot_dimension_numbers<[1], [0], [0], [1], [0, 0, 1, 1], [], []>} : vector<48x64xbf16>, vector<64x64xbf16>, vector<48x64xf32> -> vector<48x64xf32>
    %637 = vector.broadcast %72 : vector<1x64xf32> to vector<48x64xf32>
    %638 = arith.addf %636, %637 : vector<48x64xf32>
    %cst_207 = arith.constant 0.000000e+00 : f32
    %639 = vector.broadcast %cst_207 : f32 to vector<48x64xf32>
    %640 = arith.maximumf %638, %639 : vector<48x64xf32>
    %641 = arith.truncf %640 : vector<48x64xf32> to vector<48x64xbf16>
    %cst_208 = arith.constant dense<0.000000e+00> : vector<48x32xf32>
    %642 = tpu.matmul %641, %70, %cst_208 {dimension_numbers = #tpu.dot_dimension_numbers<[1], [0], [0], [1], [0, 0, 1, 1], [], []>} : vector<48x64xbf16>, vector<64x32xbf16>, vector<48x32xf32> -> vector<48x32xf32>
    %643 = vector.broadcast %73 : vector<1x32xf32> to vector<48x32xf32>
    %644 = arith.addf %642, %643 : vector<48x32xf32>
    %645 = vector.extract_strided_slice %644 {offsets = [0, 0], sizes = [48, 16], strides = [1, 1]} : vector<48x32xf32> to vector<48x16xf32>
    %646 = vector.extract_strided_slice %644 {offsets = [0, 16], sizes = [48, 16], strides = [1, 1]} : vector<48x32xf32> to vector<48x16xf32>
    %cst_209 = arith.constant 2.000000e+01 : f32
    %647 = vector.broadcast %cst_209 : f32 to vector<48x16xf32>
    %648 = arith.cmpf ogt, %646, %647 : vector<48x16xf32>
    %cst_210 = arith.constant 2.000000e+01 : f32
    %649 = vector.broadcast %cst_210 : f32 to vector<48x16xf32>
    %650 = arith.minimumf %646, %649 : vector<48x16xf32>
    %651 = math.exp %650 : vector<48x16xf32>
    %cst_211 = arith.constant 1.000000e+00 : f32
    %652 = vector.broadcast %cst_211 : f32 to vector<48x16xf32>
    %653 = arith.addf %652, %651 : vector<48x16xf32>
    %654 = math.log %653 : vector<48x16xf32>
    %655 = arith.select %648, %646, %654 : vector<48x16xi1>, vector<48x16xf32>
    %656 = arith.truncf %620 : vector<48x32xf32> to vector<48x32xbf16>
    %cst_212 = arith.constant dense<0.000000e+00> : vector<48x32xf32>
    %657 = tpu.matmul %656, %75, %cst_212 {dimension_numbers = #tpu.dot_dimension_numbers<[1], [0], [0], [1], [0, 0, 1, 1], [], []>} : vector<48x32xbf16>, vector<32x32xbf16>, vector<48x32xf32> -> vector<48x32xf32>
    %658 = arith.truncf %619 : vector<48x32xf32> to vector<48x32xbf16>
    %cst_213 = arith.constant dense<0.000000e+00> : vector<48x32xf32>
    %659 = tpu.matmul %658, %77, %cst_213 {dimension_numbers = #tpu.dot_dimension_numbers<[1], [0], [0], [1], [0, 0, 1, 1], [], []>} : vector<48x32xbf16>, vector<32x32xbf16>, vector<48x32xf32> -> vector<48x32xf32>
    %660 = arith.addf %657, %659 : vector<48x32xf32>
    %661 = vector.broadcast %78 : vector<1x32xf32> to vector<48x32xf32>
    %662 = arith.addf %660, %661 : vector<48x32xf32>
    %cst_214 = arith.constant 0.000000e+00 : f32
    %663 = vector.broadcast %cst_214 : f32 to vector<48x32xf32>
    %664 = arith.maximumf %662, %663 : vector<48x32xf32>
    %665 = arith.truncf %664 : vector<48x32xf32> to vector<48x32xbf16>
    %cst_215 = arith.constant dense<0.000000e+00> : vector<48x32xf32>
    %666 = tpu.matmul %665, %80, %cst_215 {dimension_numbers = #tpu.dot_dimension_numbers<[1], [0], [0], [1], [0, 0, 1, 1], [], []>} : vector<48x32xbf16>, vector<32x32xbf16>, vector<48x32xf32> -> vector<48x32xf32>
    %667 = vector.broadcast %81 : vector<1x32xf32> to vector<48x32xf32>
    %668 = arith.addf %666, %667 : vector<48x32xf32>
    %cst_216 = arith.constant 0.000000e+00 : f32
    %669 = vector.broadcast %cst_216 : f32 to vector<48x32xf32>
    %670 = arith.maximumf %668, %669 : vector<48x32xf32>
    %671 = arith.truncf %670 : vector<48x32xf32> to vector<48x32xbf16>
    %cst_217 = arith.constant dense<0.000000e+00> : vector<48x32xf32>
    %672 = tpu.matmul %671, %83, %cst_217 {dimension_numbers = #tpu.dot_dimension_numbers<[1], [0], [0], [1], [0, 0, 1, 1], [], []>} : vector<48x32xbf16>, vector<32x32xbf16>, vector<48x32xf32> -> vector<48x32xf32>
    %673 = vector.broadcast %84 : vector<1x32xf32> to vector<48x32xf32>
    %674 = arith.addf %672, %673 : vector<48x32xf32>
    %cst_218 = arith.constant 0.000000e+00 : f32
    %675 = vector.broadcast %cst_218 : f32 to vector<48x32xf32>
    %676 = arith.maximumf %674, %675 : vector<48x32xf32>
    %677 = arith.truncf %676 : vector<48x32xf32> to vector<48x32xbf16>
    %cst_219 = arith.constant dense<0.000000e+00> : vector<48x32xf32>
    %678 = tpu.matmul %677, %86, %cst_219 {dimension_numbers = #tpu.dot_dimension_numbers<[1], [0], [0], [1], [0, 0, 1, 1], [], []>} : vector<48x32xbf16>, vector<32x32xbf16>, vector<48x32xf32> -> vector<48x32xf32>
    %679 = vector.broadcast %87 : vector<1x32xf32> to vector<48x32xf32>
    %680 = arith.addf %678, %679 : vector<48x32xf32>
    %cst_220 = arith.constant 0.000000e+00 : f32
    %681 = vector.broadcast %cst_220 : f32 to vector<48x32xf32>
    %682 = arith.maximumf %680, %681 : vector<48x32xf32>
    %683 = arith.truncf %682 : vector<48x32xf32> to vector<48x32xbf16>
    %cst_221 = arith.constant dense<0.000000e+00> : vector<48x8xf32>
    %684 = tpu.matmul %683, %89, %cst_221 {dimension_numbers = #tpu.dot_dimension_numbers<[1], [0], [0], [1], [0, 0, 1, 1], [], []>} : vector<48x32xbf16>, vector<32x8xbf16>, vector<48x8xf32> -> vector<48x8xf32>
    %685 = vector.broadcast %90 : vector<1x8xf32> to vector<48x8xf32>
    %686 = arith.addf %684, %685 : vector<48x8xf32>
    %cst_222 = arith.constant 0.000000e+00 : f32
    %687 = vector.broadcast %cst_222 : f32 to vector<48x8xf32>
    %688 = arith.subf %687, %686 : vector<48x8xf32>
    %689 = math.exp %688 : vector<48x8xf32>
    %cst_223 = arith.constant 1.000000e+00 : f32
    %690 = vector.broadcast %cst_223 : f32 to vector<48x8xf32>
    %691 = arith.addf %690, %689 : vector<48x8xf32>
    %692 = tpu.reciprocal %691 {approx = true} : vector<48x8xf32> -> vector<48x8xf32>
    %693 = arith.divf %655, %622 : vector<48x16xf32>
    %694 = math.log %693 : vector<48x16xf32>
    %cst_224 = arith.constant 2.000000e+00 : f32
    %695 = vector.broadcast %cst_224 : f32 to vector<48x16xf32>
    %696 = arith.mulf %695, %694 : vector<48x16xf32>
    %697 = arith.mulf %622, %622 : vector<48x16xf32>
    %698 = arith.subf %621, %645 : vector<48x16xf32>
    %699 = arith.mulf %698, %698 : vector<48x16xf32>
    %700 = arith.addf %697, %699 : vector<48x16xf32>
    %701 = arith.mulf %655, %655 : vector<48x16xf32>
    %702 = arith.divf %700, %701 : vector<48x16xf32>
    %703 = arith.addf %696, %702 : vector<48x16xf32>
    %cst_225 = arith.constant 1.000000e+00 : f32
    %704 = vector.broadcast %cst_225 : f32 to vector<48x16xf32>
    %705 = arith.subf %703, %704 : vector<48x16xf32>
    %706 = arith.subf %692, %92 : vector<48x8xf32>
    %707 = vector.broadcast %91 : vector<1x8xf32> to vector<48x8xf32>
    %708 = arith.mulf %706, %707 : vector<48x8xf32>
    %709 = vector.shape_cast %705 : vector<48x16xf32> to vector<1x48x16xf32>
    %cst_226 = arith.constant dense<0.000000e+00> : vector<1xf32>
    %710 = vector.multi_reduction <add>, %709, %cst_226 [1, 2] : vector<1x48x16xf32> to vector<1xf32>
    %711 = vector.shape_cast %710 : vector<1xf32> to vector<1x1x1xf32>
    %712 = vector.extract %711[0, 0, 0] : f32 from vector<1x1x1xf32>
    %713 = vector.broadcast %712 : f32 to vector<1x1xf32>
    %cst_227 = arith.constant 5.000000e-01 : f32
    %714 = vector.broadcast %cst_227 : f32 to vector<1x1xf32>
    %715 = arith.mulf %714, %713 : vector<1x1xf32>
    %716 = arith.mulf %708, %708 : vector<48x8xf32>
    %717 = vector.shape_cast %716 : vector<48x8xf32> to vector<1x48x8xf32>
    %cst_228 = arith.constant dense<0.000000e+00> : vector<1xf32>
    %718 = vector.multi_reduction <add>, %717, %cst_228 [1, 2] : vector<1x48x8xf32> to vector<1xf32>
    %719 = vector.shape_cast %718 : vector<1xf32> to vector<1x1x1xf32>
    %720 = vector.extract %719[0, 0, 0] : f32 from vector<1x1x1xf32>
    %721 = vector.broadcast %720 : f32 to vector<1x1xf32>
    %cst_229 = arith.constant 6.400000e+01 : f32
    %722 = vector.broadcast %cst_229 : f32 to vector<1x1xf32>
    %723 = arith.divf %721, %722 : vector<1x1xf32>
    %724 = vector.shape_cast %715 : vector<1x1xf32> to vector<1x1xf32>
    %725 = vector.broadcast %724 : vector<1x1xf32> to vector<1x128xf32>
    %c0_230 = arith.constant 0 : index
    %c0_231 = arith.constant 0 : index
    %726 = vector.load %arg3[%c0_230, %c0_231] : memref<2x128xf32, #tpu.memory_space<vmem>>, vector<1x128xf32>
    tpu.vector_store %arg3[%c0_230, %c0_231], %725 {strides = array<i32>} : memref<2x128xf32, #tpu.memory_space<vmem>>, vector<1x128xf32>,
    %727 = vector.shape_cast %723 : vector<1x1xf32> to vector<1x1xf32>
    %728 = vector.broadcast %727 : vector<1x1xf32> to vector<1x128xf32>
    %c1 = arith.constant 1 : index
    %c0_232 = arith.constant 0 : index
    %729 = vector.load %arg3[%c1, %c0_232] : memref<2x128xf32, #tpu.memory_space<vmem>>, vector<1x128xf32>
    tpu.vector_store %arg3[%c1, %c0_232], %728 {strides = array<i32>} : memref<2x128xf32, #tpu.memory_space<vmem>>, vector<1x128xf32>,
    return
  }
}

</mosaic_0001>

<llo_original>
// kernel: tpu_custom_call.1
$region0: #{tpu_custom_call.1}
  #allocation0 [shape = 'u32[]', space=smem, size = 0x4, offset = 0x4, fixed_abs, tag = 'smem constant byte address 0x4 - core index']
  #allocation1 [shape = 'u32[144,128]{1,0:T(1,128)}', space=vmem, size = 0x12000, scoped, tag = 'internal scratch']
  %s0 = inlined_call_operand.vmem [shape: f32[48,8], index: 0, kind: input, shape index: {}]
  %s1 = inlined_call_operand.vmem [shape: f32[48,16], index: 1, kind: input, shape index: {}]
  %s2 = inlined_call_operand.hbm [shape: f32[1080,128], index: 2, kind: input, shape index: {}]
  %s3 = inlined_call_operand.hbm [shape: f32[2,128], index: 3, kind: output, shape index: {}]
  %s4 = sld [smem:[#allocation0]]
  $region26: #{tpu_custom_call.1} parent=0
    _
  %s6 = ssub.s32 1, %s4
  %s7 = scalar_select 0, %s6, %s4
  $region1: #{tpu_custom_call.1} parent=0
    #allocation2 [shape = 'u8[552960]{0}', space=vmem, size = 0x87000, scoped, tag = 'input window, operand 2, single buffered']
    #allocation3 [shape = 's32[1]{0}', space=sflag, size = 0x4, scoped, tag = 'scoped memory for tpu_custom_call.1']
    #allocation4 [shape = 's32[1]{0}', space=sflag, size = 0x4, scoped, tag = 'scoped memory for tpu_custom_call.1']
    #allocation5 [shape = 'u8[1024]{0}', space=vmem, size = 0x400, scoped, tag = 'output window, operand 0, single buffered']
    %8 = vsyncpa [#allocation3], 0
    %9 = vsyncpa [#allocation4], 0
    // Predicated region
    $region2: #{tpu_custom_call.1} parent=1 // pred_check
      _
    $region3: #{tpu_custom_call.1} parent=1 // pred_check_branch
      %11 = sbr.rel (0) target = $region5
    $region4: #{tpu_custom_call.1} parent=1 // pred_region
      _
    $region5: #{tpu_custom_call.1} parent=1 // pred_fallthru
      _
    // Predicated region
    $region6: #{tpu_custom_call.1} parent=1 // pred_check
      _
    $region7: #{tpu_custom_call.1} parent=1 // pred_check_branch
      %13 = sbr.rel (0) target = $region9
    $region8: #{tpu_custom_call.1} parent=1 // pred_region
      _
    $region9: #{tpu_custom_call.1} parent=1 // pred_fallthru
      _
    // Predicated region
    $region10: #{tpu_custom_call.1} parent=1 // pred_check
      _
    $region11: #{tpu_custom_call.1} parent=1 // pred_check_branch
      %15 = sbr.rel (0) target = $region13
    $region12: #{tpu_custom_call.1} parent=1 // pred_region
      %s17 = ssub.s32 17280, 17280
      %18 = vsyncadd [#allocation3], %s17
      %s19 = sshll.u32 [#allocation2], 4
      %s20 = int_to_ptr.vmem [resolvable:$true] %s19
      %25 = dma.hbm_to_vmem [thread:$0]  %s2, 17280, %s20, [#allocation3], 128, 128, 8
    $region13: #{tpu_custom_call.1} parent=1 // pred_fallthru
      _
    // Predicated region
    $region14: #{tpu_custom_call.1} parent=1 // pred_check
      _
    $region15: #{tpu_custom_call.1} parent=1 // pred_check_branch
      %27 = sbr.rel (0) target = $region17
    $region16: #{tpu_custom_call.1} parent=1 // pred_region
      %28 = dma.done [#allocation3], 17280
    $region17: #{tpu_custom_call.1} parent=1 // pred_fallthru
      _
    %v30 = vld [vmem:[#allocation2] sm:$0xff]
    %v31 = vpack.c.bf16 %v30, %v30
    %v32 = vld [vmem:[#allocation2 + $0x18] sm:$0xff]
    %v33 = vld [vmem:[#allocation2 + $0x20] sm:$0xff]
    %v34 = vld [vmem:[#allocation2 + $0x28] sm:$0xff]
    %v35 = vld [vmem:[#allocation2 + $0x30] sm:$0xff]
    %v36 = vpack.c.bf16 %v33, %v32
    %v37 = vpack.c.bf16 %v35, %v34
    %v38 = vld [vmem:[#allocation2 + $0x58] sm:$0xff]
    %v39 = vld [vmem:[#allocation2 + $0x60] sm:$0xff]
    %v40 = vld [vmem:[#allocation2 + $0x68] sm:$0xff]
    %v41 = vld [vmem:[#allocation2 + $0x70] sm:$0xff]
    %v42 = vpack.c.bf16 %v39, %v38
    %v43 = vpack.c.bf16 %v41, %v40
    %v44 = vld [vmem:[#allocation2 + $0x98] sm:$0xff]
    %v45 = vld [vmem:[#allocation2 + $0xa0] sm:$0xff]
    %v46 = vld [vmem:[#allocation2 + $0xa8] sm:$0xff]
    %v47 = vld [vmem:[#allocation2 + $0xb0] sm:$0xff]
    %v48 = vpack.c.bf16 %v45, %v44
    %v49 = vpack.c.bf16 %v47, %v46
    %v50 = vld [vmem:[#allocation2 + $0x378] sm:$0x1]
    %v51 = vld [vmem:[#allocation2 + $0x388] sm:$0x1]
    %v52 = vld [vmem:[#allocation2 + $0x398] sm:$0x1]
    %v53 = vld [vmem:[#allocation2 + $0x3a8] sm:$0x1]
    %v54 = vld [vmem:[#allocation2 + $0xd8] sm:$0xff]
    %v55 = vld [vmem:[#allocation2 + $0xe0] sm:$0xff]
    %v56 = vld [vmem:[#allocation2 + $0xe8] sm:$0xff]
    %v57 = vld [vmem:[#allocation2 + $0xf0] sm:$0xff]
    %v58 = vpack.c.bf16 %v55, %v54
    %v59 = vpack.c.bf16 %v57, %v56
    %v60 = vld [vmem:[#allocation2 + $0x3b8] sm:$0x1]
    %v61 = vld [vmem:[#allocation2 + $0xf8] sm:$0xff]
    %v62 = vld [vmem:[#allocation2 + $0x100] sm:$0xff]
    %v63 = vld [vmem:[#allocation2 + $0x108] sm:$0xff]
    %v64 = vld [vmem:[#allocation2 + $0x110] sm:$0xff]
    %v65 = vpack.c.bf16 %v62, %v61
    %v66 = vpack.c.bf16 %v64, %v63
    %v67 = vld [vmem:[#allocation2 + $0x3c0] sm:$0x1]
    %v68 = vlaneseq
    %v69 = vshrl.u32 %v68, 7
    %v70 = vsub.s32 0, %v69
    %v71 = vrot.slane %v67, %v70
    %v72 = vld [vmem:[#allocation2 + $0x118] sm:$0xff]
    %v73 = vld [vmem:[#allocation2 + $0x120] sm:$0xff]
    %v74 = vld [vmem:[#allocation2 + $0x128] sm:$0xff]
    %v75 = vld [vmem:[#allocation2 + $0x130] sm:$0xff]
    %v76 = vpack.c.bf16 %v73, %v72
    %v77 = vpack.c.bf16 %v75, %v74
    %v78 = vld [vmem:[#allocation2 + $0x3c8] sm:$0x1]
    %v79 = vlaneseq
    %v80 = vshrl.u32 %v79, 7
    %v81 = vsub.s32 0, %v80
    %v82 = vrot.slane %v78, %v81
    %v83 = vld [vmem:[#allocation2 + $0x158] sm:$0xff]
    %v84 = vld [vmem:[#allocation2 + $0x160] sm:$0xff]
    %v85 = vld [vmem:[#allocation2 + $0x168] sm:$0xff]
    %v86 = vld [vmem:[#allocation2 + $0x170] sm:$0xff]
    %v87 = vpack.c.bf16 %v84, %v83
    %v88 = vpack.c.bf16 %v86, %v85
    %v89 = vld [vmem:[#allocation2 + $0x178] sm:$0xff]
    %v90 = vld [vmem:[#allocation2 + $0x180] sm:$0xff]
    %v91 = vld [vmem:[#allocation2 + $0x188] sm:$0xff]
    %v92 = vld [vmem:[#allocation2 + $0x190] sm:$0xff]
    %v93 = vld [vmem:[#allocation2 + $0x198] sm:$0xff]
    %v94 = vld [vmem:[#allocation2 + $0x1a0] sm:$0xff]
    %v95 = vld [vmem:[#allocation2 + $0x1a8] sm:$0xff]
    %v96 = vld [vmem:[#allocation2 + $0x1b0] sm:$0xff]
    %v97 = vpack.c.bf16 %v90, %v89
    %v98 = vpack.c.bf16 %v92, %v91
    %v99 = vpack.c.bf16 %v94, %v93
    %v100 = vpack.c.bf16 %v96, %v95
    %v101 = vld [vmem:[#allocation2 + $0x1b8] sm:$0xff]
    %v102 = vld [vmem:[#allocation2 + $0x1c0] sm:$0xff]
    %v103 = vld [vmem:[#allocation2 + $0x1c8] sm:$0xff]
    %v104 = vld [vmem:[#allocation2 + $0x1d0] sm:$0xff]
    %v105 = vld [vmem:[#allocation2 + $0x1d8] sm:$0xff]
    %v106 = vld [vmem:[#allocation2 + $0x1e0] sm:$0xff]
    %v107 = vld [vmem:[#allocation2 + $0x1e8] sm:$0xff]
    %v108 = vld [vmem:[#allocation2 + $0x1f0] sm:$0xff]
    %v109 = vpack.c.bf16 %v102, %v101
    %v110 = vpack.c.bf16 %v104, %v103
    %v111 = vpack.c.bf16 %v106, %v105
    %v112 = vpack.c.bf16 %v108, %v107
    %v113 = vld [vmem:[#allocation2 + $0x3d0] sm:$0x1]
    %v114 = vlaneseq
    %v115 = vshrl.u32 %v114, 7
    %v116 = vsub.s32 0, %v115
    %v117 = vrot.slane %v113, %v116
    %v118 = vld [vmem:[#allocation2 + $0x3d8] sm:$0x1]
    %v119 = vlaneseq
    %v120 = vshrl.u32 %v119, 7
    %v121 = vsub.s32 0, %v120
    %v122 = vrot.slane %v118, %v121
    %v123 = vld [vmem:[#allocation2 + $0x3e0] sm:$0x1]
    %v124 = vlaneseq
    %v125 = vshrl.u32 %v124, 7
    %v126 = vsub.s32 0, %v125
    %v127 = vrot.slane %v123, %v126
    %v128 = vld [vmem:[#allocation2 + $0x8] sm:$0xff]
    %v129 = vld [vmem:[#allocation2 + $0x10] sm:$0xff]
    %v130 = vpack.c.bf16 %v129, %v128
    %v131 = vld [vmem:[#allocation2 + $0x38] sm:$0xff]
    %v132 = vld [vmem:[#allocation2 + $0x40] sm:$0xff]
    %v133 = vld [vmem:[#allocation2 + $0x48] sm:$0xff]
    %v134 = vld [vmem:[#allocation2 + $0x50] sm:$0xff]
    %v135 = vpack.c.bf16 %v132, %v131
    %v136 = vpack.c.bf16 %v134, %v133
    %v137 = vld [vmem:[#allocation2 + $0x78] sm:$0xff]
    %v138 = vld [vmem:[#allocation2 + $0x80] sm:$0xff]
    %v139 = vld [vmem:[#allocation2 + $0x88] sm:$0xff]
    %v140 = vld [vmem:[#allocation2 + $0x90] sm:$0xff]
    %v141 = vpack.c.bf16 %v138, %v137
    %v142 = vpack.c.bf16 %v140, %v139
    %v143 = vld [vmem:[#allocation2 + $0xb8] sm:$0xff]
    %v144 = vld [vmem:[#allocation2 + $0xc0] sm:$0xff]
    %v145 = vld [vmem:[#allocation2 + $0xc8] sm:$0xff]
    %v146 = vld [vmem:[#allocation2 + $0xd0] sm:$0xff]
    %v147 = vpack.c.bf16 %v144, %v143
    %v148 = vpack.c.bf16 %v146, %v145
    %v149 = vld [vmem:[#allocation2 + $0x380] sm:$0x1]
    %v150 = vlaneseq
    %v151 = vshrl.u32 %v150, 7
    %v152 = vsub.s32 0, %v151
    %v153 = vrot.slane %v149, %v152
    %v154 = vld [vmem:[#allocation2 + $0x390] sm:$0x1]
    %v155 = vlaneseq
    %v156 = vshrl.u32 %v155, 7
    %v157 = vsub.s32 0, %v156
    %v158 = vrot.slane %v154, %v157
    %v159 = vld [vmem:[#allocation2 + $0x3a0] sm:$0x1]
    %v160 = vlaneseq
    %v161 = vshrl.u32 %v160, 7
    %v162 = vsub.s32 0, %v161
    %v163 = vrot.slane %v159, %v162
    %v164 = vld [vmem:[#allocation2 + $0x3b0] sm:$0x1]
    %v165 = vlaneseq
    %v166 = vshrl.u32 %v165, 7
    %v167 = vsub.s32 0, %v166
    %v168 = vrot.slane %v164, %v167
    %v169 = vld [vmem:[#allocation2 + $0x138] sm:$0xff]
    %v170 = vld [vmem:[#allocation2 + $0x140] sm:$0xff]
    %v171 = vld [vmem:[#allocation2 + $0x148] sm:$0xff]
    %v172 = vld [vmem:[#allocation2 + $0x150] sm:$0xff]
    %v173 = vpack.c.bf16 %v170, %v169
    %v174 = vpack.c.bf16 %v172, %v171
    %v175 = vld [vmem:[#allocation2 + $0x298] sm:$0xff]
    %v176 = vld [vmem:[#allocation2 + $0x2a0] sm:$0xff]
    %v177 = vld [vmem:[#allocation2 + $0x2a8] sm:$0xff]
    %v178 = vld [vmem:[#allocation2 + $0x2b0] sm:$0xff]
    %v179 = vpack.c.bf16 %v176, %v175
    %v180 = vpack.c.bf16 %v178, %v177
    %v181 = vld [vmem:[#allocation2 + $0x400] sm:$0x1]
    %v182 = vld [vmem:[#allocation2 + $0x1f8] sm:$0xff]
    %v183 = vld [vmem:[#allocation2 + $0x200] sm:$0xff]
    %v184 = vld [vmem:[#allocation2 + $0x208] sm:$0xff]
    %v185 = vld [vmem:[#allocation2 + $0x210] sm:$0xff]
    %v186 = vpack.c.bf16 %v183, %v182
    %v187 = vpack.c.bf16 %v185, %v184
    %v188 = vld [vmem:[#allocation2 + $0x218] sm:$0xff]
    %v189 = vld [vmem:[#allocation2 + $0x220] sm:$0xff]
    %v190 = vld [vmem:[#allocation2 + $0x228] sm:$0xff]
    %v191 = vld [vmem:[#allocation2 + $0x230] sm:$0xff]
    %v192 = vld [vmem:[#allocation2 + $0x238] sm:$0xff]
    %v193 = vld [vmem:[#allocation2 + $0x240] sm:$0xff]
    %v194 = vld [vmem:[#allocation2 + $0x248] sm:$0xff]
    %v195 = vld [vmem:[#allocation2 + $0x250] sm:$0xff]
    %v196 = vpack.c.bf16 %v189, %v188
    %v197 = vpack.c.bf16 %v191, %v190
    %v198 = vpack.c.bf16 %v193, %v192
    %v199 = vpack.c.bf16 %v195, %v194
    %v200 = vld [vmem:[#allocation2 + $0x258] sm:$0xff]
    %v201 = vld [vmem:[#allocation2 + $0x260] sm:$0xff]
    %v202 = vld [vmem:[#allocation2 + $0x268] sm:$0xff]
    %v203 = vld [vmem:[#allocation2 + $0x270] sm:$0xff]
    %v204 = vld [vmem:[#allocation2 + $0x278] sm:$0xff]
    %v205 = vld [vmem:[#allocation2 + $0x280] sm:$0xff]
    %v206 = vld [vmem:[#allocation2 + $0x288] sm:$0xff]
    %v207 = vld [vmem:[#allocation2 + $0x290] sm:$0xff]
    %v208 = vpack.c.bf16 %v201, %v200
    %v209 = vpack.c.bf16 %v203, %v202
    %v210 = vpack.c.bf16 %v205, %v204
    %v211 = vpack.c.bf16 %v207, %v206
    %v212 = vld [vmem:[#allocation2 + $0x3e8] sm:$0x1]
    %v213 = vld [vmem:[#allocation2 + $0x3f0] sm:$0x1]
    %v214 = vld [vmem:[#allocation2 + $0x3f8] sm:$0x1]
    %v215 = vld [vmem:[#allocation2 + $0x2b8] sm:$0xff]
    %v216 = vld [vmem:[#allocation2 + $0x2c0] sm:$0xff]
    %v217 = vld [vmem:[#allocation2 + $0x2c8] sm:$0xff]
    %v218 = vld [vmem:[#allocation2 + $0x2d0] sm:$0xff]
    %v219 = vpack.c.bf16 %v216, %v215
    %v220 = vpack.c.bf16 %v218, %v217
    %v221 = vld [vmem:[#allocation2 + $0x2d8] sm:$0xff]
    %v222 = vld [vmem:[#allocation2 + $0x2e0] sm:$0xff]
    %v223 = vld [vmem:[#allocation2 + $0x2e8] sm:$0xff]
    %v224 = vld [vmem:[#allocation2 + $0x2f0] sm:$0xff]
    %v225 = vpack.c.bf16 %v222, %v221
    %v226 = vpack.c.bf16 %v224, %v223
    %v227 = vld [vmem:[#allocation2 + $0x408] sm:$0x1]
    %v228 = vld [vmem:[#allocation2 + $0x2f8] sm:$0xff]
    %v229 = vld [vmem:[#allocation2 + $0x300] sm:$0xff]
    %v230 = vld [vmem:[#allocation2 + $0x308] sm:$0xff]
    %v231 = vld [vmem:[#allocation2 + $0x310] sm:$0xff]
    %v232 = vpack.c.bf16 %v229, %v228
    %v233 = vpack.c.bf16 %v231, %v230
    %v234 = vld [vmem:[#allocation2 + $0x410] sm:$0x1]
    %v235 = vld [vmem:[#allocation2 + $0x318] sm:$0xff]
    %v236 = vld [vmem:[#allocation2 + $0x320] sm:$0xff]
    %v237 = vld [vmem:[#allocation2 + $0x328] sm:$0xff]
    %v238 = vld [vmem:[#allocation2 + $0x330] sm:$0xff]
    %v239 = vpack.c.bf16 %v236, %v235
    %v240 = vpack.c.bf16 %v238, %v237
    %v241 = vld [vmem:[#allocation2 + $0x418] sm:$0x1]
    %v242 = vld [vmem:[#allocation2 + $0x338] sm:$0xff]
    %v243 = vld [vmem:[#allocation2 + $0x340] sm:$0xff]
    %v244 = vld [vmem:[#allocation2 + $0x348] sm:$0xff]
    %v245 = vld [vmem:[#allocation2 + $0x350] sm:$0xff]
    %v246 = vpack.c.bf16 %v243, %v242
    %v247 = vpack.c.bf16 %v245, %v244
    %v248 = vld [vmem:[#allocation2 + $0x420] sm:$0x1]
    %v249 = vld [vmem:[#allocation2 + $0x358] sm:$0xff]
    %v250 = vld [vmem:[#allocation2 + $0x360] sm:$0xff]
    %v251 = vld [vmem:[#allocation2 + $0x368] sm:$0xff]
    %v252 = vld [vmem:[#allocation2 + $0x370] sm:$0xff]
    %v253 = vpack.c.bf16 %v250, %v249
    %v254 = vpack.c.bf16 %v252, %v251
    %v255 = vld [vmem:[#allocation2 + $0x428] sm:$0x1]
    %v256 = vld [vmem:[#allocation2 + $0x430] sm:$0x1]
    %v257 = vld [vmem:[%s0] sm:$0xff]
    %v258 = vld [vmem:[%s0 + $0x8] sm:$0xff]
    %v259 = vld [vmem:[%s0 + $0x10] sm:$0xff]
    %v260 = vld [vmem:[%s0 + $0x18] sm:$0xff]
    %v261 = vld [vmem:[%s0 + $0x20] sm:$0xff]
    %v262 = vld [vmem:[%s0 + $0x28] sm:$0xff]
    %v263 = vld [vmem:[%s1] sm:$0xff]
    %v264 = vld [vmem:[%s1 + $0x8] sm:$0xff]
    %v265 = vld [vmem:[%s1 + $0x10] sm:$0xff]
    %v266 = vld [vmem:[%s1 + $0x18] sm:$0xff]
    %v267 = vld [vmem:[%s1 + $0x20] sm:$0xff]
    %v268 = vld [vmem:[%s1 + $0x28] sm:$0xff]
    %v269 = vpack.c.bf16 %v258, %v257
    %v270 = vpack.c.bf16 %v260, %v259
    %v271 = vpack.c.bf16 %v262, %v261
    %v272 = vlaneseq
    %v273 = vshrl.u32 %v272, 7
    %v274 = vsub.s32 0, %v273
    %v275 = vrot.slane %v50, %v274
    %vm276 = vcmask 64512
    %v278 = vsel %vm276, %v269, 0
    %v281 = vsel %vm276, %v270, 0
    %v284 = vsel %vm276, %v271, 0
    %vm286 = vcmask 1043456
    %v288 = vsel %vm286, %v31, 0
    %290 = vmatprep.subr.bf16.mxu0 0
    %291 = vmatpush1.bf16.msra.mxu0 %v288
    %292 = vmatprep.subr.bf16.mxu0 0
    %293 = vmatpush1.bf16.msra.mxu0 0
    %294 = vmatprep.subr.bf16.mxu0 0
    %295 = vmatpush1.bf16.msra.mxu0 0
    %296 = vmatprep.subr.bf16.mxu0 0
    %297 = vmatpush1.bf16.msra.mxu0 0
    %298 = vmatprep.subr.bf16.mxu0 0
    %299 = vmatpush1.bf16.msra.mxu0 0
    %300 = vmatprep.subr.bf16.mxu0 0
    %301 = vmatpush1.bf16.msra.mxu0 0
    %302 = vmatprep.subr.bf16.mxu0 0
    %303 = vmatpush1.bf16.msra.mxu0 0
    %304 = vmatprep.subr.bf16.mxu0 0
    %305 = vmatpush1.bf16.msra.mxu0 0
    %306 = vmatprep.subr.bf16.mxu0 0
    %307 = vmatpush1.bf16.msra.mxu0 0
    %308 = vmatprep.subr.bf16.mxu0 0
    %309 = vmatpush1.bf16.msra.mxu0 0
    %310 = vmatprep.subr.bf16.mxu0 0
    %311 = vmatpush1.bf16.msra.mxu0 0
    %312 = vmatprep.subr.bf16.mxu0 0
    %313 = vmatpush1.bf16.msra.mxu0 0
    %314 = vmatprep.subr.bf16.mxu0 0
    %315 = vmatpush1.bf16.msra.mxu0 0
    %316 = vmatprep.subr.bf16.mxu0 0
    %317 = vmatpush1.bf16.msra.mxu0 0
    %318 = vmatprep.subr.bf16.mxu0 0
    %319 = vmatpush1.bf16.msra.mxu0 0
    %320 = vmatprep.subr.bf16.mxu0 0
    %321 = vmatpush1.bf16.msra.mxu0 0
    %322 = vmatprep.mubr.bf16.mxu0 0
    %323 = vmatmul.mubr.bf16.gmra.mrb[0].mxu0 %v278
    %v324 = vpop.f32.mrb[0].mxu0
    %v325 = vadd.f32 %v275, %v324
    %v326 = vpop.f32.mrb[0].mxu0
    %v327 = vpop.f32.mrb[0].mxu0
    %v328 = vadd.f32 %v275, %v327
    %v329 = vpop.f32.mrb[0].mxu0
    %330 = vmatprep.mubr.bf16.mxu0 0
    %331 = vmatmul.mubr.bf16.gmra.mrb[0].mxu0 %v281
    %v332 = vpop.f32.mrb[0].mxu0
    %v333 = vadd.f32 %v275, %v332
    %v334 = vpop.f32.mrb[0].mxu0
    %v335 = vpop.f32.mrb[0].mxu0
    %v336 = vadd.f32 %v275, %v335
    %v337 = vpop.f32.mrb[0].mxu0
    %338 = vmatprep.mubr.bf16.mxu0 0
    %339 = vmatmul.mubr.bf16.gmra.mrb[0].mxu0 %v284
    %v340 = vpop.f32.mrb[0].mxu0
    %v341 = vadd.f32 %v275, %v340
    %v342 = vpop.f32.mrb[0].mxu0
    %v343 = vpop.f32.mrb[0].mxu0
    %v344 = vadd.f32 %v275, %v343
    %v345 = vpop.f32.mrb[0].mxu0
    %346 = vdwg.mxu0
    %v347 = vmax.f32 %v325, 0.0
    %v348 = vmax.f32 %v328, 0.0
    %v349 = vmax.f32 %v333, 0.0
    %v350 = vmax.f32 %v336, 0.0
    %v351 = vmax.f32 %v341, 0.0
    %v352 = vmax.f32 %v344, 0.0
    %v353 = vpack.c.bf16 %v348, %v347
    %v354 = vpack.c.bf16 %v350, %v349
    %v355 = vpack.c.bf16 %v352, %v351
    %v356 = vlaneseq
    %v357 = vshrl.u32 %v356, 7
    %v358 = vsub.s32 0, %v357
    %v359 = vrot.slane %v51, %v358
    %vm360 = vcmask 261120
    %v362 = vsel %vm360, %v353, 0
    %v365 = vsel %vm360, %v354, 0
    %v368 = vsel %vm360, %v355, 0
    %370 = vmatprep.subr.bf16.mxu0 0
    %371 = vmatpush1.bf16.msra.mxu0 %v36
    %372 = vmatprep.subr.bf16.mxu0 0
    %373 = vmatpush1.bf16.msra.mxu0 %v37
    %374 = vmatprep.subr.bf16.mxu0 0
    %375 = vmatpush1.bf16.msra.mxu0 0
    %376 = vmatprep.subr.bf16.mxu0 0
    %377 = vmatpush1.bf16.msra.mxu0 0
    %378 = vmatprep.subr.bf16.mxu0 0
    %379 = vmatpush1.bf16.msra.mxu0 0
    %380 = vmatprep.subr.bf16.mxu0 0
    %381 = vmatpush1.bf16.msra.mxu0 0
    %382 = vmatprep.subr.bf16.mxu0 0
    %383 = vmatpush1.bf16.msra.mxu0 0
    %384 = vmatprep.subr.bf16.mxu0 0
    %385 = vmatpush1.bf16.msra.mxu0 0
    %386 = vmatprep.subr.bf16.mxu0 0
    %387 = vmatpush1.bf16.msra.mxu0 0
    %388 = vmatprep.subr.bf16.mxu0 0
    %389 = vmatpush1.bf16.msra.mxu0 0
    %390 = vmatprep.subr.bf16.mxu0 0
    %391 = vmatpush1.bf16.msra.mxu0 0
    %392 = vmatprep.subr.bf16.mxu0 0
    %393 = vmatpush1.bf16.msra.mxu0 0
    %394 = vmatprep.subr.bf16.mxu0 0
    %395 = vmatpush1.bf16.msra.mxu0 0
    %396 = vmatprep.subr.bf16.mxu0 0
    %397 = vmatpush1.bf16.msra.mxu0 0
    %398 = vmatprep.subr.bf16.mxu0 0
    %399 = vmatpush1.bf16.msra.mxu0 0
    %400 = vmatprep.subr.bf16.mxu0 0
    %401 = vmatpush1.bf16.msra.mxu0 0
    %402 = vmatprep.mubr.bf16.mxu0 0
    %403 = vmatmul.mubr.bf16.gmra.mrb[0].mxu0 %v362
    %v404 = vpop.f32.mrb[0].mxu0
    %v405 = vadd.f32 %v359, %v404
    %v406 = vpop.f32.mrb[0].mxu0
    %v407 = vpop.f32.mrb[0].mxu0
    %v408 = vadd.f32 %v359, %v407
    %v409 = vpop.f32.mrb[0].mxu0
    %410 = vmatprep.mubr.bf16.mxu0 0
    %411 = vmatmul.mubr.bf16.gmra.mrb[0].mxu0 %v365
    %v412 = vpop.f32.mrb[0].mxu0
    %v413 = vadd.f32 %v359, %v412
    %v414 = vpop.f32.mrb[0].mxu0
    %v415 = vpop.f32.mrb[0].mxu0
    %v416 = vadd.f32 %v359, %v415
    %v417 = vpop.f32.mrb[0].mxu0
    %418 = vmatprep.mubr.bf16.mxu0 0
    %419 = vmatmul.mubr.bf16.gmra.mrb[0].mxu0 %v368
    %v420 = vpop.f32.mrb[0].mxu0
    %v421 = vadd.f32 %v359, %v420
    %v422 = vpop.f32.mrb[0].mxu0
    %v423 = vpop.f32.mrb[0].mxu0
    %v424 = vadd.f32 %v359, %v423
    %v425 = vpop.f32.mrb[0].mxu0
    %426 = vdwg.mxu0
    %v427 = vmax.f32 %v405, 0.0
    %v428 = vmax.f32 %v408, 0.0
    %v429 = vmax.f32 %v413, 0.0
    %v430 = vmax.f32 %v416, 0.0
    %v431 = vmax.f32 %v421, 0.0
    %v432 = vmax.f32 %v424, 0.0
    %v433 = vpack.c.bf16 %v428, %v427
    %v434 = vpack.c.bf16 %v430, %v429
    %v435 = vpack.c.bf16 %v432, %v431
    %v436 = vlaneseq
    %v437 = vshrl.u32 %v436, 7
    %v438 = vsub.s32 0, %v437
    %v439 = vrot.slane %v52, %v438
    %v441 = vsel %vm360, %v433, 0
    %v444 = vsel %vm360, %v434, 0
    %v447 = vsel %vm360, %v435, 0
    %449 = vmatprep.subr.bf16.mxu0 0
    %450 = vmatpush1.bf16.msra.mxu0 %v42
    %451 = vmatprep.subr.bf16.mxu0 0
    %452 = vmatpush1.bf16.msra.mxu0 %v43
    %453 = vmatprep.subr.bf16.mxu0 0
    %454 = vmatpush1.bf16.msra.mxu0 0
    %455 = vmatprep.subr.bf16.mxu0 0
    %456 = vmatpush1.bf16.msra.mxu0 0
    %457 = vmatprep.subr.bf16.mxu0 0
    %458 = vmatpush1.bf16.msra.mxu0 0
    %459 = vmatprep.subr.bf16.mxu0 0
    %460 = vmatpush1.bf16.msra.mxu0 0
    %461 = vmatprep.subr.bf16.mxu0 0
    %462 = vmatpush1.bf16.msra.mxu0 0
    %463 = vmatprep.subr.bf16.mxu0 0
    %464 = vmatpush1.bf16.msra.mxu0 0
    %465 = vmatprep.subr.bf16.mxu0 0
    %466 = vmatpush1.bf16.msra.mxu0 0
    %467 = vmatprep.subr.bf16.mxu0 0
    %468 = vmatpush1.bf16.msra.mxu0 0
    %469 = vmatprep.subr.bf16.mxu0 0
    %470 = vmatpush1.bf16.msra.mxu0 0
    %471 = vmatprep.subr.bf16.mxu0 0
    %472 = vmatpush1.bf16.msra.mxu0 0
    %473 = vmatprep.subr.bf16.mxu0 0
    %474 = vmatpush1.bf16.msra.mxu0 0
    %475 = vmatprep.subr.bf16.mxu0 0
    %476 = vmatpush1.bf16.msra.mxu0 0
    %477 = vmatprep.subr.bf16.mxu0 0
    %478 = vmatpush1.bf16.msra.mxu0 0
    %479 = vmatprep.subr.bf16.mxu0 0
    %480 = vmatpush1.bf16.msra.mxu0 0
    %481 = vmatprep.mubr.bf16.mxu0 0
    %482 = vmatmul.mubr.bf16.gmra.mrb[0].mxu0 %v441
    %v483 = vpop.f32.mrb[0].mxu0
    %v484 = vadd.f32 %v439, %v483
    %v485 = vpop.f32.mrb[0].mxu0
    %v486 = vpop.f32.mrb[0].mxu0
    %v487 = vadd.f32 %v439, %v486
    %v488 = vpop.f32.mrb[0].mxu0
    %489 = vmatprep.mubr.bf16.mxu0 0
    %490 = vmatmul.mubr.bf16.gmra.mrb[0].mxu0 %v444
    %v491 = vpop.f32.mrb[0].mxu0
    %v492 = vadd.f32 %v439, %v491
    %v493 = vpop.f32.mrb[0].mxu0
    %v494 = vpop.f32.mrb[0].mxu0
    %v495 = vadd.f32 %v439, %v494
    %v496 = vpop.f32.mrb[0].mxu0
    %497 = vmatprep.mubr.bf16.mxu0 0
    %498 = vmatmul.mubr.bf16.gmra.mrb[0].mxu0 %v447
    %v499 = vpop.f32.mrb[0].mxu0
    %v500 = vadd.f32 %v439, %v499
    %v501 = vpop.f32.mrb[0].mxu0
    %v502 = vpop.f32.mrb[0].mxu0
    %v503 = vadd.f32 %v439, %v502
    %v504 = vpop.f32.mrb[0].mxu0
    %505 = vdwg.mxu0
    %v506 = vmax.f32 %v484, 0.0
    %v507 = vmax.f32 %v487, 0.0
    %v508 = vmax.f32 %v492, 0.0
    %v509 = vmax.f32 %v495, 0.0
    %v510 = vmax.f32 %v500, 0.0
    %v511 = vmax.f32 %v503, 0.0
    %v512 = vpack.c.bf16 %v507, %v506
    %v513 = vpack.c.bf16 %v509, %v508
    %v514 = vpack.c.bf16 %v511, %v510
    %v515 = vlaneseq
    %v516 = vshrl.u32 %v515, 7
    %v517 = vsub.s32 0, %v516
    %v518 = vrot.slane %v53, %v517
    %v520 = vsel %vm360, %v512, 0
    %v523 = vsel %vm360, %v513, 0
    %v526 = vsel %vm360, %v514, 0
    %528 = vmatprep.subr.bf16.mxu0 0
    %529 = vmatpush1.bf16.msra.mxu0 %v48
    %530 = vmatprep.subr.bf16.mxu0 0
    %531 = vmatpush1.bf16.msra.mxu0 %v49
    %532 = vmatprep.subr.bf16.mxu0 0
    %533 = vmatpush1.bf16.msra.mxu0 0
    %534 = vmatprep.subr.bf16.mxu0 0
    %535 = vmatpush1.bf16.msra.mxu0 0
    %536 = vmatprep.subr.bf16.mxu0 0
    %537 = vmatpush1.bf16.msra.mxu0 0
    %538 = vmatprep.subr.bf16.mxu0 0
    %539 = vmatpush1.bf16.msra.mxu0 0
    %540 = vmatprep.subr.bf16.mxu0 0
    %541 = vmatpush1.bf16.msra.mxu0 0
    %542 = vmatprep.subr.bf16.mxu0 0
    %543 = vmatpush1.bf16.msra.mxu0 0
    %544 = vmatprep.subr.bf16.mxu0 0
    %545 = vmatpush1.bf16.msra.mxu0 0
    %546 = vmatprep.subr.bf16.mxu0 0
    %547 = vmatpush1.bf16.msra.mxu0 0
    %548 = vmatprep.subr.bf16.mxu0 0
    %549 = vmatpush1.bf16.msra.mxu0 0
    %550 = vmatprep.subr.bf16.mxu0 0
    %551 = vmatpush1.bf16.msra.mxu0 0
    %552 = vmatprep.subr.bf16.mxu0 0
    %553 = vmatpush1.bf16.msra.mxu0 0
    %554 = vmatprep.subr.bf16.mxu0 0
    %555 = vmatpush1.bf16.msra.mxu0 0
    %556 = vmatprep.subr.bf16.mxu0 0
    %557 = vmatpush1.bf16.msra.mxu0 0
    %558 = vmatprep.subr.bf16.mxu0 0
    %559 = vmatpush1.bf16.msra.mxu0 0
    %560 = vmatprep.mubr.bf16.mxu0 0
    %561 = vmatmul.mubr.bf16.gmra.mrb[0].mxu0 %v520
    %v562 = vpop.f32.mrb[0].mxu0
    %v563 = vadd.f32 %v518, %v562
    %v564 = vpop.f32.mrb[0].mxu0
    %v565 = vpop.f32.mrb[0].mxu0
    %v566 = vadd.f32 %v518, %v565
    %v567 = vpop.f32.mrb[0].mxu0
    %568 = vmatprep.mubr.bf16.mxu0 0
    %569 = vmatmul.mubr.bf16.gmra.mrb[0].mxu0 %v523
    %v570 = vpop.f32.mrb[0].mxu0
    %v571 = vadd.f32 %v518, %v570
    %v572 = vpop.f32.mrb[0].mxu0
    %v573 = vpop.f32.mrb[0].mxu0
    %v574 = vadd.f32 %v518, %v573
    %v575 = vpop.f32.mrb[0].mxu0
    %576 = vmatprep.mubr.bf16.mxu0 0
    %577 = vmatmul.mubr.bf16.gmra.mrb[0].mxu0 %v526
    %v578 = vpop.f32.mrb[0].mxu0
    %v579 = vadd.f32 %v518, %v578
    %v580 = vpop.f32.mrb[0].mxu0
    %v581 = vpop.f32.mrb[0].mxu0
    %v582 = vadd.f32 %v518, %v581
    %v583 = vpop.f32.mrb[0].mxu0
    %584 = vdwg.mxu0
    %v585 = vmax.f32 %v563, 0.0
    %v586 = vmax.f32 %v566, 0.0
    %v587 = vmax.f32 %v571, 0.0
    %v588 = vmax.f32 %v574, 0.0
    %v589 = vmax.f32 %v579, 0.0
    %v590 = vmax.f32 %v582, 0.0
    %v591 = vpack.c.bf16 %v586, %v585
    %v592 = vpack.c.bf16 %v588, %v587
    %v593 = vpack.c.bf16 %v590, %v589
    %v594 = vlaneseq
    %v595 = vshrl.u32 %v594, 7
    %v596 = vsub.s32 0, %v595
    %v597 = vrot.slane %v60, %v596
    %v599 = vsel %vm360, %v591, 0
    %v602 = vsel %vm360, %v592, 0
    %v605 = vsel %vm360, %v593, 0
    %607 = vmatprep.subr.bf16.mxu0 0
    %608 = vmatpush1.bf16.msra.mxu0 %v58
    %609 = vmatprep.subr.bf16.mxu0 0
    %610 = vmatpush1.bf16.msra.mxu0 %v59
    %611 = vmatprep.subr.bf16.mxu0 0
    %612 = vmatpush1.bf16.msra.mxu0 0
    %613 = vmatprep.subr.bf16.mxu0 0
    %614 = vmatpush1.bf16.msra.mxu0 0
    %615 = vmatprep.subr.bf16.mxu0 0
    %616 = vmatpush1.bf16.msra.mxu0 0
    %617 = vmatprep.subr.bf16.mxu0 0
    %618 = vmatpush1.bf16.msra.mxu0 0
    %619 = vmatprep.subr.bf16.mxu0 0
    %620 = vmatpush1.bf16.msra.mxu0 0
    %621 = vmatprep.subr.bf16.mxu0 0
    %622 = vmatpush1.bf16.msra.mxu0 0
    %623 = vmatprep.subr.bf16.mxu0 0
    %624 = vmatpush1.bf16.msra.mxu0 0
    %625 = vmatprep.subr.bf16.mxu0 0
    %626 = vmatpush1.bf16.msra.mxu0 0
    %627 = vmatprep.subr.bf16.mxu0 0
    %628 = vmatpush1.bf16.msra.mxu0 0
    %629 = vmatprep.subr.bf16.mxu0 0
    %630 = vmatpush1.bf16.msra.mxu0 0
    %631 = vmatprep.subr.bf16.mxu0 0
    %632 = vmatpush1.bf16.msra.mxu0 0
    %633 = vmatprep.subr.bf16.mxu0 0
    %634 = vmatpush1.bf16.msra.mxu0 0
    %635 = vmatprep.subr.bf16.mxu0 0
    %636 = vmatpush1.bf16.msra.mxu0 0
    %637 = vmatprep.subr.bf16.mxu0 0
    %638 = vmatpush1.bf16.msra.mxu0 0
    %639 = vmatprep.mubr.bf16.mxu0 0
    %640 = vmatmul.mubr.bf16.gmra.mrb[0].mxu0 %v599
    %v641 = vpop.f32.mrb[0].mxu0
    %v642 = vadd.f32 %v597, %v641
    %v643 = vpop.f32.mrb[0].mxu0
    %v644 = vpop.f32.mrb[0].mxu0
    %v645 = vadd.f32 %v597, %v644
    %v646 = vpop.f32.mrb[0].mxu0
    %647 = vmatprep.mubr.bf16.mxu0 0
    %648 = vmatmul.mubr.bf16.gmra.mrb[0].mxu0 %v602
    %v649 = vpop.f32.mrb[0].mxu0
    %v650 = vadd.f32 %v597, %v649
    %v651 = vpop.f32.mrb[0].mxu0
    %v652 = vpop.f32.mrb[0].mxu0
    %v653 = vadd.f32 %v597, %v652
    %v654 = vpop.f32.mrb[0].mxu0
    %655 = vmatprep.mubr.bf16.mxu0 0
    %656 = vmatmul.mubr.bf16.gmra.mrb[0].mxu0 %v605
    %v657 = vpop.f32.mrb[0].mxu0
    %v658 = vadd.f32 %v597, %v657
    %v659 = vpop.f32.mrb[0].mxu0
    %v660 = vpop.f32.mrb[0].mxu0
    %v661 = vadd.f32 %v597, %v660
    %v662 = vpop.f32.mrb[0].mxu0
    %663 = vdwg.mxu0
    %v665 = vsel %vm360, 0, 0
    %667 = vmatprep.subr.bf16.mxu0 0
    %668 = vmatpush1.bf16.msra.mxu0 %v65
    %669 = vmatprep.subr.bf16.mxu0 0
    %670 = vmatpush1.bf16.msra.mxu0 %v66
    %671 = vmatprep.subr.bf16.mxu0 0
    %672 = vmatpush1.bf16.msra.mxu0 0
    %673 = vmatprep.subr.bf16.mxu0 0
    %674 = vmatpush1.bf16.msra.mxu0 0
    %675 = vmatprep.subr.bf16.mxu0 0
    %676 = vmatpush1.bf16.msra.mxu0 0
    %677 = vmatprep.subr.bf16.mxu0 0
    %678 = vmatpush1.bf16.msra.mxu0 0
    %679 = vmatprep.subr.bf16.mxu0 0
    %680 = vmatpush1.bf16.msra.mxu0 0
    %681 = vmatprep.subr.bf16.mxu0 0
    %682 = vmatpush1.bf16.msra.mxu0 0
    %683 = vmatprep.subr.bf16.mxu0 0
    %684 = vmatpush1.bf16.msra.mxu0 0
    %685 = vmatprep.subr.bf16.mxu0 0
    %686 = vmatpush1.bf16.msra.mxu0 0
    %687 = vmatprep.subr.bf16.mxu0 0
    %688 = vmatpush1.bf16.msra.mxu0 0
    %689 = vmatprep.subr.bf16.mxu0 0
    %690 = vmatpush1.bf16.msra.mxu0 0
    %691 = vmatprep.subr.bf16.mxu0 0
    %692 = vmatpush1.bf16.msra.mxu0 0
    %693 = vmatprep.subr.bf16.mxu0 0
    %694 = vmatpush1.bf16.msra.mxu0 0
    %695 = vmatprep.subr.bf16.mxu0 0
    %696 = vmatpush1.bf16.msra.mxu0 0
    %697 = vmatprep.subr.bf16.mxu0 0
    %698 = vmatpush1.bf16.msra.mxu0 0
    %699 = vmatprep.mubr.bf16.mxu0 0
    %700 = vmatmul.mubr.bf16.gmra.mrb[0].mxu0 %v665
    %v701 = vpop.f32.mrb[0].mxu0
    %v702 = vadd.f32 %v71, %v701
    %v703 = vpop.f32.mrb[0].mxu0
    %v704 = vpop.f32.mrb[0].mxu0
    %v705 = vpop.f32.mrb[0].mxu0
    %706 = vdwg.mxu0
    %v707 = vadd.f32 %v642, %v702
    %v708 = vmax.f32 %v707, 0.0
    %v709 = vpack.c.bf16 %v708, %v708
    %v711 = vsel %vm360, %v709, 0
    %713 = vmatprep.subr.bf16.mxu0 0
    %714 = vmatpush1.bf16.msra.mxu0 %v76
    %715 = vmatprep.subr.bf16.mxu0 0
    %716 = vmatpush1.bf16.msra.mxu0 %v77
    %717 = vmatprep.subr.bf16.mxu0 0
    %718 = vmatpush1.bf16.msra.mxu0 0
    %719 = vmatprep.subr.bf16.mxu0 0
    %720 = vmatpush1.bf16.msra.mxu0 0
    %721 = vmatprep.subr.bf16.mxu0 0
    %722 = vmatpush1.bf16.msra.mxu0 0
    %723 = vmatprep.subr.bf16.mxu0 0
    %724 = vmatpush1.bf16.msra.mxu0 0
    %725 = vmatprep.subr.bf16.mxu0 0
    %726 = vmatpush1.bf16.msra.mxu0 0
    %727 = vmatprep.subr.bf16.mxu0 0
    %728 = vmatpush1.bf16.msra.mxu0 0
    %729 = vmatprep.subr.bf16.mxu0 0
    %730 = vmatpush1.bf16.msra.mxu0 0
    %731 = vmatprep.subr.bf16.mxu0 0
    %732 = vmatpush1.bf16.msra.mxu0 0
    %733 = vmatprep.subr.bf16.mxu0 0
    %734 = vmatpush1.bf16.msra.mxu0 0
    %735 = vmatprep.subr.bf16.mxu0 0
    %736 = vmatpush1.bf16.msra.mxu0 0
    %737 = vmatprep.subr.bf16.mxu0 0
    %738 = vmatpush1.bf16.msra.mxu0 0
    %739 = vmatprep.subr.bf16.mxu0 0
    %740 = vmatpush1.bf16.msra.mxu0 0
    %741 = vmatprep.subr.bf16.mxu0 0
    %742 = vmatpush1.bf16.msra.mxu0 0
    %743 = vmatprep.subr.bf16.mxu0 0
    %744 = vmatpush1.bf16.msra.mxu0 0
    %745 = vmatprep.mubr.bf16.mxu0 0
    %746 = vmatmul.mubr.bf16.gmra.mrb[0].mxu0 %v711
    %v747 = vpop.f32.mrb[0].mxu0
    %v748 = vadd.f32 %v82, %v747
    %v749 = vpop.f32.mrb[0].mxu0
    %v750 = vpop.f32.mrb[0].mxu0
    %v751 = vpop.f32.mrb[0].mxu0
    %752 = vdwg.mxu0
    %v753 = vmax.f32 %v748, 0.0
    %v754 = vpack.c.bf16 %v753, %v753
    %v756 = vsel %vm360, %v754, 0
    %758 = vmatprep.subr.bf16.mxu0 0
    %759 = vmatpush1.bf16.msra.mxu0 %v87
    %760 = vmatprep.subr.bf16.mxu0 0
    %761 = vmatpush1.bf16.msra.mxu0 %v88
    %762 = vmatprep.subr.bf16.mxu0 0
    %763 = vmatpush1.bf16.msra.mxu0 0
    %764 = vmatprep.subr.bf16.mxu0 0
    %765 = vmatpush1.bf16.msra.mxu0 0
    %766 = vmatprep.subr.bf16.mxu0 0
    %767 = vmatpush1.bf16.msra.mxu0 0
    %768 = vmatprep.subr.bf16.mxu0 0
    %769 = vmatpush1.bf16.msra.mxu0 0
    %770 = vmatprep.subr.bf16.mxu0 0
    %771 = vmatpush1.bf16.msra.mxu0 0
    %772 = vmatprep.subr.bf16.mxu0 0
    %773 = vmatpush1.bf16.msra.mxu0 0
    %774 = vmatprep.subr.bf16.mxu0 0
    %775 = vmatpush1.bf16.msra.mxu0 0
    %776 = vmatprep.subr.bf16.mxu0 0
    %777 = vmatpush1.bf16.msra.mxu0 0
    %778 = vmatprep.subr.bf16.mxu0 0
    %779 = vmatpush1.bf16.msra.mxu0 0
    %780 = vmatprep.subr.bf16.mxu0 0
    %781 = vmatpush1.bf16.msra.mxu0 0
    %782 = vmatprep.subr.bf16.mxu0 0
    %783 = vmatpush1.bf16.msra.mxu0 0
    %784 = vmatprep.subr.bf16.mxu0 0
    %785 = vmatpush1.bf16.msra.mxu0 0
    %786 = vmatprep.subr.bf16.mxu0 0
    %787 = vmatpush1.bf16.msra.mxu0 0
    %788 = vmatprep.subr.bf16.mxu0 0
    %789 = vmatpush1.bf16.msra.mxu0 0
    %790 = vmatprep.mubr.bf16.mxu0 0
    %791 = vmatmul.mubr.bf16.gmra.mrb[0].mxu0 %v756
    %v792 = vpop.f32.mrb[0].mxu0
    %v793 = vadd.f32 %v117, %v792
    %v794 = vpop.f32.mrb[0].mxu0
    %v795 = vpop.f32.mrb[0].mxu0
    %v796 = vpop.f32.mrb[0].mxu0
    %797 = vdwg.mxu0
    %v798 = vmax.f32 %v793, 0.0
    %v799 = vpack.c.bf16 %v798, %v798
    %vm800 = vcmask 523264
    %v802 = vsel %vm800, %v799, 0
    %804 = vmatprep.subr.bf16.mxu0 0
    %805 = vmatpush1.bf16.msra.mxu0 %v97
    %806 = vmatprep.subr.bf16.mxu0 0
    %807 = vmatpush1.bf16.msra.mxu0 %v98
    %808 = vmatprep.subr.bf16.mxu0 0
    %809 = vmatpush1.bf16.msra.mxu0 %v99
    %810 = vmatprep.subr.bf16.mxu0 0
    %811 = vmatpush1.bf16.msra.mxu0 %v100
    %812 = vmatprep.subr.bf16.mxu0 0
    %813 = vmatpush1.bf16.msra.mxu0 0
    %814 = vmatprep.subr.bf16.mxu0 0
    %815 = vmatpush1.bf16.msra.mxu0 0
    %816 = vmatprep.subr.bf16.mxu0 0
    %817 = vmatpush1.bf16.msra.mxu0 0
    %818 = vmatprep.subr.bf16.mxu0 0
    %819 = vmatpush1.bf16.msra.mxu0 0
    %820 = vmatprep.subr.bf16.mxu0 0
    %821 = vmatpush1.bf16.msra.mxu0 0
    %822 = vmatprep.subr.bf16.mxu0 0
    %823 = vmatpush1.bf16.msra.mxu0 0
    %824 = vmatprep.subr.bf16.mxu0 0
    %825 = vmatpush1.bf16.msra.mxu0 0
    %826 = vmatprep.subr.bf16.mxu0 0
    %827 = vmatpush1.bf16.msra.mxu0 0
    %828 = vmatprep.subr.bf16.mxu0 0
    %829 = vmatpush1.bf16.msra.mxu0 0
    %830 = vmatprep.subr.bf16.mxu0 0
    %831 = vmatpush1.bf16.msra.mxu0 0
    %832 = vmatprep.subr.bf16.mxu0 0
    %833 = vmatpush1.bf16.msra.mxu0 0
    %834 = vmatprep.subr.bf16.mxu0 0
    %835 = vmatpush1.bf16.msra.mxu0 0
    %836 = vmatprep.mubr.bf16.mxu0 0
    %837 = vmatmul.mubr.bf16.gmra.mrb[0].mxu0 %v802
    %v838 = vpop.f32.mrb[0].mxu0
    %v839 = vadd.f32 %v122, %v838
    %v840 = vpop.f32.mrb[0].mxu0
    %v841 = vpop.f32.mrb[0].mxu0
    %v842 = vpop.f32.mrb[0].mxu0
    %843 = vdwg.mxu0
    %v844 = vmax.f32 %v839, 0.0
    %v845 = vpack.c.bf16 %v844, %v844
    %v847 = vsel %vm800, %v845, 0
    %849 = vmatprep.subr.bf16.mxu0 0
    %850 = vmatpush1.bf16.msra.mxu0 %v109
    %851 = vmatprep.subr.bf16.mxu0 0
    %852 = vmatpush1.bf16.msra.mxu0 %v110
    %853 = vmatprep.subr.bf16.mxu0 0
    %854 = vmatpush1.bf16.msra.mxu0 %v111
    %855 = vmatprep.subr.bf16.mxu0 0
    %856 = vmatpush1.bf16.msra.mxu0 %v112
    %857 = vmatprep.subr.bf16.mxu0 0
    %858 = vmatpush1.bf16.msra.mxu0 0
    %859 = vmatprep.subr.bf16.mxu0 0
    %860 = vmatpush1.bf16.msra.mxu0 0
    %861 = vmatprep.subr.bf16.mxu0 0
    %862 = vmatpush1.bf16.msra.mxu0 0
    %863 = vmatprep.subr.bf16.mxu0 0
    %864 = vmatpush1.bf16.msra.mxu0 0
    %865 = vmatprep.subr.bf16.mxu0 0
    %866 = vmatpush1.bf16.msra.mxu0 0
    %867 = vmatprep.subr.bf16.mxu0 0
    %868 = vmatpush1.bf16.msra.mxu0 0
    %869 = vmatprep.subr.bf16.mxu0 0
    %870 = vmatpush1.bf16.msra.mxu0 0
    %871 = vmatprep.subr.bf16.mxu0 0
    %872 = vmatpush1.bf16.msra.mxu0 0
    %873 = vmatprep.subr.bf16.mxu0 0
    %874 = vmatpush1.bf16.msra.mxu0 0
    %875 = vmatprep.subr.bf16.mxu0 0
    %876 = vmatpush1.bf16.msra.mxu0 0
    %877 = vmatprep.subr.bf16.mxu0 0
    %878 = vmatpush1.bf16.msra.mxu0 0
    %879 = vmatprep.subr.bf16.mxu0 0
    %880 = vmatpush1.bf16.msra.mxu0 0
    %881 = vmatprep.mubr.bf16.mxu0 0
    %882 = vmatmul.mubr.bf16.gmra.mrb[0].mxu0 %v847
    %v883 = vpop.f32.mrb[0].mxu0
    %v884 = vadd.f32 %v127, %v883
    %v885 = vpop.f32.mrb[0].mxu0
    %v886 = vpop.f32.mrb[0].mxu0
    %v887 = vpop.f32.mrb[0].mxu0
    %888 = vdwg.mxu0
    %vm889 = vcmp.gt.f32.partialorder %v884, 20.0
    %v890 = vmin.f32 %v884, 20.0
    %v891 = vmul.f32 %v890, 1.442695
    %v892 = vpow.pop %v891
    %v893 = vadd.f32 %v892, 1.0
    %v894 = vlog2.pop %v893
    %v895 = vmul.f32 %v894, 0.6931472
    %v896 = vsel %vm889, %v884, %v895
    %898 = vrot.lane.b32.xlu0 %v896, 112
    %v899 = vpop.permute.xlu0 %898
    %v901 = vmul.f32 %v263, %v899
    %v902 = vadd.f32 %v901, %v884
    %v903 = vpack.c.bf16 %v902, %v902
    %vm904 = vcmask 130048
    %v906 = vsel %vm904, %v903, 0
    %908 = vmatprep.subr.bf16.mxu0 0
    %909 = vmatpush1.bf16.msra.mxu0 %v130
    %910 = vmatprep.subr.bf16.mxu0 0
    %911 = vmatpush1.bf16.msra.mxu0 0
    %912 = vmatprep.subr.bf16.mxu0 0
    %913 = vmatpush1.bf16.msra.mxu0 0
    %914 = vmatprep.subr.bf16.mxu0 0
    %915 = vmatpush1.bf16.msra.mxu0 0
    %916 = vmatprep.subr.bf16.mxu0 0
    %917 = vmatpush1.bf16.msra.mxu0 0
    %918 = vmatprep.subr.bf16.mxu0 0
    %919 = vmatpush1.bf16.msra.mxu0 0
    %920 = vmatprep.subr.bf16.mxu0 0
    %921 = vmatpush1.bf16.msra.mxu0 0
    %922 = vmatprep.subr.bf16.mxu0 0
    %923 = vmatpush1.bf16.msra.mxu0 0
    %924 = vmatprep.subr.bf16.mxu0 0
    %925 = vmatpush1.bf16.msra.mxu0 0
    %926 = vmatprep.subr.bf16.mxu0 0
    %927 = vmatpush1.bf16.msra.mxu0 0
    %928 = vmatprep.subr.bf16.mxu0 0
    %929 = vmatpush1.bf16.msra.mxu0 0
    %930 = vmatprep.subr.bf16.mxu0 0
    %931 = vmatpush1.bf16.msra.mxu0 0
    %932 = vmatprep.subr.bf16.mxu0 0
    %933 = vmatpush1.bf16.msra.mxu0 0
    %934 = vmatprep.subr.bf16.mxu0 0
    %935 = vmatpush1.bf16.msra.mxu0 0
    %936 = vmatprep.subr.bf16.mxu0 0
    %937 = vmatpush1.bf16.msra.mxu0 0
    %938 = vmatprep.subr.bf16.mxu0 0
    %939 = vmatpush1.bf16.msra.mxu0 0
    %940 = vmatprep.mubr.bf16.mxu0 0
    %941 = vmatmul.mubr.bf16.gmra.mrb[0].mxu0 %v906
    %v942 = vpop.f32.mrb[0].mxu0
    %v943 = vadd.f32 %v153, %v942
    %v944 = vpop.f32.mrb[0].mxu0
    %v945 = vpop.f32.mrb[0].mxu0
    %v946 = vpop.f32.mrb[0].mxu0
    %947 = vdwg.mxu0
    %v948 = vmax.f32 %v943, 0.0
    %v949 = vpack.c.bf16 %v948, %v948
    %v951 = vsel %vm360, %v949, 0
    %953 = vmatprep.subr.bf16.mxu0 0
    %954 = vmatpush1.bf16.msra.mxu0 %v135
    %955 = vmatprep.subr.bf16.mxu0 0
    %956 = vmatpush1.bf16.msra.mxu0 %v136
    %957 = vmatprep.subr.bf16.mxu0 0
    %958 = vmatpush1.bf16.msra.mxu0 0
    %959 = vmatprep.subr.bf16.mxu0 0
    %960 = vmatpush1.bf16.msra.mxu0 0
    %961 = vmatprep.subr.bf16.mxu0 0
    %962 = vmatpush1.bf16.msra.mxu0 0
    %963 = vmatprep.subr.bf16.mxu0 0
    %964 = vmatpush1.bf16.msra.mxu0 0
    %965 = vmatprep.subr.bf16.mxu0 0
    %966 = vmatpush1.bf16.msra.mxu0 0
    %967 = vmatprep.subr.bf16.mxu0 0
    %968 = vmatpush1.bf16.msra.mxu0 0
    %969 = vmatprep.subr.bf16.mxu0 0
    %970 = vmatpush1.bf16.msra.mxu0 0
    %971 = vmatprep.subr.bf16.mxu0 0
    %972 = vmatpush1.bf16.msra.mxu0 0
    %973 = vmatprep.subr.bf16.mxu0 0
    %974 = vmatpush1.bf16.msra.mxu0 0
    %975 = vmatprep.subr.bf16.mxu0 0
    %976 = vmatpush1.bf16.msra.mxu0 0
    %977 = vmatprep.subr.bf16.mxu0 0
    %978 = vmatpush1.bf16.msra.mxu0 0
    %979 = vmatprep.subr.bf16.mxu0 0
    %980 = vmatpush1.bf16.msra.mxu0 0
    %981 = vmatprep.subr.bf16.mxu0 0
    %982 = vmatpush1.bf16.msra.mxu0 0
    %983 = vmatprep.subr.bf16.mxu0 0
    %984 = vmatpush1.bf16.msra.mxu0 0
    %985 = vmatprep.mubr.bf16.mxu0 0
    %986 = vmatmul.mubr.bf16.gmra.mrb[0].mxu0 %v951
    %v987 = vpop.f32.mrb[0].mxu0
    %v988 = vadd.f32 %v158, %v987
    %v989 = vpop.f32.mrb[0].mxu0
    %v990 = vpop.f32.mrb[0].mxu0
    %v991 = vpop.f32.mrb[0].mxu0
    %992 = vdwg.mxu0
    %v993 = vmax.f32 %v988, 0.0
    %v994 = vpack.c.bf16 %v993, %v993
    %v996 = vsel %vm360, %v994, 0
    %998 = vmatprep.subr.bf16.mxu0 0
    %999 = vmatpush1.bf16.msra.mxu0 %v141
    %1000 = vmatprep.subr.bf16.mxu0 0
    %1001 = vmatpush1.bf16.msra.mxu0 %v142
    %1002 = vmatprep.subr.bf16.mxu0 0
    %1003 = vmatpush1.bf16.msra.mxu0 0
    %1004 = vmatprep.subr.bf16.mxu0 0
    %1005 = vmatpush1.bf16.msra.mxu0 0
    %1006 = vmatprep.subr.bf16.mxu0 0
    %1007 = vmatpush1.bf16.msra.mxu0 0
    %1008 = vmatprep.subr.bf16.mxu0 0
    %1009 = vmatpush1.bf16.msra.mxu0 0
    %1010 = vmatprep.subr.bf16.mxu0 0
    %1011 = vmatpush1.bf16.msra.mxu0 0
    %1012 = vmatprep.subr.bf16.mxu0 0
    %1013 = vmatpush1.bf16.msra.mxu0 0
    %1014 = vmatprep.subr.bf16.mxu0 0
    %1015 = vmatpush1.bf16.msra.mxu0 0
    %1016 = vmatprep.subr.bf16.mxu0 0
    %1017 = vmatpush1.bf16.msra.mxu0 0
    %1018 = vmatprep.subr.bf16.mxu0 0
    %1019 = vmatpush1.bf16.msra.mxu0 0
    %1020 = vmatprep.subr.bf16.mxu0 0
    %1021 = vmatpush1.bf16.msra.mxu0 0
    %1022 = vmatprep.subr.bf16.mxu0 0
    %1023 = vmatpush1.bf16.msra.mxu0 0
    %1024 = vmatprep.subr.bf16.mxu0 0
    %1025 = vmatpush1.bf16.msra.mxu0 0
    %1026 = vmatprep.subr.bf16.mxu0 0
    %1027 = vmatpush1.bf16.msra.mxu0 0
    %1028 = vmatprep.subr.bf16.mxu0 0
    %1029 = vmatpush1.bf16.msra.mxu0 0
    %1030 = vmatprep.mubr.bf16.mxu0 0
    %1031 = vmatmul.mubr.bf16.gmra.mrb[0].mxu0 %v996
    %v1032 = vpop.f32.mrb[0].mxu0
    %v1033 = vadd.f32 %v163, %v1032
    %v1034 = vpop.f32.mrb[0].mxu0
    %v1035 = vpop.f32.mrb[0].mxu0
    %v1036 = vpop.f32.mrb[0].mxu0
    %1037 = vdwg.mxu0
    %v1038 = vmax.f32 %v1033, 0.0
    %v1039 = vpack.c.bf16 %v1038, %v1038
    %v1041 = vsel %vm360, %v1039, 0
    %1043 = vmatprep.subr.bf16.mxu0 0
    %1044 = vmatpush1.bf16.msra.mxu0 %v147
    %1045 = vmatprep.subr.bf16.mxu0 0
    %1046 = vmatpush1.bf16.msra.mxu0 %v148
    %1047 = vmatprep.subr.bf16.mxu0 0
    %1048 = vmatpush1.bf16.msra.mxu0 0
    %1049 = vmatprep.subr.bf16.mxu0 0
    %1050 = vmatpush1.bf16.msra.mxu0 0
    %1051 = vmatprep.subr.bf16.mxu0 0
    %1052 = vmatpush1.bf16.msra.mxu0 0
    %1053 = vmatprep.subr.bf16.mxu0 0
    %1054 = vmatpush1.bf16.msra.mxu0 0
    %1055 = vmatprep.subr.bf16.mxu0 0
    %1056 = vmatpush1.bf16.msra.mxu0 0
    %1057 = vmatprep.subr.bf16.mxu0 0
    %1058 = vmatpush1.bf16.msra.mxu0 0
    %1059 = vmatprep.subr.bf16.mxu0 0
    %1060 = vmatpush1.bf16.msra.mxu0 0
    %1061 = vmatprep.subr.bf16.mxu0 0
    %1062 = vmatpush1.bf16.msra.mxu0 0
    %1063 = vmatprep.subr.bf16.mxu0 0
    %1064 = vmatpush1.bf16.msra.mxu0 0
    %1065 = vmatprep.subr.bf16.mxu0 0
    %1066 = vmatpush1.bf16.msra.mxu0 0
    %1067 = vmatprep.subr.bf16.mxu0 0
    %1068 = vmatpush1.bf16.msra.mxu0 0
    %1069 = vmatprep.subr.bf16.mxu0 0
    %1070 = vmatpush1.bf16.msra.mxu0 0
    %1071 = vmatprep.subr.bf16.mxu0 0
    %1072 = vmatpush1.bf16.msra.mxu0 0
    %1073 = vmatprep.subr.bf16.mxu0 0
    %1074 = vmatpush1.bf16.msra.mxu0 0
    %1075 = vmatprep.mubr.bf16.mxu0 0
    %1076 = vmatmul.mubr.bf16.gmra.mrb[0].mxu0 %v1041
    %v1077 = vpop.f32.mrb[0].mxu0
    %v1078 = vadd.f32 %v168, %v1077
    %v1079 = vpop.f32.mrb[0].mxu0
    %v1080 = vpop.f32.mrb[0].mxu0
    %v1081 = vpop.f32.mrb[0].mxu0
    %1082 = vdwg.mxu0
    %v1083 = vmax.f32 %v1078, 0.0
    %v1084 = vpack.c.bf16 %v1083, %v1083
    %v1086 = vsel %vm360, %v1084, 0
    %1088 = vmatprep.subr.bf16.mxu0 0
    %1089 = vmatpush1.bf16.msra.mxu0 %v173
    %1090 = vmatprep.subr.bf16.mxu0 0
    %1091 = vmatpush1.bf16.msra.mxu0 %v174
    %1092 = vmatprep.subr.bf16.mxu0 0
    %1093 = vmatpush1.bf16.msra.mxu0 0
    %1094 = vmatprep.subr.bf16.mxu0 0
    %1095 = vmatpush1.bf16.msra.mxu0 0
    %1096 = vmatprep.subr.bf16.mxu0 0
    %1097 = vmatpush1.bf16.msra.mxu0 0
    %1098 = vmatprep.subr.bf16.mxu0 0
    %1099 = vmatpush1.bf16.msra.mxu0 0
    %1100 = vmatprep.subr.bf16.mxu0 0
    %1101 = vmatpush1.bf16.msra.mxu0 0
    %1102 = vmatprep.subr.bf16.mxu0 0
    %1103 = vmatpush1.bf16.msra.mxu0 0
    %1104 = vmatprep.subr.bf16.mxu0 0
    %1105 = vmatpush1.bf16.msra.mxu0 0
    %1106 = vmatprep.subr.bf16.mxu0 0
    %1107 = vmatpush1.bf16.msra.mxu0 0
    %1108 = vmatprep.subr.bf16.mxu0 0
    %1109 = vmatpush1.bf16.msra.mxu0 0
    %1110 = vmatprep.subr.bf16.mxu0 0
    %1111 = vmatpush1.bf16.msra.mxu0 0
    %1112 = vmatprep.subr.bf16.mxu0 0
    %1113 = vmatpush1.bf16.msra.mxu0 0
    %1114 = vmatprep.subr.bf16.mxu0 0
    %1115 = vmatpush1.bf16.msra.mxu0 0
    %1116 = vmatprep.subr.bf16.mxu0 0
    %1117 = vmatpush1.bf16.msra.mxu0 0
    %1118 = vmatprep.subr.bf16.mxu0 0
    %1119 = vmatpush1.bf16.msra.mxu0 0
    %1120 = vmatprep.mubr.bf16.mxu0 0
    %1121 = vmatmul.mubr.bf16.gmra.mrb[0].mxu0 %v1086
    %v1122 = vpop.f32.mrb[0].mxu0
    %v1123 = vadd.f32 0.0, %v1122
    %v1124 = vpop.f32.mrb[0].mxu0
    %v1125 = vpop.f32.mrb[0].mxu0
    %v1126 = vpop.f32.mrb[0].mxu0
    %1127 = vdwg.mxu0
    %1129 = vrot.lane.b32.xlu0 %v1123, 32
    %v1130 = vpop.permute.xlu0 %1129
    %v1132 = vadd.f32 %v642, %v1130
    %v1133 = vadd.f32 %v1132, %v702
    %v1134 = vsub.f32 0.0, %v1133
    %v1135 = vmul.f32 %v1134, 1.442695
    %v1136 = vpow.pop %v1135
    %v1137 = vadd.f32 %v1136, 1.0
    %v1138 = vrcp.pop %v1137
    %1140 = vrot.lane.b32.xlu0 %v702, 64
    %v1141 = vpop.permute.xlu0 %1140
    %v1143 = vmul.f32 %v1138, %v1141
    %1145 = vrot.lane.b32.xlu0 %v1143, 64
    %v1146 = vpop.permute.xlu0 %1145
    %v1148 = vadd.f32 %v1132, %v1146
    %v1149 = vtanh.pop %v1148
    %v1150 = vsub.f32 1.0, %v1138
    %1152 = vrot.lane.b32.xlu0 %v1149, 96
    %v1153 = vpop.permute.xlu0 %1152
    %v1155 = vmul.f32 %v1150, %v1153
    %v1156 = vmul.f32 %v1138, 0.0
    %v1157 = vadd.f32 %v1155, %v1156
    %v1158 = vpack.c.bf16 %v1157, %v1157
    %1160 = vrot.lane.b32.xlu0 %v1158, 64
    %v1161 = vpop.permute.xlu0 %1160
    %v1163 = vsel %vm360, %v1161, 0
    %1165 = vmatprep.subr.bf16.mxu0 0
    %1166 = vmatpush1.bf16.msra.mxu0 %v65
    %1167 = vmatprep.subr.bf16.mxu0 0
    %1168 = vmatpush1.bf16.msra.mxu0 %v66
    %1169 = vmatprep.subr.bf16.mxu0 0
    %1170 = vmatpush1.bf16.msra.mxu0 0
    %1171 = vmatprep.subr.bf16.mxu0 0
    %1172 = vmatpush1.bf16.msra.mxu0 0
    %1173 = vmatprep.subr.bf16.mxu0 0
    %1174 = vmatpush1.bf16.msra.mxu0 0
    %1175 = vmatprep.subr.bf16.mxu0 0
    %1176 = vmatpush1.bf16.msra.mxu0 0
    %1177 = vmatprep.subr.bf16.mxu0 0
    %1178 = vmatpush1.bf16.msra.mxu0 0
    %1179 = vmatprep.subr.bf16.mxu0 0
    %1180 = vmatpush1.bf16.msra.mxu0 0
    %1181 = vmatprep.subr.bf16.mxu0 0
    %1182 = vmatpush1.bf16.msra.mxu0 0
    %1183 = vmatprep.subr.bf16.mxu0 0
    %1184 = vmatpush1.bf16.msra.mxu0 0
    %1185 = vmatprep.subr.bf16.mxu0 0
    %1186 = vmatpush1.bf16.msra.mxu0 0
    %1187 = vmatprep.subr.bf16.mxu0 0
    %1188 = vmatpush1.bf16.msra.mxu0 0
    %1189 = vmatprep.subr.bf16.mxu0 0
    %1190 = vmatpush1.bf16.msra.mxu0 0
    %1191 = vmatprep.subr.bf16.mxu0 0
    %1192 = vmatpush1.bf16.msra.mxu0 0
    %1193 = vmatprep.subr.bf16.mxu0 0
    %1194 = vmatpush1.bf16.msra.mxu0 0
    %1195 = vmatprep.subr.bf16.mxu0 0
    %1196 = vmatpush1.bf16.msra.mxu0 0
    %1197 = vmatprep.mubr.bf16.mxu0 0
    %1198 = vmatmul.mubr.bf16.gmra.mrb[0].mxu0 %v1163
    %v1199 = vpop.f32.mrb[0].mxu0
    %v1200 = vadd.f32 %v71, %v1199
    %v1201 = vpop.f32.mrb[0].mxu0
    %v1202 = vpop.f32.mrb[0].mxu0
    %v1203 = vpop.f32.mrb[0].mxu0
    %1204 = vdwg.mxu0
    %v1205 = vadd.f32 %v645, %v1200
    %v1206 = vmax.f32 %v1205, 0.0
    %v1207 = vpack.c.bf16 %v1206, %v1206
    %v1209 = vsel %vm360, %v1207, 0
    %1211 = vmatprep.subr.bf16.mxu0 0
    %1212 = vmatpush1.bf16.msra.mxu0 %v76
    %1213 = vmatprep.subr.bf16.mxu0 0
    %1214 = vmatpush1.bf16.msra.mxu0 %v77
    %1215 = vmatprep.subr.bf16.mxu0 0
    %1216 = vmatpush1.bf16.msra.mxu0 0
    %1217 = vmatprep.subr.bf16.mxu0 0
    %1218 = vmatpush1.bf16.msra.mxu0 0
    %1219 = vmatprep.subr.bf16.mxu0 0
    %1220 = vmatpush1.bf16.msra.mxu0 0
    %1221 = vmatprep.subr.bf16.mxu0 0
    %1222 = vmatpush1.bf16.msra.mxu0 0
    %1223 = vmatprep.subr.bf16.mxu0 0
    %1224 = vmatpush1.bf16.msra.mxu0 0
    %1225 = vmatprep.subr.bf16.mxu0 0
    %1226 = vmatpush1.bf16.msra.mxu0 0
    %1227 = vmatprep.subr.bf16.mxu0 0
    %1228 = vmatpush1.bf16.msra.mxu0 0
    %1229 = vmatprep.subr.bf16.mxu0 0
    %1230 = vmatpush1.bf16.msra.mxu0 0
    %1231 = vmatprep.subr.bf16.mxu0 0
    %1232 = vmatpush1.bf16.msra.mxu0 0
    %1233 = vmatprep.subr.bf16.mxu0 0
    %1234 = vmatpush1.bf16.msra.mxu0 0
    %1235 = vmatprep.subr.bf16.mxu0 0
    %1236 = vmatpush1.bf16.msra.mxu0 0
    %1237 = vmatprep.subr.bf16.mxu0 0
    %1238 = vmatpush1.bf16.msra.mxu0 0
    %1239 = vmatprep.subr.bf16.mxu0 0
    %1240 = vmatpush1.bf16.msra.mxu0 0
    %1241 = vmatprep.subr.bf16.mxu0 0
    %1242 = vmatpush1.bf16.msra.mxu0 0
    %1243 = vmatprep.mubr.bf16.mxu0 0
    %1244 = vmatmul.mubr.bf16.gmra.mrb[0].mxu0 %v1209
    %v1245 = vpop.f32.mrb[0].mxu0
    %v1246 = vadd.f32 %v82, %v1245
    %v1247 = vpop.f32.mrb[0].mxu0
    %v1248 = vpop.f32.mrb[0].mxu0
    %v1249 = vpop.f32.mrb[0].mxu0
    %1250 = vdwg.mxu0
    %v1251 = vmax.f32 %v1246, 0.0
    %v1252 = vpack.c.bf16 %v1251, %v1251
    %v1254 = vsel %vm360, %v1252, 0
    %1256 = vmatprep.subr.bf16.mxu0 0
    %1257 = vmatpush1.bf16.msra.mxu0 %v87
    %1258 = vmatprep.subr.bf16.mxu0 0
    %1259 = vmatpush1.bf16.msra.mxu0 %v88
    %1260 = vmatprep.subr.bf16.mxu0 0
    %1261 = vmatpush1.bf16.msra.mxu0 0
    %1262 = vmatprep.subr.bf16.mxu0 0
    %1263 = vmatpush1.bf16.msra.mxu0 0
    %1264 = vmatprep.subr.bf16.mxu0 0
    %1265 = vmatpush1.bf16.msra.mxu0 0
    %1266 = vmatprep.subr.bf16.mxu0 0
    %1267 = vmatpush1.bf16.msra.mxu0 0
    %1268 = vmatprep.subr.bf16.mxu0 0
    %1269 = vmatpush1.bf16.msra.mxu0 0
    %1270 = vmatprep.subr.bf16.mxu0 0
    %1271 = vmatpush1.bf16.msra.mxu0 0
    %1272 = vmatprep.subr.bf16.mxu0 0
    %1273 = vmatpush1.bf16.msra.mxu0 0
    %1274 = vmatprep.subr.bf16.mxu0 0
    %1275 = vmatpush1.bf16.msra.mxu0 0
    %1276 = vmatprep.subr.bf16.mxu0 0
    %1277 = vmatpush1.bf16.msra.mxu0 0
    %1278 = vmatprep.subr.bf16.mxu0 0
    %1279 = vmatpush1.bf16.msra.mxu0 0
    %1280 = vmatprep.subr.bf16.mxu0 0
    %1281 = vmatpush1.bf16.msra.mxu0 0
    %1282 = vmatprep.subr.bf16.mxu0 0
    %1283 = vmatpush1.bf16.msra.mxu0 0
    %1284 = vmatprep.subr.bf16.mxu0 0
    %1285 = vmatpush1.bf16.msra.mxu0 0
    %1286 = vmatprep.subr.bf16.mxu0 0
    %1287 = vmatpush1.bf16.msra.mxu0 0
    %1288 = vmatprep.mubr.bf16.mxu0 0
    %1289 = vmatmul.mubr.bf16.gmra.mrb[0].mxu0 %v1254
    %v1290 = vpop.f32.mrb[0].mxu0
    %v1291 = vadd.f32 %v117, %v1290
    %v1292 = vpop.f32.mrb[0].mxu0
    %v1293 = vpop.f32.mrb[0].mxu0
    %v1294 = vpop.f32.mrb[0].mxu0
    %1295 = vdwg.mxu0
    %v1296 = vmax.f32 %v1291, 0.0
    %v1297 = vpack.c.bf16 %v1296, %v1296
    %v1299 = vsel %vm800, %v1297, 0
    %1301 = vmatprep.subr.bf16.mxu0 0
    %1302 = vmatpush1.bf16.msra.mxu0 %v97
    %1303 = vmatprep.subr.bf16.mxu0 0
    %1304 = vmatpush1.bf16.msra.mxu0 %v98
    %1305 = vmatprep.subr.bf16.mxu0 0
    %1306 = vmatpush1.bf16.msra.mxu0 %v99
    %1307 = vmatprep.subr.bf16.mxu0 0
    %1308 = vmatpush1.bf16.msra.mxu0 %v100
    %1309 = vmatprep.subr.bf16.mxu0 0
    %1310 = vmatpush1.bf16.msra.mxu0 0
    %1311 = vmatprep.subr.bf16.mxu0 0
    %1312 = vmatpush1.bf16.msra.mxu0 0
    %1313 = vmatprep.subr.bf16.mxu0 0
    %1314 = vmatpush1.bf16.msra.mxu0 0
    %1315 = vmatprep.subr.bf16.mxu0 0
    %1316 = vmatpush1.bf16.msra.mxu0 0
    %1317 = vmatprep.subr.bf16.mxu0 0
    %1318 = vmatpush1.bf16.msra.mxu0 0
    %1319 = vmatprep.subr.bf16.mxu0 0
    %1320 = vmatpush1.bf16.msra.mxu0 0
    %1321 = vmatprep.subr.bf16.mxu0 0
    %1322 = vmatpush1.bf16.msra.mxu0 0
    %1323 = vmatprep.subr.bf16.mxu0 0
    %1324 = vmatpush1.bf16.msra.mxu0 0
    %1325 = vmatprep.subr.bf16.mxu0 0
    %1326 = vmatpush1.bf16.msra.mxu0 0
    %1327 = vmatprep.subr.bf16.mxu0 0
    %1328 = vmatpush1.bf16.msra.mxu0 0
    %1329 = vmatprep.subr.bf16.mxu0 0
    %1330 = vmatpush1.bf16.msra.mxu0 0
    %1331 = vmatprep.subr.bf16.mxu0 0
    %1332 = vmatpush1.bf16.msra.mxu0 0
    %1333 = vmatprep.mubr.bf16.mxu0 0
    %1334 = vmatmul.mubr.bf16.gmra.mrb[0].mxu0 %v1299
    %v1335 = vpop.f32.mrb[0].mxu0
    %v1336 = vadd.f32 %v122, %v1335
    %v1337 = vpop.f32.mrb[0].mxu0
    %v1338 = vpop.f32.mrb[0].mxu0
    %v1339 = vpop.f32.mrb[0].mxu0
    %1340 = vdwg.mxu0
    %v1341 = vmax.f32 %v1336, 0.0
    %v1342 = vpack.c.bf16 %v1341, %v1341
    %v1344 = vsel %vm800, %v1342, 0
    %1346 = vmatprep.subr.bf16.mxu0 0
    %1347 = vmatpush1.bf16.msra.mxu0 %v109
    %1348 = vmatprep.subr.bf16.mxu0 0
    %1349 = vmatpush1.bf16.msra.mxu0 %v110
    %1350 = vmatprep.subr.bf16.mxu0 0
    %1351 = vmatpush1.bf16.msra.mxu0 %v111
    %1352 = vmatprep.subr.bf16.mxu0 0
    %1353 = vmatpush1.bf16.msra.mxu0 %v112
    %1354 = vmatprep.subr.bf16.mxu0 0
    %1355 = vmatpush1.bf16.msra.mxu0 0
    %1356 = vmatprep.subr.bf16.mxu0 0
    %1357 = vmatpush1.bf16.msra.mxu0 0
    %1358 = vmatprep.subr.bf16.mxu0 0
    %1359 = vmatpush1.bf16.msra.mxu0 0
    %1360 = vmatprep.subr.bf16.mxu0 0
    %1361 = vmatpush1.bf16.msra.mxu0 0
    %1362 = vmatprep.subr.bf16.mxu0 0
    %1363 = vmatpush1.bf16.msra.mxu0 0
    %1364 = vmatprep.subr.bf16.mxu0 0
    %1365 = vmatpush1.bf16.msra.mxu0 0
    %1366 = vmatprep.subr.bf16.mxu0 0
    %1367 = vmatpush1.bf16.msra.mxu0 0
    %1368 = vmatprep.subr.bf16.mxu0 0
    %1369 = vmatpush1.bf16.msra.mxu0 0
    %1370 = vmatprep.subr.bf16.mxu0 0
    %1371 = vmatpush1.bf16.msra.mxu0 0
    %1372 = vmatprep.subr.bf16.mxu0 0
    %1373 = vmatpush1.bf16.msra.mxu0 0
    %1374 = vmatprep.subr.bf16.mxu0 0
    %1375 = vmatpush1.bf16.msra.mxu0 0
    %1376 = vmatprep.subr.bf16.mxu0 0
    %1377 = vmatpush1.bf16.msra.mxu0 0
    %1378 = vmatprep.mubr.bf16.mxu0 0
    %1379 = vmatmul.mubr.bf16.gmra.mrb[0].mxu0 %v1344
    %v1380 = vpop.f32.mrb[0].mxu0
    %v1381 = vadd.f32 %v127, %v1380
    %v1382 = vpop.f32.mrb[0].mxu0
    %v1383 = vpop.f32.mrb[0].mxu0
    %v1384 = vpop.f32.mrb[0].mxu0
    %1385 = vdwg.mxu0
    %vm1386 = vcmp.gt.f32.partialorder %v1381, 20.0
    %v1387 = vmin.f32 %v1381, 20.0
    %v1388 = vmul.f32 %v1387, 1.442695
    %v1389 = vpow.pop %v1388
    %v1390 = vadd.f32 %v1389, 1.0
    %v1391 = vlog2.pop %v1390
    %v1392 = vmul.f32 %v1391, 0.6931472
    %v1393 = vsel %vm1386, %v1381, %v1392
    %1395 = vrot.lane.b32.xlu0 %v1393, 112
    %v1396 = vpop.permute.xlu0 %1395
    %v1398 = vmul.f32 %v264, %v1396
    %v1399 = vadd.f32 %v1398, %v1381
    %v1400 = vpack.c.bf16 %v1399, %v1399
    %v1402 = vsel %vm904, %v1400, 0
    %1404 = vmatprep.subr.bf16.mxu0 0
    %1405 = vmatpush1.bf16.msra.mxu0 %v130
    %1406 = vmatprep.subr.bf16.mxu0 0
    %1407 = vmatpush1.bf16.msra.mxu0 0
    %1408 = vmatprep.subr.bf16.mxu0 0
    %1409 = vmatpush1.bf16.msra.mxu0 0
    %1410 = vmatprep.subr.bf16.mxu0 0
    %1411 = vmatpush1.bf16.msra.mxu0 0
    %1412 = vmatprep.subr.bf16.mxu0 0
    %1413 = vmatpush1.bf16.msra.mxu0 0
    %1414 = vmatprep.subr.bf16.mxu0 0
    %1415 = vmatpush1.bf16.msra.mxu0 0
    %1416 = vmatprep.subr.bf16.mxu0 0
    %1417 = vmatpush1.bf16.msra.mxu0 0
    %1418 = vmatprep.subr.bf16.mxu0 0
    %1419 = vmatpush1.bf16.msra.mxu0 0
    %1420 = vmatprep.subr.bf16.mxu0 0
    %1421 = vmatpush1.bf16.msra.mxu0 0
    %1422 = vmatprep.subr.bf16.mxu0 0
    %1423 = vmatpush1.bf16.msra.mxu0 0
    %1424 = vmatprep.subr.bf16.mxu0 0
    %1425 = vmatpush1.bf16.msra.mxu0 0
    %1426 = vmatprep.subr.bf16.mxu0 0
    %1427 = vmatpush1.bf16.msra.mxu0 0
    %1428 = vmatprep.subr.bf16.mxu0 0
    %1429 = vmatpush1.bf16.msra.mxu0 0
    %1430 = vmatprep.subr.bf16.mxu0 0
    %1431 = vmatpush1.bf16.msra.mxu0 0
    %1432 = vmatprep.subr.bf16.mxu0 0
    %1433 = vmatpush1.bf16.msra.mxu0 0
    %1434 = vmatprep.subr.bf16.mxu0 0
    %1435 = vmatpush1.bf16.msra.mxu0 0
    %1436 = vmatprep.mubr.bf16.mxu0 0
    %1437 = vmatmul.mubr.bf16.gmra.mrb[0].mxu0 %v1402
    %v1438 = vpop.f32.mrb[0].mxu0
    %v1439 = vadd.f32 %v153, %v1438
    %v1440 = vpop.f32.mrb[0].mxu0
    %v1441 = vpop.f32.mrb[0].mxu0
    %v1442 = vpop.f32.mrb[0].mxu0
    %1443 = vdwg.mxu0
    %v1444 = vmax.f32 %v1439, 0.0
    %v1445 = vpack.c.bf16 %v1444, %v1444
    %v1447 = vsel %vm360, %v1445, 0
    %1449 = vmatprep.subr.bf16.mxu0 0
    %1450 = vmatpush1.bf16.msra.mxu0 %v135
    %1451 = vmatprep.subr.bf16.mxu0 0
    %1452 = vmatpush1.bf16.msra.mxu0 %v136
    %1453 = vmatprep.subr.bf16.mxu0 0
    %1454 = vmatpush1.bf16.msra.mxu0 0
    %1455 = vmatprep.subr.bf16.mxu0 0
    %1456 = vmatpush1.bf16.msra.mxu0 0
    %1457 = vmatprep.subr.bf16.mxu0 0
    %1458 = vmatpush1.bf16.msra.mxu0 0
    %1459 = vmatprep.subr.bf16.mxu0 0
    %1460 = vmatpush1.bf16.msra.mxu0 0
    %1461 = vmatprep.subr.bf16.mxu0 0
    %1462 = vmatpush1.bf16.msra.mxu0 0
    %1463 = vmatprep.subr.bf16.mxu0 0
    %1464 = vmatpush1.bf16.msra.mxu0 0
    %1465 = vmatprep.subr.bf16.mxu0 0
    %1466 = vmatpush1.bf16.msra.mxu0 0
    %1467 = vmatprep.subr.bf16.mxu0 0
    %1468 = vmatpush1.bf16.msra.mxu0 0
    %1469 = vmatprep.subr.bf16.mxu0 0
    %1470 = vmatpush1.bf16.msra.mxu0 0
    %1471 = vmatprep.subr.bf16.mxu0 0
    %1472 = vmatpush1.bf16.msra.mxu0 0
    %1473 = vmatprep.subr.bf16.mxu0 0
    %1474 = vmatpush1.bf16.msra.mxu0 0
    %1475 = vmatprep.subr.bf16.mxu0 0
    %1476 = vmatpush1.bf16.msra.mxu0 0
    %1477 = vmatprep.subr.bf16.mxu0 0
    %1478 = vmatpush1.bf16.msra.mxu0 0
    %1479 = vmatprep.subr.bf16.mxu0 0
    %1480 = vmatpush1.bf16.msra.mxu0 0
    %1481 = vmatprep.mubr.bf16.mxu0 0
    %1482 = vmatmul.mubr.bf16.gmra.mrb[0].mxu0 %v1447
    %v1483 = vpop.f32.mrb[0].mxu0
    %v1484 = vadd.f32 %v158, %v1483
    %v1485 = vpop.f32.mrb[0].mxu0
    %v1486 = vpop.f32.mrb[0].mxu0
    %v1487 = vpop.f32.mrb[0].mxu0
    %1488 = vdwg.mxu0
    %v1489 = vmax.f32 %v1484, 0.0
    %v1490 = vpack.c.bf16 %v1489, %v1489
    %v1492 = vsel %vm360, %v1490, 0
    %1494 = vmatprep.subr.bf16.mxu0 0
    %1495 = vmatpush1.bf16.msra.mxu0 %v141
    %1496 = vmatprep.subr.bf16.mxu0 0
    %1497 = vmatpush1.bf16.msra.mxu0 %v142
    %1498 = vmatprep.subr.bf16.mxu0 0
    %1499 = vmatpush1.bf16.msra.mxu0 0
    %1500 = vmatprep.subr.bf16.mxu0 0
    %1501 = vmatpush1.bf16.msra.mxu0 0
    %1502 = vmatprep.subr.bf16.mxu0 0
    %1503 = vmatpush1.bf16.msra.mxu0 0
    %1504 = vmatprep.subr.bf16.mxu0 0
    %1505 = vmatpush1.bf16.msra.mxu0 0
    %1506 = vmatprep.subr.bf16.mxu0 0
    %1507 = vmatpush1.bf16.msra.mxu0 0
    %1508 = vmatprep.subr.bf16.mxu0 0
    %1509 = vmatpush1.bf16.msra.mxu0 0
    %1510 = vmatprep.subr.bf16.mxu0 0
    %1511 = vmatpush1.bf16.msra.mxu0 0
    %1512 = vmatprep.subr.bf16.mxu0 0
    %1513 = vmatpush1.bf16.msra.mxu0 0
    %1514 = vmatprep.subr.bf16.mxu0 0
    %1515 = vmatpush1.bf16.msra.mxu0 0
    %1516 = vmatprep.subr.bf16.mxu0 0
    %1517 = vmatpush1.bf16.msra.mxu0 0
    %1518 = vmatprep.subr.bf16.mxu0 0
    %1519 = vmatpush1.bf16.msra.mxu0 0
    %1520 = vmatprep.subr.bf16.mxu0 0
    %1521 = vmatpush1.bf16.msra.mxu0 0
    %1522 = vmatprep.subr.bf16.mxu0 0
    %1523 = vmatpush1.bf16.msra.mxu0 0
    %1524 = vmatprep.subr.bf16.mxu0 0
    %1525 = vmatpush1.bf16.msra.mxu0 0
    %1526 = vmatprep.mubr.bf16.mxu0 0
    %1527 = vmatmul.mubr.bf16.gmra.mrb[0].mxu0 %v1492
    %v1528 = vpop.f32.mrb[0].mxu0
    %v1529 = vadd.f32 %v163, %v1528
    %v1530 = vpop.f32.mrb[0].mxu0
    %v1531 = vpop.f32.mrb[0].mxu0
    %v1532 = vpop.f32.mrb[0].mxu0
    %1533 = vdwg.mxu0
    %v1534 = vmax.f32 %v1529, 0.0
    %v1535 = vpack.c.bf16 %v1534, %v1534
    %v1537 = vsel %vm360, %v1535, 0
    %1539 = vmatprep.subr.bf16.mxu0 0
    %1540 = vmatpush1.bf16.msra.mxu0 %v147
    %1541 = vmatprep.subr.bf16.mxu0 0
    %1542 = vmatpush1.bf16.msra.mxu0 %v148
    %1543 = vmatprep.subr.bf16.mxu0 0
    %1544 = vmatpush1.bf16.msra.mxu0 0
    %1545 = vmatprep.subr.bf16.mxu0 0
    %1546 = vmatpush1.bf16.msra.mxu0 0
    %1547 = vmatprep.subr.bf16.mxu0 0
    %1548 = vmatpush1.bf16.msra.mxu0 0
    %1549 = vmatprep.subr.bf16.mxu0 0
    %1550 = vmatpush1.bf16.msra.mxu0 0
    %1551 = vmatprep.subr.bf16.mxu0 0
    %1552 = vmatpush1.bf16.msra.mxu0 0
    %1553 = vmatprep.subr.bf16.mxu0 0
    %1554 = vmatpush1.bf16.msra.mxu0 0
    %1555 = vmatprep.subr.bf16.mxu0 0
    %1556 = vmatpush1.bf16.msra.mxu0 0
    %1557 = vmatprep.subr.bf16.mxu0 0
    %1558 = vmatpush1.bf16.msra.mxu0 0
    %1559 = vmatprep.subr.bf16.mxu0 0
    %1560 = vmatpush1.bf16.msra.mxu0 0
    %1561 = vmatprep.subr.bf16.mxu0 0
    %1562 = vmatpush1.bf16.msra.mxu0 0
    %1563 = vmatprep.subr.bf16.mxu0 0
    %1564 = vmatpush1.bf16.msra.mxu0 0
    %1565 = vmatprep.subr.bf16.mxu0 0
    %1566 = vmatpush1.bf16.msra.mxu0 0
    %1567 = vmatprep.subr.bf16.mxu0 0
    %1568 = vmatpush1.bf16.msra.mxu0 0
    %1569 = vmatprep.subr.bf16.mxu0 0
    %1570 = vmatpush1.bf16.msra.mxu0 0
    %1571 = vmatprep.mubr.bf16.mxu0 0
    %1572 = vmatmul.mubr.bf16.gmra.mrb[0].mxu0 %v1537
    %v1573 = vpop.f32.mrb[0].mxu0
    %v1574 = vadd.f32 %v168, %v1573
    %v1575 = vpop.f32.mrb[0].mxu0
    %v1576 = vpop.f32.mrb[0].mxu0
    %v1577 = vpop.f32.mrb[0].mxu0
    %1578 = vdwg.mxu0
    %v1579 = vmax.f32 %v1574, 0.0
    %v1580 = vpack.c.bf16 %v1579, %v1579
    %v1582 = vsel %vm360, %v1580, 0
    %1584 = vmatprep.subr.bf16.mxu0 0
    %1585 = vmatpush1.bf16.msra.mxu0 %v173
    %1586 = vmatprep.subr.bf16.mxu0 0
    %1587 = vmatpush1.bf16.msra.mxu0 %v174
    %1588 = vmatprep.subr.bf16.mxu0 0
    %1589 = vmatpush1.bf16.msra.mxu0 0
    %1590 = vmatprep.subr.bf16.mxu0 0
    %1591 = vmatpush1.bf16.msra.mxu0 0
    %1592 = vmatprep.subr.bf16.mxu0 0
    %1593 = vmatpush1.bf16.msra.mxu0 0
    %1594 = vmatprep.subr.bf16.mxu0 0
    %1595 = vmatpush1.bf16.msra.mxu0 0
    %1596 = vmatprep.subr.bf16.mxu0 0
    %1597 = vmatpush1.bf16.msra.mxu0 0
    %1598 = vmatprep.subr.bf16.mxu0 0
    %1599 = vmatpush1.bf16.msra.mxu0 0
    %1600 = vmatprep.subr.bf16.mxu0 0
    %1601 = vmatpush1.bf16.msra.mxu0 0
    %1602 = vmatprep.subr.bf16.mxu0 0
    %1603 = vmatpush1.bf16.msra.mxu0 0
    %1604 = vmatprep.subr.bf16.mxu0 0
    %1605 = vmatpush1.bf16.msra.mxu0 0
    %1606 = vmatprep.subr.bf16.mxu0 0
    %1607 = vmatpush1.bf16.msra.mxu0 0
    %1608 = vmatprep.subr.bf16.mxu0 0
    %1609 = vmatpush1.bf16.msra.mxu0 0
    %1610 = vmatprep.subr.bf16.mxu0 0
    %1611 = vmatpush1.bf16.msra.mxu0 0
    %1612 = vmatprep.subr.bf16.mxu0 0
    %1613 = vmatpush1.bf16.msra.mxu0 0
    %1614 = vmatprep.subr.bf16.mxu0 0
    %1615 = vmatpush1.bf16.msra.mxu0 0
    %1616 = vmatprep.mubr.bf16.mxu0 0
    %1617 = vmatmul.mubr.bf16.gmra.mrb[0].mxu0 %v1582
    %v1618 = vpop.f32.mrb[0].mxu0
    %v1619 = vadd.f32 0.0, %v1618
    %v1620 = vpop.f32.mrb[0].mxu0
    %v1621 = vpop.f32.mrb[0].mxu0
    %v1622 = vpop.f32.mrb[0].mxu0
    %1623 = vdwg.mxu0
    %1625 = vrot.lane.b32.xlu0 %v1619, 32
    %v1626 = vpop.permute.xlu0 %1625
    %v1628 = vadd.f32 %v645, %v1626
    %v1629 = vadd.f32 %v1628, %v1200
    %v1630 = vsub.f32 0.0, %v1629
    %v1631 = vmul.f32 %v1630, 1.442695
    %v1632 = vpow.pop %v1631
    %v1633 = vadd.f32 %v1632, 1.0
    %v1634 = vrcp.pop %v1633
    %1636 = vrot.lane.b32.xlu0 %v1200, 64
    %v1637 = vpop.permute.xlu0 %1636
    %v1639 = vmul.f32 %v1634, %v1637
    %1641 = vrot.lane.b32.xlu0 %v1639, 64
    %v1642 = vpop.permute.xlu0 %1641
    %v1644 = vadd.f32 %v1628, %v1642
    %v1645 = vtanh.pop %v1644
    %v1646 = vsub.f32 1.0, %v1634
    %1648 = vrot.lane.b32.xlu0 %v1645, 96
    %v1649 = vpop.permute.xlu0 %1648
    %v1651 = vmul.f32 %v1646, %v1649
    %v1652 = vmul.f32 %v1634, %v1157
    %v1653 = vadd.f32 %v1651, %v1652
    %v1654 = vpack.c.bf16 %v1653, %v1653
    %1656 = vrot.lane.b32.xlu0 %v1654, 64
    %v1657 = vpop.permute.xlu0 %1656
    %v1659 = vsel %vm360, %v1657, 0
    %1661 = vmatprep.subr.bf16.mxu0 0
    %1662 = vmatpush1.bf16.msra.mxu0 %v65
    %1663 = vmatprep.subr.bf16.mxu0 0
    %1664 = vmatpush1.bf16.msra.mxu0 %v66
    %1665 = vmatprep.subr.bf16.mxu0 0
    %1666 = vmatpush1.bf16.msra.mxu0 0
    %1667 = vmatprep.subr.bf16.mxu0 0
    %1668 = vmatpush1.bf16.msra.mxu0 0
    %1669 = vmatprep.subr.bf16.mxu0 0
    %1670 = vmatpush1.bf16.msra.mxu0 0
    %1671 = vmatprep.subr.bf16.mxu0 0
    %1672 = vmatpush1.bf16.msra.mxu0 0
    %1673 = vmatprep.subr.bf16.mxu0 0
    %1674 = vmatpush1.bf16.msra.mxu0 0
    %1675 = vmatprep.subr.bf16.mxu0 0
    %1676 = vmatpush1.bf16.msra.mxu0 0
    %1677 = vmatprep.subr.bf16.mxu0 0
    %1678 = vmatpush1.bf16.msra.mxu0 0
    %1679 = vmatprep.subr.bf16.mxu0 0
    %1680 = vmatpush1.bf16.msra.mxu0 0
    %1681 = vmatprep.subr.bf16.mxu0 0
    %1682 = vmatpush1.bf16.msra.mxu0 0
    %1683 = vmatprep.subr.bf16.mxu0 0
    %1684 = vmatpush1.bf16.msra.mxu0 0
    %1685 = vmatprep.subr.bf16.mxu0 0
    %1686 = vmatpush1.bf16.msra.mxu0 0
    %1687 = vmatprep.subr.bf16.mxu0 0
    %1688 = vmatpush1.bf16.msra.mxu0 0
    %1689 = vmatprep.subr.bf16.mxu0 0
    %1690 = vmatpush1.bf16.msra.mxu0 0
    %1691 = vmatprep.subr.bf16.mxu0 0
    %1692 = vmatpush1.bf16.msra.mxu0 0
    %1693 = vmatprep.mubr.bf16.mxu0 0
    %1694 = vmatmul.mubr.bf16.gmra.mrb[0].mxu0 %v1659
    %v1695 = vpop.f32.mrb[0].mxu0
    %v1696 = vadd.f32 %v71, %v1695
    %v1697 = vpop.f32.mrb[0].mxu0
    %v1698 = vpop.f32.mrb[0].mxu0
    %v1699 = vpop.f32.mrb[0].mxu0
    %1700 = vdwg.mxu0
    %v1701 = vadd.f32 %v650, %v1696
    %v1702 = vmax.f32 %v1701, 0.0
    %v1703 = vpack.c.bf16 %v1702, %v1702
    %v1705 = vsel %vm360, %v1703, 0
    %1707 = vmatprep.subr.bf16.mxu0 0
    %1708 = vmatpush1.bf16.msra.mxu0 %v76
    %1709 = vmatprep.subr.bf16.mxu0 0
    %1710 = vmatpush1.bf16.msra.mxu0 %v77
    %1711 = vmatprep.subr.bf16.mxu0 0
    %1712 = vmatpush1.bf16.msra.mxu0 0
    %1713 = vmatprep.subr.bf16.mxu0 0
    %1714 = vmatpush1.bf16.msra.mxu0 0
    %1715 = vmatprep.subr.bf16.mxu0 0
    %1716 = vmatpush1.bf16.msra.mxu0 0
    %1717 = vmatprep.subr.bf16.mxu0 0
    %1718 = vmatpush1.bf16.msra.mxu0 0
    %1719 = vmatprep.subr.bf16.mxu0 0
    %1720 = vmatpush1.bf16.msra.mxu0 0
    %1721 = vmatprep.subr.bf16.mxu0 0
    %1722 = vmatpush1.bf16.msra.mxu0 0
    %1723 = vmatprep.subr.bf16.mxu0 0
    %1724 = vmatpush1.bf16.msra.mxu0 0
    %1725 = vmatprep.subr.bf16.mxu0 0
    %1726 = vmatpush1.bf16.msra.mxu0 0
    %1727 = vmatprep.subr.bf16.mxu0 0
    %1728 = vmatpush1.bf16.msra.mxu0 0
    %1729 = vmatprep.subr.bf16.mxu0 0
    %1730 = vmatpush1.bf16.msra.mxu0 0
    %1731 = vmatprep.subr.bf16.mxu0 0
    %1732 = vmatpush1.bf16.msra.mxu0 0
    %1733 = vmatprep.subr.bf16.mxu0 0
    %1734 = vmatpush1.bf16.msra.mxu0 0
    %1735 = vmatprep.subr.bf16.mxu0 0
    %1736 = vmatpush1.bf16.msra.mxu0 0
    %1737 = vmatprep.subr.bf16.mxu0 0
    %1738 = vmatpush1.bf16.msra.mxu0 0
    %1739 = vmatprep.mubr.bf16.mxu0 0
    %1740 = vmatmul.mubr.bf16.gmra.mrb[0].mxu0 %v1705
    %v1741 = vpop.f32.mrb[0].mxu0
    %v1742 = vadd.f32 %v82, %v1741
    %v1743 = vpop.f32.mrb[0].mxu0
    %v1744 = vpop.f32.mrb[0].mxu0
    %v1745 = vpop.f32.mrb[0].mxu0
    %1746 = vdwg.mxu0
    %v1747 = vmax.f32 %v1742, 0.0
    %v1748 = vpack.c.bf16 %v1747, %v1747
    %v1750 = vsel %vm360, %v1748, 0
    %1752 = vmatprep.subr.bf16.mxu0 0
    %1753 = vmatpush1.bf16.msra.mxu0 %v87
    %1754 = vmatprep.subr.bf16.mxu0 0
    %1755 = vmatpush1.bf16.msra.mxu0 %v88
    %1756 = vmatprep.subr.bf16.mxu0 0
    %1757 = vmatpush1.bf16.msra.mxu0 0
    %1758 = vmatprep.subr.bf16.mxu0 0
    %1759 = vmatpush1.bf16.msra.mxu0 0
    %1760 = vmatprep.subr.bf16.mxu0 0
    %1761 = vmatpush1.bf16.msra.mxu0 0
    %1762 = vmatprep.subr.bf16.mxu0 0
    %1763 = vmatpush1.bf16.msra.mxu0 0
    %1764 = vmatprep.subr.bf16.mxu0 0
    %1765 = vmatpush1.bf16.msra.mxu0 0
    %1766 = vmatprep.subr.bf16.mxu0 0
    %1767 = vmatpush1.bf16.msra.mxu0 0
    %1768 = vmatprep.subr.bf16.mxu0 0
    %1769 = vmatpush1.bf16.msra.mxu0 0
    %1770 = vmatprep.subr.bf16.mxu0 0
    %1771 = vmatpush1.bf16.msra.mxu0 0
    %1772 = vmatprep.subr.bf16.mxu0 0
    %1773 = vmatpush1.bf16.msra.mxu0 0
    %1774 = vmatprep.subr.bf16.mxu0 0
    %1775 = vmatpush1.bf16.msra.mxu0 0
    %1776 = vmatprep.subr.bf16.mxu0 0
    %1777 = vmatpush1.bf16.msra.mxu0 0
    %1778 = vmatprep.subr.bf16.mxu0 0
    %1779 = vmatpush1.bf16.msra.mxu0 0
    %1780 = vmatprep.subr.bf16.mxu0 0
    %1781 = vmatpush1.bf16.msra.mxu0 0
    %1782 = vmatprep.subr.bf16.mxu0 0
    %1783 = vmatpush1.bf16.msra.mxu0 0
    %1784 = vmatprep.mubr.bf16.mxu0 0
    %1785 = vmatmul.mubr.bf16.gmra.mrb[0].mxu0 %v1750
    %v1786 = vpop.f32.mrb[0].mxu0
    %v1787 = vadd.f32 %v117, %v1786
    %v1788 = vpop.f32.mrb[0].mxu0
    %v1789 = vpop.f32.mrb[0].mxu0
    %v1790 = vpop.f32.mrb[0].mxu0
    %1791 = vdwg.mxu0
    %v1792 = vmax.f32 %v1787, 0.0
    %v1793 = vpack.c.bf16 %v1792, %v1792
    %v1795 = vsel %vm800, %v1793, 0
    %1797 = vmatprep.subr.bf16.mxu0 0
    %1798 = vmatpush1.bf16.msra.mxu0 %v97
    %1799 = vmatprep.subr.bf16.mxu0 0
    %1800 = vmatpush1.bf16.msra.mxu0 %v98
    %1801 = vmatprep.subr.bf16.mxu0 0
    %1802 = vmatpush1.bf16.msra.mxu0 %v99
    %1803 = vmatprep.subr.bf16.mxu0 0
    %1804 = vmatpush1.bf16.msra.mxu0 %v100
    %1805 = vmatprep.subr.bf16.mxu0 0
    %1806 = vmatpush1.bf16.msra.mxu0 0
    %1807 = vmatprep.subr.bf16.mxu0 0
    %1808 = vmatpush1.bf16.msra.mxu0 0
    %1809 = vmatprep.subr.bf16.mxu0 0
    %1810 = vmatpush1.bf16.msra.mxu0 0
    %1811 = vmatprep.subr.bf16.mxu0 0
    %1812 = vmatpush1.bf16.msra.mxu0 0
    %1813 = vmatprep.subr.bf16.mxu0 0
    %1814 = vmatpush1.bf16.msra.mxu0 0
    %1815 = vmatprep.subr.bf16.mxu0 0
    %1816 = vmatpush1.bf16.msra.mxu0 0
    %1817 = vmatprep.subr.bf16.mxu0 0
    %1818 = vmatpush1.bf16.msra.mxu0 0
    %1819 = vmatprep.subr.bf16.mxu0 0
    %1820 = vmatpush1.bf16.msra.mxu0 0
    %1821 = vmatprep.subr.bf16.mxu0 0
    %1822 = vmatpush1.bf16.msra.mxu0 0
    %1823 = vmatprep.subr.bf16.mxu0 0
    %1824 = vmatpush1.bf16.msra.mxu0 0
    %1825 = vmatprep.subr.bf16.mxu0 0
    %1826 = vmatpush1.bf16.msra.mxu0 0
    %1827 = vmatprep.subr.bf16.mxu0 0
    %1828 = vmatpush1.bf16.msra.mxu0 0
    %1829 = vmatprep.mubr.bf16.mxu0 0
    %1830 = vmatmul.mubr.bf16.gmra.mrb[0].mxu0 %v1795
    %v1831 = vpop.f32.mrb[0].mxu0
    %v1832 = vadd.f32 %v122, %v1831
    %v1833 = vpop.f32.mrb[0].mxu0
    %v1834 = vpop.f32.mrb[0].mxu0
    %v1835 = vpop.f32.mrb[0].mxu0
    %1836 = vdwg.mxu0
    %v1837 = vmax.f32 %v1832, 0.0
    %v1838 = vpack.c.bf16 %v1837, %v1837
    %v1840 = vsel %vm800, %v1838, 0
    %1842 = vmatprep.subr.bf16.mxu0 0
    %1843 = vmatpush1.bf16.msra.mxu0 %v109
    %1844 = vmatprep.subr.bf16.mxu0 0
    %1845 = vmatpush1.bf16.msra.mxu0 %v110
    %1846 = vmatprep.subr.bf16.mxu0 0
    %1847 = vmatpush1.bf16.msra.mxu0 %v111
    %1848 = vmatprep.subr.bf16.mxu0 0
    %1849 = vmatpush1.bf16.msra.mxu0 %v112
    %1850 = vmatprep.subr.bf16.mxu0 0
    %1851 = vmatpush1.bf16.msra.mxu0 0
    %1852 = vmatprep.subr.bf16.mxu0 0
    %1853 = vmatpush1.bf16.msra.mxu0 0
    %1854 = vmatprep.subr.bf16.mxu0 0
    %1855 = vmatpush1.bf16.msra.mxu0 0
    %1856 = vmatprep.subr.bf16.mxu0 0
    %1857 = vmatpush1.bf16.msra.mxu0 0
    %1858 = vmatprep.subr.bf16.mxu0 0
    %1859 = vmatpush1.bf16.msra.mxu0 0
    %1860 = vmatprep.subr.bf16.mxu0 0
    %1861 = vmatpush1.bf16.msra.mxu0 0
    %1862 = vmatprep.subr.bf16.mxu0 0
    %1863 = vmatpush1.bf16.msra.mxu0 0
    %1864 = vmatprep.subr.bf16.mxu0 0
    %1865 = vmatpush1.bf16.msra.mxu0 0
    %1866 = vmatprep.subr.bf16.mxu0 0
    %1867 = vmatpush1.bf16.msra.mxu0 0
    %1868 = vmatprep.subr.bf16.mxu0 0
    %1869 = vmatpush1.bf16.msra.mxu0 0
    %1870 = vmatprep.subr.bf16.mxu0 0
    %1871 = vmatpush1.bf16.msra.mxu0 0
    %1872 = vmatprep.subr.bf16.mxu0 0
    %1873 = vmatpush1.bf16.msra.mxu0 0
    %1874 = vmatprep.mubr.bf16.mxu0 0
    %1875 = vmatmul.mubr.bf16.gmra.mrb[0].mxu0 %v1840
    %v1876 = vpop.f32.mrb[0].mxu0
    %v1877 = vadd.f32 %v127, %v1876
    %v1878 = vpop.f32.mrb[0].mxu0
    %v1879 = vpop.f32.mrb[0].mxu0
    %v1880 = vpop.f32.mrb[0].mxu0
    %1881 = vdwg.mxu0
    %vm1882 = vcmp.gt.f32.partialorder %v1877, 20.0
    %v1883 = vmin.f32 %v1877, 20.0
    %v1884 = vmul.f32 %v1883, 1.442695
    %v1885 = vpow.pop %v1884
    %v1886 = vadd.f32 %v1885, 1.0
    %v1887 = vlog2.pop %v1886
    %v1888 = vmul.f32 %v1887, 0.6931472
    %v1889 = vsel %vm1882, %v1877, %v1888
    %1891 = vrot.lane.b32.xlu0 %v1889, 112
    %v1892 = vpop.permute.xlu0 %1891
    %v1894 = vmul.f32 %v265, %v1892
    %v1895 = vadd.f32 %v1894, %v1877
    %v1896 = vpack.c.bf16 %v1895, %v1895
    %v1898 = vsel %vm904, %v1896, 0
    %1900 = vmatprep.subr.bf16.mxu0 0
    %1901 = vmatpush1.bf16.msra.mxu0 %v130
    %1902 = vmatprep.subr.bf16.mxu0 0
    %1903 = vmatpush1.bf16.msra.mxu0 0
    %1904 = vmatprep.subr.bf16.mxu0 0
    %1905 = vmatpush1.bf16.msra.mxu0 0
    %1906 = vmatprep.subr.bf16.mxu0 0
    %1907 = vmatpush1.bf16.msra.mxu0 0
    %1908 = vmatprep.subr.bf16.mxu0 0
    %1909 = vmatpush1.bf16.msra.mxu0 0
    %1910 = vmatprep.subr.bf16.mxu0 0
    %1911 = vmatpush1.bf16.msra.mxu0 0
    %1912 = vmatprep.subr.bf16.mxu0 0
    %1913 = vmatpush1.bf16.msra.mxu0 0
    %1914 = vmatprep.subr.bf16.mxu0 0
    %1915 = vmatpush1.bf16.msra.mxu0 0
    %1916 = vmatprep.subr.bf16.mxu0 0
    %1917 = vmatpush1.bf16.msra.mxu0 0
    %1918 = vmatprep.subr.bf16.mxu0 0
    %1919 = vmatpush1.bf16.msra.mxu0 0
    %1920 = vmatprep.subr.bf16.mxu0 0
    %1921 = vmatpush1.bf16.msra.mxu0 0
    %1922 = vmatprep.subr.bf16.mxu0 0
    %1923 = vmatpush1.bf16.msra.mxu0 0
    %1924 = vmatprep.subr.bf16.mxu0 0
    %1925 = vmatpush1.bf16.msra.mxu0 0
    %1926 = vmatprep.subr.bf16.mxu0 0
    %1927 = vmatpush1.bf16.msra.mxu0 0
    %1928 = vmatprep.subr.bf16.mxu0 0
    %1929 = vmatpush1.bf16.msra.mxu0 0
    %1930 = vmatprep.subr.bf16.mxu0 0
    %1931 = vmatpush1.bf16.msra.mxu0 0
    %1932 = vmatprep.mubr.bf16.mxu0 0
    %1933 = vmatmul.mubr.bf16.gmra.mrb[0].mxu0 %v1898
    %v1934 = vpop.f32.mrb[0].mxu0
    %v1935 = vadd.f32 %v153, %v1934
    %v1936 = vpop.f32.mrb[0].mxu0
    %v1937 = vpop.f32.mrb[0].mxu0
    %v1938 = vpop.f32.mrb[0].mxu0
    %1939 = vdwg.mxu0
    %v1940 = vmax.f32 %v1935, 0.0
    %v1941 = vpack.c.bf16 %v1940, %v1940
    %v1943 = vsel %vm360, %v1941, 0
    %1945 = vmatprep.subr.bf16.mxu0 0
    %1946 = vmatpush1.bf16.msra.mxu0 %v135
    %1947 = vmatprep.subr.bf16.mxu0 0
    %1948 = vmatpush1.bf16.msra.mxu0 %v136
    %1949 = vmatprep.subr.bf16.mxu0 0
    %1950 = vmatpush1.bf16.msra.mxu0 0
    %1951 = vmatprep.subr.bf16.mxu0 0
    %1952 = vmatpush1.bf16.msra.mxu0 0
    %1953 = vmatprep.subr.bf16.mxu0 0
    %1954 = vmatpush1.bf16.msra.mxu0 0
    %1955 = vmatprep.subr.bf16.mxu0 0
    %1956 = vmatpush1.bf16.msra.mxu0 0
    %1957 = vmatprep.subr.bf16.mxu0 0
    %1958 = vmatpush1.bf16.msra.mxu0 0
    %1959 = vmatprep.subr.bf16.mxu0 0
    %1960 = vmatpush1.bf16.msra.mxu0 0
    %1961 = vmatprep.subr.bf16.mxu0 0
    %1962 = vmatpush1.bf16.msra.mxu0 0
    %1963 = vmatprep.subr.bf16.mxu0 0
    %1964 = vmatpush1.bf16.msra.mxu0 0
    %1965 = vmatprep.subr.bf16.mxu0 0
    %1966 = vmatpush1.bf16.msra.mxu0 0
    %1967 = vmatprep.subr.bf16.mxu0 0
    %1968 = vmatpush1.bf16.msra.mxu0 0
    %1969 = vmatprep.subr.bf16.mxu0 0
    %1970 = vmatpush1.bf16.msra.mxu0 0
    %1971 = vmatprep.subr.bf16.mxu0 0
    %1972 = vmatpush1.bf16.msra.mxu0 0
    %1973 = vmatprep.subr.bf16.mxu0 0
    %1974 = vmatpush1.bf16.msra.mxu0 0
    %1975 = vmatprep.subr.bf16.mxu0 0
    %1976 = vmatpush1.bf16.msra.mxu0 0
    %1977 = vmatprep.mubr.bf16.mxu0 0
    %1978 = vmatmul.mubr.bf16.gmra.mrb[0].mxu0 %v1943
    %v1979 = vpop.f32.mrb[0].mxu0
    %v1980 = vadd.f32 %v158, %v1979
    %v1981 = vpop.f32.mrb[0].mxu0
    %v1982 = vpop.f32.mrb[0].mxu0
    %v1983 = vpop.f32.mrb[0].mxu0
    %1984 = vdwg.mxu0
    %v1985 = vmax.f32 %v1980, 0.0
    %v1986 = vpack.c.bf16 %v1985, %v1985
    %v1988 = vsel %vm360, %v1986, 0
    %1990 = vmatprep.subr.bf16.mxu0 0
    %1991 = vmatpush1.bf16.msra.mxu0 %v141
    %1992 = vmatprep.subr.bf16.mxu0 0
    %1993 = vmatpush1.bf16.msra.mxu0 %v142
    %1994 = vmatprep.subr.bf16.mxu0 0
    %1995 = vmatpush1.bf16.msra.mxu0 0
    %1996 = vmatprep.subr.bf16.mxu0 0
    %1997 = vmatpush1.bf16.msra.mxu0 0
    %1998 = vmatprep.subr.bf16.mxu0 0
    %1999 = vmatpush1.bf16.msra.mxu0 0
    %2000 = vmatprep.subr.bf16.mxu0 0
    %2001 = vmatpush1.bf16.msra.mxu0 0
    %2002 = vmatprep.subr.bf16.mxu0 0
    %2003 = vmatpush1.bf16.msra.mxu0 0
    %2004 = vmatprep.subr.bf16.mxu0 0
    %2005 = vmatpush1.bf16.msra.mxu0 0
    %2006 = vmatprep.subr.bf16.mxu0 0
    %2007 = vmatpush1.bf16.msra.mxu0 0
    %2008 = vmatprep.subr.bf16.mxu0 0
    %2009 = vmatpush1.bf16.msra.mxu0 0
    %2010 = vmatprep.subr.bf16.mxu0 0
    %2011 = vmatpush1.bf16.msra.mxu0 0
    %2012 = vmatprep.subr.bf16.mxu0 0
    %2013 = vmatpush1.bf16.msra.mxu0 0
    %2014 = vmatprep.subr.bf16.mxu0 0
    %2015 = vmatpush1.bf16.msra.mxu0 0
    %2016 = vmatprep.subr.bf16.mxu0 0
    %2017 = vmatpush1.bf16.msra.mxu0 0
    %2018 = vmatprep.subr.bf16.mxu0 0
    %2019 = vmatpush1.bf16.msra.mxu0 0
    %2020 = vmatprep.subr.bf16.mxu0 0
    %2021 = vmatpush1.bf16.msra.mxu0 0
    %2022 = vmatprep.mubr.bf16.mxu0 0
    %2023 = vmatmul.mubr.bf16.gmra.mrb[0].mxu0 %v1988
    %v2024 = vpop.f32.mrb[0].mxu0
    %v2025 = vadd.f32 %v163, %v2024
    %v2026 = vpop.f32.mrb[0].mxu0
    %v2027 = vpop.f32.mrb[0].mxu0
    %v2028 = vpop.f32.mrb[0].mxu0
    %2029 = vdwg.mxu0
    %v2030 = vmax.f32 %v2025, 0.0
    %v2031 = vpack.c.bf16 %v2030, %v2030
    %v2033 = vsel %vm360, %v2031, 0
    %2035 = vmatprep.subr.bf16.mxu0 0
    %2036 = vmatpush1.bf16.msra.mxu0 %v147
    %2037 = vmatprep.subr.bf16.mxu0 0
    %2038 = vmatpush1.bf16.msra.mxu0 %v148
    %2039 = vmatprep.subr.bf16.mxu0 0
    %2040 = vmatpush1.bf16.msra.mxu0 0
    %2041 = vmatprep.subr.bf16.mxu0 0
    %2042 = vmatpush1.bf16.msra.mxu0 0
    %2043 = vmatprep.subr.bf16.mxu0 0
    %2044 = vmatpush1.bf16.msra.mxu0 0
    %2045 = vmatprep.subr.bf16.mxu0 0
    %2046 = vmatpush1.bf16.msra.mxu0 0
    %2047 = vmatprep.subr.bf16.mxu0 0
    %2048 = vmatpush1.bf16.msra.mxu0 0
    %2049 = vmatprep.subr.bf16.mxu0 0
    %2050 = vmatpush1.bf16.msra.mxu0 0
    %2051 = vmatprep.subr.bf16.mxu0 0
    %2052 = vmatpush1.bf16.msra.mxu0 0
    %2053 = vmatprep.subr.bf16.mxu0 0
    %2054 = vmatpush1.bf16.msra.mxu0 0
    %2055 = vmatprep.subr.bf16.mxu0 0
    %2056 = vmatpush1.bf16.msra.mxu0 0
    %2057 = vmatprep.subr.bf16.mxu0 0
    %2058 = vmatpush1.bf16.msra.mxu0 0
    %2059 = vmatprep.subr.bf16.mxu0 0
    %2060 = vmatpush1.bf16.msra.mxu0 0
    %2061 = vmatprep.subr.bf16.mxu0 0
    %2062 = vmatpush1.bf16.msra.mxu0 0
    %2063 = vmatprep.subr.bf16.mxu0 0
    %2064 = vmatpush1.bf16.msra.mxu0 0
    %2065 = vmatprep.subr.bf16.mxu0 0
    %2066 = vmatpush1.bf16.msra.mxu0 0
    %2067 = vmatprep.mubr.bf16.mxu0 0
    %2068 = vmatmul.mubr.bf16.gmra.mrb[0].mxu0 %v2033
    %v2069 = vpop.f32.mrb[0].mxu0
    %v2070 = vadd.f32 %v168, %v2069
    %v2071 = vpop.f32.mrb[0].mxu0
    %v2072 = vpop.f32.mrb[0].mxu0
    %v2073 = vpop.f32.mrb[0].mxu0
    %2074 = vdwg.mxu0
    %v2075 = vmax.f32 %v2070, 0.0
    %v2076 = vpack.c.bf16 %v2075, %v2075
    %v2078 = vsel %vm360, %v2076, 0
    %2080 = vmatprep.subr.bf16.mxu0 0
    %2081 = vmatpush1.bf16.msra.mxu0 %v173
    %2082 = vmatprep.subr.bf16.mxu0 0
    %2083 = vmatpush1.bf16.msra.mxu0 %v174
    %2084 = vmatprep.subr.bf16.mxu0 0
    %2085 = vmatpush1.bf16.msra.mxu0 0
    %2086 = vmatprep.subr.bf16.mxu0 0
    %2087 = vmatpush1.bf16.msra.mxu0 0
    %2088 = vmatprep.subr.bf16.mxu0 0
    %2089 = vmatpush1.bf16.msra.mxu0 0
    %2090 = vmatprep.subr.bf16.mxu0 0
    %2091 = vmatpush1.bf16.msra.mxu0 0
    %2092 = vmatprep.subr.bf16.mxu0 0
    %2093 = vmatpush1.bf16.msra.mxu0 0
    %2094 = vmatprep.subr.bf16.mxu0 0
    %2095 = vmatpush1.bf16.msra.mxu0 0
    %2096 = vmatprep.subr.bf16.mxu0 0
    %2097 = vmatpush1.bf16.msra.mxu0 0
    %2098 = vmatprep.subr.bf16.mxu0 0
    %2099 = vmatpush1.bf16.msra.mxu0 0
    %2100 = vmatprep.subr.bf16.mxu0 0
    %2101 = vmatpush1.bf16.msra.mxu0 0
    %2102 = vmatprep.subr.bf16.mxu0 0
    %2103 = vmatpush1.bf16.msra.mxu0 0
    %2104 = vmatprep.subr.bf16.mxu0 0
    %2105 = vmatpush1.bf16.msra.mxu0 0
    %2106 = vmatprep.subr.bf16.mxu0 0
    %2107 = vmatpush1.bf16.msra.mxu0 0
    %2108 = vmatprep.subr.bf16.mxu0 0
    %2109 = vmatpush1.bf16.msra.mxu0 0
    %2110 = vmatprep.subr.bf16.mxu0 0
    %2111 = vmatpush1.bf16.msra.mxu0 0
    %2112 = vmatprep.mubr.bf16.mxu0 0
    %2113 = vmatmul.mubr.bf16.gmra.mrb[0].mxu0 %v2078
    %v2114 = vpop.f32.mrb[0].mxu0
    %v2115 = vadd.f32 0.0, %v2114
    %v2116 = vpop.f32.mrb[0].mxu0
    %v2117 = vpop.f32.mrb[0].mxu0
    %v2118 = vpop.f32.mrb[0].mxu0
    %2119 = vdwg.mxu0
    %2121 = vrot.lane.b32.xlu0 %v2115, 32
    %v2122 = vpop.permute.xlu0 %2121
    %v2124 = vadd.f32 %v650, %v2122
    %v2125 = vadd.f32 %v2124, %v1696
    %v2126 = vsub.f32 0.0, %v2125
    %v2127 = vmul.f32 %v2126, 1.442695
    %v2128 = vpow.pop %v2127
    %v2129 = vadd.f32 %v2128, 1.0
    %v2130 = vrcp.pop %v2129
    %2132 = vrot.lane.b32.xlu0 %v1696, 64
    %v2133 = vpop.permute.xlu0 %2132
    %v2135 = vmul.f32 %v2130, %v2133
    %2137 = vrot.lane.b32.xlu0 %v2135, 64
    %v2138 = vpop.permute.xlu0 %2137
    %v2140 = vadd.f32 %v2124, %v2138
    %v2141 = vtanh.pop %v2140
    %v2142 = vsub.f32 1.0, %v2130
    %2144 = vrot.lane.b32.xlu0 %v2141, 96
    %v2145 = vpop.permute.xlu0 %2144
    %v2147 = vmul.f32 %v2142, %v2145
    %v2148 = vmul.f32 %v2130, %v1653
    %v2149 = vadd.f32 %v2147, %v2148
    %v2150 = vpack.c.bf16 %v2149, %v2149
    %2152 = vrot.lane.b32.xlu0 %v2150, 64
    %v2153 = vpop.permute.xlu0 %2152
    %v2155 = vsel %vm360, %v2153, 0
    %2157 = vmatprep.subr.bf16.mxu0 0
    %2158 = vmatpush1.bf16.msra.mxu0 %v65
    %2159 = vmatprep.subr.bf16.mxu0 0
    %2160 = vmatpush1.bf16.msra.mxu0 %v66
    %2161 = vmatprep.subr.bf16.mxu0 0
    %2162 = vmatpush1.bf16.msra.mxu0 0
    %2163 = vmatprep.subr.bf16.mxu0 0
    %2164 = vmatpush1.bf16.msra.mxu0 0
    %2165 = vmatprep.subr.bf16.mxu0 0
    %2166 = vmatpush1.bf16.msra.mxu0 0
    %2167 = vmatprep.subr.bf16.mxu0 0
    %2168 = vmatpush1.bf16.msra.mxu0 0
    %2169 = vmatprep.subr.bf16.mxu0 0
    %2170 = vmatpush1.bf16.msra.mxu0 0
    %2171 = vmatprep.subr.bf16.mxu0 0
    %2172 = vmatpush1.bf16.msra.mxu0 0
    %2173 = vmatprep.subr.bf16.mxu0 0
    %2174 = vmatpush1.bf16.msra.mxu0 0
    %2175 = vmatprep.subr.bf16.mxu0 0
    %2176 = vmatpush1.bf16.msra.mxu0 0
    %2177 = vmatprep.subr.bf16.mxu0 0
    %2178 = vmatpush1.bf16.msra.mxu0 0
    %2179 = vmatprep.subr.bf16.mxu0 0
    %2180 = vmatpush1.bf16.msra.mxu0 0
    %2181 = vmatprep.subr.bf16.mxu0 0
    %2182 = vmatpush1.bf16.msra.mxu0 0
    %2183 = vmatprep.subr.bf16.mxu0 0
    %2184 = vmatpush1.bf16.msra.mxu0 0
    %2185 = vmatprep.subr.bf16.mxu0 0
    %2186 = vmatpush1.bf16.msra.mxu0 0
    %2187 = vmatprep.subr.bf16.mxu0 0
    %2188 = vmatpush1.bf16.msra.mxu0 0
    %2189 = vmatprep.mubr.bf16.mxu0 0
    %2190 = vmatmul.mubr.bf16.gmra.mrb[0].mxu0 %v2155
    %v2191 = vpop.f32.mrb[0].mxu0
    %v2192 = vadd.f32 %v71, %v2191
    %v2193 = vpop.f32.mrb[0].mxu0
    %v2194 = vpop.f32.mrb[0].mxu0
    %v2195 = vpop.f32.mrb[0].mxu0
    %2196 = vdwg.mxu0
    %v2197 = vadd.f32 %v653, %v2192
    %v2198 = vmax.f32 %v2197, 0.0
    %v2199 = vpack.c.bf16 %v2198, %v2198
    %v2201 = vsel %vm360, %v2199, 0
    %2203 = vmatprep.subr.bf16.mxu0 0
    %2204 = vmatpush1.bf16.msra.mxu0 %v76
    %2205 = vmatprep.subr.bf16.mxu0 0
    %2206 = vmatpush1.bf16.msra.mxu0 %v77
    %2207 = vmatprep.subr.bf16.mxu0 0
    %2208 = vmatpush1.bf16.msra.mxu0 0
    %2209 = vmatprep.subr.bf16.mxu0 0
    %2210 = vmatpush1.bf16.msra.mxu0 0
    %2211 = vmatprep.subr.bf16.mxu0 0
    %2212 = vmatpush1.bf16.msra.mxu0 0
    %2213 = vmatprep.subr.bf16.mxu0 0
    %2214 = vmatpush1.bf16.msra.mxu0 0
    %2215 = vmatprep.subr.bf16.mxu0 0
    %2216 = vmatpush1.bf16.msra.mxu0 0
    %2217 = vmatprep.subr.bf16.mxu0 0
    %2218 = vmatpush1.bf16.msra.mxu0 0
    %2219 = vmatprep.subr.bf16.mxu0 0
    %2220 = vmatpush1.bf16.msra.mxu0 0
    %2221 = vmatprep.subr.bf16.mxu0 0
    %2222 = vmatpush1.bf16.msra.mxu0 0
    %2223 = vmatprep.subr.bf16.mxu0 0
    %2224 = vmatpush1.bf16.msra.mxu0 0
    %2225 = vmatprep.subr.bf16.mxu0 0
    %2226 = vmatpush1.bf16.msra.mxu0 0
    %2227 = vmatprep.subr.bf16.mxu0 0
    %2228 = vmatpush1.bf16.msra.mxu0 0
    %2229 = vmatprep.subr.bf16.mxu0 0
    %2230 = vmatpush1.bf16.msra.mxu0 0
    %2231 = vmatprep.subr.bf16.mxu0 0
    %2232 = vmatpush1.bf16.msra.mxu0 0
    %2233 = vmatprep.subr.bf16.mxu0 0
    %2234 = vmatpush1.bf16.msra.mxu0 0
    %2235 = vmatprep.mubr.bf16.mxu0 0
    %2236 = vmatmul.mubr.bf16.gmra.mrb[0].mxu0 %v2201
    %v2237 = vpop.f32.mrb[0].mxu0
    %v2238 = vadd.f32 %v82, %v2237
    %v2239 = vpop.f32.mrb[0].mxu0
    %v2240 = vpop.f32.mrb[0].mxu0
    %v2241 = vpop.f32.mrb[0].mxu0
    %2242 = vdwg.mxu0
    %v2243 = vmax.f32 %v2238, 0.0
    %v2244 = vpack.c.bf16 %v2243, %v2243
    %v2246 = vsel %vm360, %v2244, 0
    %2248 = vmatprep.subr.bf16.mxu0 0
    %2249 = vmatpush1.bf16.msra.mxu0 %v87
    %2250 = vmatprep.subr.bf16.mxu0 0
    %2251 = vmatpush1.bf16.msra.mxu0 %v88
    %2252 = vmatprep.subr.bf16.mxu0 0
    %2253 = vmatpush1.bf16.msra.mxu0 0
    %2254 = vmatprep.subr.bf16.mxu0 0
    %2255 = vmatpush1.bf16.msra.mxu0 0
    %2256 = vmatprep.subr.bf16.mxu0 0
    %2257 = vmatpush1.bf16.msra.mxu0 0
    %2258 = vmatprep.subr.bf16.mxu0 0
    %2259 = vmatpush1.bf16.msra.mxu0 0
    %2260 = vmatprep.subr.bf16.mxu0 0
    %2261 = vmatpush1.bf16.msra.mxu0 0
    %2262 = vmatprep.subr.bf16.mxu0 0
    %2263 = vmatpush1.bf16.msra.mxu0 0
    %2264 = vmatprep.subr.bf16.mxu0 0
    %2265 = vmatpush1.bf16.msra.mxu0 0
    %2266 = vmatprep.subr.bf16.mxu0 0
    %2267 = vmatpush1.bf16.msra.mxu0 0
    %2268 = vmatprep.subr.bf16.mxu0 0
    %2269 = vmatpush1.bf16.msra.mxu0 0
    %2270 = vmatprep.subr.bf16.mxu0 0
    %2271 = vmatpush1.bf16.msra.mxu0 0
    %2272 = vmatprep.subr.bf16.mxu0 0
    %2273 = vmatpush1.bf16.msra.mxu0 0
    %2274 = vmatprep.subr.bf16.mxu0 0
    %2275 = vmatpush1.bf16.msra.mxu0 0
    %2276 = vmatprep.subr.bf16.mxu0 0
    %2277 = vmatpush1.bf16.msra.mxu0 0
    %2278 = vmatprep.subr.bf16.mxu0 0
    %2279 = vmatpush1.bf16.msra.mxu0 0
    %2280 = vmatprep.mubr.bf16.mxu0 0
    %2281 = vmatmul.mubr.bf16.gmra.mrb[0].mxu0 %v2246
    %v2282 = vpop.f32.mrb[0].mxu0
    %v2283 = vadd.f32 %v117, %v2282
    %v2284 = vpop.f32.mrb[0].mxu0
    %v2285 = vpop.f32.mrb[0].mxu0
    %v2286 = vpop.f32.mrb[0].mxu0
    %2287 = vdwg.mxu0
    %v2288 = vmax.f32 %v2283, 0.0
    %v2289 = vpack.c.bf16 %v2288, %v2288
    %v2291 = vsel %vm800, %v2289, 0
    %2293 = vmatprep.subr.bf16.mxu0 0
    %2294 = vmatpush1.bf16.msra.mxu0 %v97
    %2295 = vmatprep.subr.bf16.mxu0 0
    %2296 = vmatpush1.bf16.msra.mxu0 %v98
    %2297 = vmatprep.subr.bf16.mxu0 0
    %2298 = vmatpush1.bf16.msra.mxu0 %v99
    %2299 = vmatprep.subr.bf16.mxu0 0
    %2300 = vmatpush1.bf16.msra.mxu0 %v100
    %2301 = vmatprep.subr.bf16.mxu0 0
    %2302 = vmatpush1.bf16.msra.mxu0 0
    %2303 = vmatprep.subr.bf16.mxu0 0
    %2304 = vmatpush1.bf16.msra.mxu0 0
    %2305 = vmatprep.subr.bf16.mxu0 0
    %2306 = vmatpush1.bf16.msra.mxu0 0
    %2307 = vmatprep.subr.bf16.mxu0 0
    %2308 = vmatpush1.bf16.msra.mxu0 0
    %2309 = vmatprep.subr.bf16.mxu0 0
    %2310 = vmatpush1.bf16.msra.mxu0 0
    %2311 = vmatprep.subr.bf16.mxu0 0
    %2312 = vmatpush1.bf16.msra.mxu0 0
    %2313 = vmatprep.subr.bf16.mxu0 0
    %2314 = vmatpush1.bf16.msra.mxu0 0
    %2315 = vmatprep.subr.bf16.mxu0 0
    %2316 = vmatpush1.bf16.msra.mxu0 0
    %2317 = vmatprep.subr.bf16.mxu0 0
    %2318 = vmatpush1.bf16.msra.mxu0 0
    %2319 = vmatprep.subr.bf16.mxu0 0
    %2320 = vmatpush1.bf16.msra.mxu0 0
    %2321 = vmatprep.subr.bf16.mxu0 0
    %2322 = vmatpush1.bf16.msra.mxu0 0
    %2323 = vmatprep.subr.bf16.mxu0 0
    %2324 = vmatpush1.bf16.msra.mxu0 0
    %2325 = vmatprep.mubr.bf16.mxu0 0
    %2326 = vmatmul.mubr.bf16.gmra.mrb[0].mxu0 %v2291
    %v2327 = vpop.f32.mrb[0].mxu0
    %v2328 = vadd.f32 %v122, %v2327
    %v2329 = vpop.f32.mrb[0].mxu0
    %v2330 = vpop.f32.mrb[0].mxu0
    %v2331 = vpop.f32.mrb[0].mxu0
    %2332 = vdwg.mxu0
    %v2333 = vmax.f32 %v2328, 0.0
    %v2334 = vpack.c.bf16 %v2333, %v2333
    %v2336 = vsel %vm800, %v2334, 0
    %2338 = vmatprep.subr.bf16.mxu0 0
    %2339 = vmatpush1.bf16.msra.mxu0 %v109
    %2340 = vmatprep.subr.bf16.mxu0 0
    %2341 = vmatpush1.bf16.msra.mxu0 %v110
    %2342 = vmatprep.subr.bf16.mxu0 0
    %2343 = vmatpush1.bf16.msra.mxu0 %v111
    %2344 = vmatprep.subr.bf16.mxu0 0
    %2345 = vmatpush1.bf16.msra.mxu0 %v112
    %2346 = vmatprep.subr.bf16.mxu0 0
    %2347 = vmatpush1.bf16.msra.mxu0 0
    %2348 = vmatprep.subr.bf16.mxu0 0
    %2349 = vmatpush1.bf16.msra.mxu0 0
    %2350 = vmatprep.subr.bf16.mxu0 0
    %2351 = vmatpush1.bf16.msra.mxu0 0
    %2352 = vmatprep.subr.bf16.mxu0 0
    %2353 = vmatpush1.bf16.msra.mxu0 0
    %2354 = vmatprep.subr.bf16.mxu0 0
    %2355 = vmatpush1.bf16.msra.mxu0 0
    %2356 = vmatprep.subr.bf16.mxu0 0
    %2357 = vmatpush1.bf16.msra.mxu0 0
    %2358 = vmatprep.subr.bf16.mxu0 0
    %2359 = vmatpush1.bf16.msra.mxu0 0
    %2360 = vmatprep.subr.bf16.mxu0 0
    %2361 = vmatpush1.bf16.msra.mxu0 0
    %2362 = vmatprep.subr.bf16.mxu0 0
    %2363 = vmatpush1.bf16.msra.mxu0 0
    %2364 = vmatprep.subr.bf16.mxu0 0
    %2365 = vmatpush1.bf16.msra.mxu0 0
    %2366 = vmatprep.subr.bf16.mxu0 0
    %2367 = vmatpush1.bf16.msra.mxu0 0
    %2368 = vmatprep.subr.bf16.mxu0 0
    %2369 = vmatpush1.bf16.msra.mxu0 0
    %2370 = vmatprep.mubr.bf16.mxu0 0
    %2371 = vmatmul.mubr.bf16.gmra.mrb[0].mxu0 %v2336
    %v2372 = vpop.f32.mrb[0].mxu0
    %v2373 = vadd.f32 %v127, %v2372
    %v2374 = vpop.f32.mrb[0].mxu0
    %v2375 = vpop.f32.mrb[0].mxu0
    %v2376 = vpop.f32.mrb[0].mxu0
    %2377 = vdwg.mxu0
    %vm2378 = vcmp.gt.f32.partialorder %v2373, 20.0
    %v2379 = vmin.f32 %v2373, 20.0
    %v2380 = vmul.f32 %v2379, 1.442695
    %v2381 = vpow.pop %v2380
    %v2382 = vadd.f32 %v2381, 1.0
    %v2383 = vlog2.pop %v2382
    %v2384 = vmul.f32 %v2383, 0.6931472
    %v2385 = vsel %vm2378, %v2373, %v2384
    %2387 = vrot.lane.b32.xlu0 %v2385, 112
    %v2388 = vpop.permute.xlu0 %2387
    %v2390 = vmul.f32 %v266, %v2388
    %v2391 = vadd.f32 %v2390, %v2373
    %v2392 = vpack.c.bf16 %v2391, %v2391
    %v2394 = vsel %vm904, %v2392, 0
    %2396 = vmatprep.subr.bf16.mxu0 0
    %2397 = vmatpush1.bf16.msra.mxu0 %v130
    %2398 = vmatprep.subr.bf16.mxu0 0
    %2399 = vmatpush1.bf16.msra.mxu0 0
    %2400 = vmatprep.subr.bf16.mxu0 0
    %2401 = vmatpush1.bf16.msra.mxu0 0
    %2402 = vmatprep.subr.bf16.mxu0 0
    %2403 = vmatpush1.bf16.msra.mxu0 0
    %2404 = vmatprep.subr.bf16.mxu0 0
    %2405 = vmatpush1.bf16.msra.mxu0 0
    %2406 = vmatprep.subr.bf16.mxu0 0
    %2407 = vmatpush1.bf16.msra.mxu0 0
    %2408 = vmatprep.subr.bf16.mxu0 0
    %2409 = vmatpush1.bf16.msra.mxu0 0
    %2410 = vmatprep.subr.bf16.mxu0 0
    %2411 = vmatpush1.bf16.msra.mxu0 0
    %2412 = vmatprep.subr.bf16.mxu0 0
    %2413 = vmatpush1.bf16.msra.mxu0 0
    %2414 = vmatprep.subr.bf16.mxu0 0
    %2415 = vmatpush1.bf16.msra.mxu0 0
    %2416 = vmatprep.subr.bf16.mxu0 0
    %2417 = vmatpush1.bf16.msra.mxu0 0
    %2418 = vmatprep.subr.bf16.mxu0 0
    %2419 = vmatpush1.bf16.msra.mxu0 0
    %2420 = vmatprep.subr.bf16.mxu0 0
    %2421 = vmatpush1.bf16.msra.mxu0 0
    %2422 = vmatprep.subr.bf16.mxu0 0
    %2423 = vmatpush1.bf16.msra.mxu0 0
    %2424 = vmatprep.subr.bf16.mxu0 0
    %2425 = vmatpush1.bf16.msra.mxu0 0
    %2426 = vmatprep.subr.bf16.mxu0 0
    %2427 = vmatpush1.bf16.msra.mxu0 0
    %2428 = vmatprep.mubr.bf16.mxu0 0
    %2429 = vmatmul.mubr.bf16.gmra.mrb[0].mxu0 %v2394
    %v2430 = vpop.f32.mrb[0].mxu0
    %v2431 = vadd.f32 %v153, %v2430
    %v2432 = vpop.f32.mrb[0].mxu0
    %v2433 = vpop.f32.mrb[0].mxu0
    %v2434 = vpop.f32.mrb[0].mxu0
    %2435 = vdwg.mxu0
    %v2436 = vmax.f32 %v2431, 0.0
    %v2437 = vpack.c.bf16 %v2436, %v2436
    %v2439 = vsel %vm360, %v2437, 0
    %2441 = vmatprep.subr.bf16.mxu0 0
    %2442 = vmatpush1.bf16.msra.mxu0 %v135
    %2443 = vmatprep.subr.bf16.mxu0 0
    %2444 = vmatpush1.bf16.msra.mxu0 %v136
    %2445 = vmatprep.subr.bf16.mxu0 0
    %2446 = vmatpush1.bf16.msra.mxu0 0
    %2447 = vmatprep.subr.bf16.mxu0 0
    %2448 = vmatpush1.bf16.msra.mxu0 0
    %2449 = vmatprep.subr.bf16.mxu0 0
    %2450 = vmatpush1.bf16.msra.mxu0 0
    %2451 = vmatprep.subr.bf16.mxu0 0
    %2452 = vmatpush1.bf16.msra.mxu0 0
    %2453 = vmatprep.subr.bf16.mxu0 0
    %2454 = vmatpush1.bf16.msra.mxu0 0
    %2455 = vmatprep.subr.bf16.mxu0 0
    %2456 = vmatpush1.bf16.msra.mxu0 0
    %2457 = vmatprep.subr.bf16.mxu0 0
    %2458 = vmatpush1.bf16.msra.mxu0 0
    %2459 = vmatprep.subr.bf16.mxu0 0
    %2460 = vmatpush1.bf16.msra.mxu0 0
    %2461 = vmatprep.subr.bf16.mxu0 0
    %2462 = vmatpush1.bf16.msra.mxu0 0
    %2463 = vmatprep.subr.bf16.mxu0 0
    %2464 = vmatpush1.bf16.msra.mxu0 0
    %2465 = vmatprep.subr.bf16.mxu0 0
    %2466 = vmatpush1.bf16.msra.mxu0 0
    %2467 = vmatprep.subr.bf16.mxu0 0
    %2468 = vmatpush1.bf16.msra.mxu0 0
    %2469 = vmatprep.subr.bf16.mxu0 0
    %2470 = vmatpush1.bf16.msra.mxu0 0
    %2471 = vmatprep.subr.bf16.mxu0 0
    %2472 = vmatpush1.bf16.msra.mxu0 0
    %2473 = vmatprep.mubr.bf16.mxu0 0
    %2474 = vmatmul.mubr.bf16.gmra.mrb[0].mxu0 %v2439
    %v2475 = vpop.f32.mrb[0].mxu0
    %v2476 = vadd.f32 %v158, %v2475
    %v2477 = vpop.f32.mrb[0].mxu0
    %v2478 = vpop.f32.mrb[0].mxu0
    %v2479 = vpop.f32.mrb[0].mxu0
    %2480 = vdwg.mxu0
    %v2481 = vmax.f32 %v2476, 0.0
    %v2482 = vpack.c.bf16 %v2481, %v2481
    %v2484 = vsel %vm360, %v2482, 0
    %2486 = vmatprep.subr.bf16.mxu0 0
    %2487 = vmatpush1.bf16.msra.mxu0 %v141
    %2488 = vmatprep.subr.bf16.mxu0 0
    %2489 = vmatpush1.bf16.msra.mxu0 %v142
    %2490 = vmatprep.subr.bf16.mxu0 0
    %2491 = vmatpush1.bf16.msra.mxu0 0
    %2492 = vmatprep.subr.bf16.mxu0 0
    %2493 = vmatpush1.bf16.msra.mxu0 0
    %2494 = vmatprep.subr.bf16.mxu0 0
    %2495 = vmatpush1.bf16.msra.mxu0 0
    %2496 = vmatprep.subr.bf16.mxu0 0
    %2497 = vmatpush1.bf16.msra.mxu0 0
    %2498 = vmatprep.subr.bf16.mxu0 0
    %2499 = vmatpush1.bf16.msra.mxu0 0
    %2500 = vmatprep.subr.bf16.mxu0 0
    %2501 = vmatpush1.bf16.msra.mxu0 0
    %2502 = vmatprep.subr.bf16.mxu0 0
    %2503 = vmatpush1.bf16.msra.mxu0 0
    %2504 = vmatprep.subr.bf16.mxu0 0
    %2505 = vmatpush1.bf16.msra.mxu0 0
    %2506 = vmatprep.subr.bf16.mxu0 0
    %2507 = vmatpush1.bf16.msra.mxu0 0
    %2508 = vmatprep.subr.bf16.mxu0 0
    %2509 = vmatpush1.bf16.msra.mxu0 0
    %2510 = vmatprep.subr.bf16.mxu0 0
    %2511 = vmatpush1.bf16.msra.mxu0 0
    %2512 = vmatprep.subr.bf16.mxu0 0
    %2513 = vmatpush1.bf16.msra.mxu0 0
    %2514 = vmatprep.subr.bf16.mxu0 0
    %2515 = vmatpush1.bf16.msra.mxu0 0
    %2516 = vmatprep.subr.bf16.mxu0 0
    %2517 = vmatpush1.bf16.msra.mxu0 0
    %2518 = vmatprep.mubr.bf16.mxu0 0
    %2519 = vmatmul.mubr.bf16.gmra.mrb[0].mxu0 %v2484
    %v2520 = vpop.f32.mrb[0].mxu0
    %v2521 = vadd.f32 %v163, %v2520
    %v2522 = vpop.f32.mrb[0].mxu0
    %v2523 = vpop.f32.mrb[0].mxu0
    %v2524 = vpop.f32.mrb[0].mxu0
    %2525 = vdwg.mxu0
    %v2526 = vmax.f32 %v2521, 0.0
    %v2527 = vpack.c.bf16 %v2526, %v2526
    %v2529 = vsel %vm360, %v2527, 0
    %2531 = vmatprep.subr.bf16.mxu0 0
    %2532 = vmatpush1.bf16.msra.mxu0 %v147
    %2533 = vmatprep.subr.bf16.mxu0 0
    %2534 = vmatpush1.bf16.msra.mxu0 %v148
    %2535 = vmatprep.subr.bf16.mxu0 0
    %2536 = vmatpush1.bf16.msra.mxu0 0
    %2537 = vmatprep.subr.bf16.mxu0 0
    %2538 = vmatpush1.bf16.msra.mxu0 0
    %2539 = vmatprep.subr.bf16.mxu0 0
    %2540 = vmatpush1.bf16.msra.mxu0 0
    %2541 = vmatprep.subr.bf16.mxu0 0
    %2542 = vmatpush1.bf16.msra.mxu0 0
    %2543 = vmatprep.subr.bf16.mxu0 0
    %2544 = vmatpush1.bf16.msra.mxu0 0
    %2545 = vmatprep.subr.bf16.mxu0 0
    %2546 = vmatpush1.bf16.msra.mxu0 0
    %2547 = vmatprep.subr.bf16.mxu0 0
    %2548 = vmatpush1.bf16.msra.mxu0 0
    %2549 = vmatprep.subr.bf16.mxu0 0
    %2550 = vmatpush1.bf16.msra.mxu0 0
    %2551 = vmatprep.subr.bf16.mxu0 0
    %2552 = vmatpush1.bf16.msra.mxu0 0
    %2553 = vmatprep.subr.bf16.mxu0 0
    %2554 = vmatpush1.bf16.msra.mxu0 0
    %2555 = vmatprep.subr.bf16.mxu0 0
    %2556 = vmatpush1.bf16.msra.mxu0 0
    %2557 = vmatprep.subr.bf16.mxu0 0
    %2558 = vmatpush1.bf16.msra.mxu0 0
    %2559 = vmatprep.subr.bf16.mxu0 0
    %2560 = vmatpush1.bf16.msra.mxu0 0
    %2561 = vmatprep.subr.bf16.mxu0 0
    %2562 = vmatpush1.bf16.msra.mxu0 0
    %2563 = vmatprep.mubr.bf16.mxu0 0
    %2564 = vmatmul.mubr.bf16.gmra.mrb[0].mxu0 %v2529
    %v2565 = vpop.f32.mrb[0].mxu0
    %v2566 = vadd.f32 %v168, %v2565
    %v2567 = vpop.f32.mrb[0].mxu0
    %v2568 = vpop.f32.mrb[0].mxu0
    %v2569 = vpop.f32.mrb[0].mxu0
    %2570 = vdwg.mxu0
    %v2571 = vmax.f32 %v2566, 0.0
    %v2572 = vpack.c.bf16 %v2571, %v2571
    %v2574 = vsel %vm360, %v2572, 0
    %2576 = vmatprep.subr.bf16.mxu0 0
    %2577 = vmatpush1.bf16.msra.mxu0 %v173
    %2578 = vmatprep.subr.bf16.mxu0 0
    %2579 = vmatpush1.bf16.msra.mxu0 %v174
    %2580 = vmatprep.subr.bf16.mxu0 0
    %2581 = vmatpush1.bf16.msra.mxu0 0
    %2582 = vmatprep.subr.bf16.mxu0 0
    %2583 = vmatpush1.bf16.msra.mxu0 0
    %2584 = vmatprep.subr.bf16.mxu0 0
    %2585 = vmatpush1.bf16.msra.mxu0 0
    %2586 = vmatprep.subr.bf16.mxu0 0
    %2587 = vmatpush1.bf16.msra.mxu0 0
    %2588 = vmatprep.subr.bf16.mxu0 0
    %2589 = vmatpush1.bf16.msra.mxu0 0
    %2590 = vmatprep.subr.bf16.mxu0 0
    %2591 = vmatpush1.bf16.msra.mxu0 0
    %2592 = vmatprep.subr.bf16.mxu0 0
    %2593 = vmatpush1.bf16.msra.mxu0 0
    %2594 = vmatprep.subr.bf16.mxu0 0
    %2595 = vmatpush1.bf16.msra.mxu0 0
    %2596 = vmatprep.subr.bf16.mxu0 0
    %2597 = vmatpush1.bf16.msra.mxu0 0
    %2598 = vmatprep.subr.bf16.mxu0 0
    %2599 = vmatpush1.bf16.msra.mxu0 0
    %2600 = vmatprep.subr.bf16.mxu0 0
    %2601 = vmatpush1.bf16.msra.mxu0 0
    %2602 = vmatprep.subr.bf16.mxu0 0
    %2603 = vmatpush1.bf16.msra.mxu0 0
    %2604 = vmatprep.subr.bf16.mxu0 0
    %2605 = vmatpush1.bf16.msra.mxu0 0
    %2606 = vmatprep.subr.bf16.mxu0 0
    %2607 = vmatpush1.bf16.msra.mxu0 0
    %2608 = vmatprep.mubr.bf16.mxu0 0
    %2609 = vmatmul.mubr.bf16.gmra.mrb[0].mxu0 %v2574
    %v2610 = vpop.f32.mrb[0].mxu0
    %v2611 = vadd.f32 0.0, %v2610
    %v2612 = vpop.f32.mrb[0].mxu0
    %v2613 = vpop.f32.mrb[0].mxu0
    %v2614 = vpop.f32.mrb[0].mxu0
    %2615 = vdwg.mxu0
    %2617 = vrot.lane.b32.xlu0 %v2611, 32
    %v2618 = vpop.permute.xlu0 %2617
    %v2620 = vadd.f32 %v653, %v2618
    %v2621 = vadd.f32 %v2620, %v2192
    %v2622 = vsub.f32 0.0, %v2621
    %v2623 = vmul.f32 %v2622, 1.442695
    %v2624 = vpow.pop %v2623
    %v2625 = vadd.f32 %v2624, 1.0
    %v2626 = vrcp.pop %v2625
    %2628 = vrot.lane.b32.xlu0 %v2192, 64
    %v2629 = vpop.permute.xlu0 %2628
    %v2631 = vmul.f32 %v2626, %v2629
    %2633 = vrot.lane.b32.xlu0 %v2631, 64
    %v2634 = vpop.permute.xlu0 %2633
    %v2636 = vadd.f32 %v2620, %v2634
    %v2637 = vtanh.pop %v2636
    %v2638 = vsub.f32 1.0, %v2626
    %2640 = vrot.lane.b32.xlu0 %v2637, 96
    %v2641 = vpop.permute.xlu0 %2640
    %v2643 = vmul.f32 %v2638, %v2641
    %v2644 = vmul.f32 %v2626, %v2149
    %v2645 = vadd.f32 %v2643, %v2644
    %v2646 = vpack.c.bf16 %v2645, %v2645
    %2648 = vrot.lane.b32.xlu0 %v2646, 64
    %v2649 = vpop.permute.xlu0 %2648
    %v2651 = vsel %vm360, %v2649, 0
    %2653 = vmatprep.subr.bf16.mxu0 0
    %2654 = vmatpush1.bf16.msra.mxu0 %v65
    %2655 = vmatprep.subr.bf16.mxu0 0
    %2656 = vmatpush1.bf16.msra.mxu0 %v66
    %2657 = vmatprep.subr.bf16.mxu0 0
    %2658 = vmatpush1.bf16.msra.mxu0 0
    %2659 = vmatprep.subr.bf16.mxu0 0
    %2660 = vmatpush1.bf16.msra.mxu0 0
    %2661 = vmatprep.subr.bf16.mxu0 0
    %2662 = vmatpush1.bf16.msra.mxu0 0
    %2663 = vmatprep.subr.bf16.mxu0 0
    %2664 = vmatpush1.bf16.msra.mxu0 0
    %2665 = vmatprep.subr.bf16.mxu0 0
    %2666 = vmatpush1.bf16.msra.mxu0 0
    %2667 = vmatprep.subr.bf16.mxu0 0
    %2668 = vmatpush1.bf16.msra.mxu0 0
    %2669 = vmatprep.subr.bf16.mxu0 0
    %2670 = vmatpush1.bf16.msra.mxu0 0
    %2671 = vmatprep.subr.bf16.mxu0 0
    %2672 = vmatpush1.bf16.msra.mxu0 0
    %2673 = vmatprep.subr.bf16.mxu0 0
    %2674 = vmatpush1.bf16.msra.mxu0 0
    %2675 = vmatprep.subr.bf16.mxu0 0
    %2676 = vmatpush1.bf16.msra.mxu0 0
    %2677 = vmatprep.subr.bf16.mxu0 0
    %2678 = vmatpush1.bf16.msra.mxu0 0
    %2679 = vmatprep.subr.bf16.mxu0 0
    %2680 = vmatpush1.bf16.msra.mxu0 0
    %2681 = vmatprep.subr.bf16.mxu0 0
    %2682 = vmatpush1.bf16.msra.mxu0 0
    %2683 = vmatprep.subr.bf16.mxu0 0
    %2684 = vmatpush1.bf16.msra.mxu0 0
    %2685 = vmatprep.mubr.bf16.mxu0 0
    %2686 = vmatmul.mubr.bf16.gmra.mrb[0].mxu0 %v2651
    %v2687 = vpop.f32.mrb[0].mxu0
    %v2688 = vadd.f32 %v71, %v2687
    %v2689 = vpop.f32.mrb[0].mxu0
    %v2690 = vpop.f32.mrb[0].mxu0
    %v2691 = vpop.f32.mrb[0].mxu0
    %2692 = vdwg.mxu0
    %v2693 = vadd.f32 %v658, %v2688
    %v2694 = vmax.f32 %v2693, 0.0
    %v2695 = vpack.c.bf16 %v2694, %v2694
    %v2697 = vsel %vm360, %v2695, 0
    %2699 = vmatprep.subr.bf16.mxu0 0
    %2700 = vmatpush1.bf16.msra.mxu0 %v76
    %2701 = vmatprep.subr.bf16.mxu0 0
    %2702 = vmatpush1.bf16.msra.mxu0 %v77
    %2703 = vmatprep.subr.bf16.mxu0 0
    %2704 = vmatpush1.bf16.msra.mxu0 0
    %2705 = vmatprep.subr.bf16.mxu0 0
    %2706 = vmatpush1.bf16.msra.mxu0 0
    %2707 = vmatprep.subr.bf16.mxu0 0
    %2708 = vmatpush1.bf16.msra.mxu0 0
    %2709 = vmatprep.subr.bf16.mxu0 0
    %2710 = vmatpush1.bf16.msra.mxu0 0
    %2711 = vmatprep.subr.bf16.mxu0 0
    %2712 = vmatpush1.bf16.msra.mxu0 0
    %2713 = vmatprep.subr.bf16.mxu0 0
    %2714 = vmatpush1.bf16.msra.mxu0 0
    %2715 = vmatprep.subr.bf16.mxu0 0
    %2716 = vmatpush1.bf16.msra.mxu0 0
    %2717 = vmatprep.subr.bf16.mxu0 0
    %2718 = vmatpush1.bf16.msra.mxu0 0
    %2719 = vmatprep.subr.bf16.mxu0 0
    %2720 = vmatpush1.bf16.msra.mxu0 0
    %2721 = vmatprep.subr.bf16.mxu0 0
    %2722 = vmatpush1.bf16.msra.mxu0 0
    %2723 = vmatprep.subr.bf16.mxu0 0
    %2724 = vmatpush1.bf16.msra.mxu0 0
    %2725 = vmatprep.subr.bf16.mxu0 0
    %2726 = vmatpush1.bf16.msra.mxu0 0
    %2727 = vmatprep.subr.bf16.mxu0 0
    %2728 = vmatpush1.bf16.msra.mxu0 0
    %2729 = vmatprep.subr.bf16.mxu0 0
    %2730 = vmatpush1.bf16.msra.mxu0 0
    %2731 = vmatprep.mubr.bf16.mxu0 0
    %2732 = vmatmul.mubr.bf16.gmra.mrb[0].mxu0 %v2697
    %v2733 = vpop.f32.mrb[0].mxu0
    %v2734 = vadd.f32 %v82, %v2733
    %v2735 = vpop.f32.mrb[0].mxu0
    %v2736 = vpop.f32.mrb[0].mxu0
    %v2737 = vpop.f32.mrb[0].mxu0
    %2738 = vdwg.mxu0
    %v2739 = vmax.f32 %v2734, 0.0
    %v2740 = vpack.c.bf16 %v2739, %v2739
    %v2742 = vsel %vm360, %v2740, 0
    %2744 = vmatprep.subr.bf16.mxu0 0
    %2745 = vmatpush1.bf16.msra.mxu0 %v87
    %2746 = vmatprep.subr.bf16.mxu0 0
    %2747 = vmatpush1.bf16.msra.mxu0 %v88
    %2748 = vmatprep.subr.bf16.mxu0 0
    %2749 = vmatpush1.bf16.msra.mxu0 0
    %2750 = vmatprep.subr.bf16.mxu0 0
    %2751 = vmatpush1.bf16.msra.mxu0 0
    %2752 = vmatprep.subr.bf16.mxu0 0
    %2753 = vmatpush1.bf16.msra.mxu0 0
    %2754 = vmatprep.subr.bf16.mxu0 0
    %2755 = vmatpush1.bf16.msra.mxu0 0
    %2756 = vmatprep.subr.bf16.mxu0 0
    %2757 = vmatpush1.bf16.msra.mxu0 0
    %2758 = vmatprep.subr.bf16.mxu0 0
    %2759 = vmatpush1.bf16.msra.mxu0 0
    %2760 = vmatprep.subr.bf16.mxu0 0
    %2761 = vmatpush1.bf16.msra.mxu0 0
    %2762 = vmatprep.subr.bf16.mxu0 0
    %2763 = vmatpush1.bf16.msra.mxu0 0
    %2764 = vmatprep.subr.bf16.mxu0 0
    %2765 = vmatpush1.bf16.msra.mxu0 0
    %2766 = vmatprep.subr.bf16.mxu0 0
    %2767 = vmatpush1.bf16.msra.mxu0 0
    %2768 = vmatprep.subr.bf16.mxu0 0
    %2769 = vmatpush1.bf16.msra.mxu0 0
    %2770 = vmatprep.subr.bf16.mxu0 0
    %2771 = vmatpush1.bf16.msra.mxu0 0
    %2772 = vmatprep.subr.bf16.mxu0 0
    %2773 = vmatpush1.bf16.msra.mxu0 0
    %2774 = vmatprep.subr.bf16.mxu0 0
    %2775 = vmatpush1.bf16.msra.mxu0 0
    %2776 = vmatprep.mubr.bf16.mxu0 0
    %2777 = vmatmul.mubr.bf16.gmra.mrb[0].mxu0 %v2742
    %v2778 = vpop.f32.mrb[0].mxu0
    %v2779 = vadd.f32 %v117, %v2778
    %v2780 = vpop.f32.mrb[0].mxu0
    %v2781 = vpop.f32.mrb[0].mxu0
    %v2782 = vpop.f32.mrb[0].mxu0
    %2783 = vdwg.mxu0
    %v2784 = vmax.f32 %v2779, 0.0
    %v2785 = vpack.c.bf16 %v2784, %v2784
    %v2787 = vsel %vm800, %v2785, 0
    %2789 = vmatprep.subr.bf16.mxu0 0
    %2790 = vmatpush1.bf16.msra.mxu0 %v97
    %2791 = vmatprep.subr.bf16.mxu0 0
    %2792 = vmatpush1.bf16.msra.mxu0 %v98
    %2793 = vmatprep.subr.bf16.mxu0 0
    %2794 = vmatpush1.bf16.msra.mxu0 %v99
    %2795 = vmatprep.subr.bf16.mxu0 0
    %2796 = vmatpush1.bf16.msra.mxu0 %v100
    %2797 = vmatprep.subr.bf16.mxu0 0
    %2798 = vmatpush1.bf16.msra.mxu0 0
    %2799 = vmatprep.subr.bf16.mxu0 0
    %2800 = vmatpush1.bf16.msra.mxu0 0
    %2801 = vmatprep.subr.bf16.mxu0 0
    %2802 = vmatpush1.bf16.msra.mxu0 0
    %2803 = vmatprep.subr.bf16.mxu0 0
    %2804 = vmatpush1.bf16.msra.mxu0 0
    %2805 = vmatprep.subr.bf16.mxu0 0
    %2806 = vmatpush1.bf16.msra.mxu0 0
    %2807 = vmatprep.subr.bf16.mxu0 0
    %2808 = vmatpush1.bf16.msra.mxu0 0
    %2809 = vmatprep.subr.bf16.mxu0 0
    %2810 = vmatpush1.bf16.msra.mxu0 0
    %2811 = vmatprep.subr.bf16.mxu0 0
    %2812 = vmatpush1.bf16.msra.mxu0 0
    %2813 = vmatprep.subr.bf16.mxu0 0
    %2814 = vmatpush1.bf16.msra.mxu0 0
    %2815 = vmatprep.subr.bf16.mxu0 0
    %2816 = vmatpush1.bf16.msra.mxu0 0
    %2817 = vmatprep.subr.bf16.mxu0 0
    %2818 = vmatpush1.bf16.msra.mxu0 0
    %2819 = vmatprep.subr.bf16.mxu0 0
    %2820 = vmatpush1.bf16.msra.mxu0 0
    %2821 = vmatprep.mubr.bf16.mxu0 0
    %2822 = vmatmul.mubr.bf16.gmra.mrb[0].mxu0 %v2787
    %v2823 = vpop.f32.mrb[0].mxu0
    %v2824 = vadd.f32 %v122, %v2823
    %v2825 = vpop.f32.mrb[0].mxu0
    %v2826 = vpop.f32.mrb[0].mxu0
    %v2827 = vpop.f32.mrb[0].mxu0
    %2828 = vdwg.mxu0
    %v2829 = vmax.f32 %v2824, 0.0
    %v2830 = vpack.c.bf16 %v2829, %v2829
    %v2832 = vsel %vm800, %v2830, 0
    %2834 = vmatprep.subr.bf16.mxu0 0
    %2835 = vmatpush1.bf16.msra.mxu0 %v109
    %2836 = vmatprep.subr.bf16.mxu0 0
    %2837 = vmatpush1.bf16.msra.mxu0 %v110
    %2838 = vmatprep.subr.bf16.mxu0 0
    %2839 = vmatpush1.bf16.msra.mxu0 %v111
    %2840 = vmatprep.subr.bf16.mxu0 0
    %2841 = vmatpush1.bf16.msra.mxu0 %v112
    %2842 = vmatprep.subr.bf16.mxu0 0
    %2843 = vmatpush1.bf16.msra.mxu0 0
    %2844 = vmatprep.subr.bf16.mxu0 0
    %2845 = vmatpush1.bf16.msra.mxu0 0
    %2846 = vmatprep.subr.bf16.mxu0 0
    %2847 = vmatpush1.bf16.msra.mxu0 0
    %2848 = vmatprep.subr.bf16.mxu0 0
    %2849 = vmatpush1.bf16.msra.mxu0 0
    %2850 = vmatprep.subr.bf16.mxu0 0
    %2851 = vmatpush1.bf16.msra.mxu0 0
    %2852 = vmatprep.subr.bf16.mxu0 0
    %2853 = vmatpush1.bf16.msra.mxu0 0
    %2854 = vmatprep.subr.bf16.mxu0 0
    %2855 = vmatpush1.bf16.msra.mxu0 0
    %2856 = vmatprep.subr.bf16.mxu0 0
    %2857 = vmatpush1.bf16.msra.mxu0 0
    %2858 = vmatprep.subr.bf16.mxu0 0
    %2859 = vmatpush1.bf16.msra.mxu0 0
    %2860 = vmatprep.subr.bf16.mxu0 0
    %2861 = vmatpush1.bf16.msra.mxu0 0
    %2862 = vmatprep.subr.bf16.mxu0 0
    %2863 = vmatpush1.bf16.msra.mxu0 0
    %2864 = vmatprep.subr.bf16.mxu0 0
    %2865 = vmatpush1.bf16.msra.mxu0 0
    %2866 = vmatprep.mubr.bf16.mxu0 0
    %2867 = vmatmul.mubr.bf16.gmra.mrb[0].mxu0 %v2832
    %v2868 = vpop.f32.mrb[0].mxu0
    %v2869 = vadd.f32 %v127, %v2868
    %v2870 = vpop.f32.mrb[0].mxu0
    %v2871 = vpop.f32.mrb[0].mxu0
    %v2872 = vpop.f32.mrb[0].mxu0
    %2873 = vdwg.mxu0
    %vm2874 = vcmp.gt.f32.partialorder %v2869, 20.0
    %v2875 = vmin.f32 %v2869, 20.0
    %v2876 = vmul.f32 %v2875, 1.442695
    %v2877 = vpow.pop %v2876
    %v2878 = vadd.f32 %v2877, 1.0
    %v2879 = vlog2.pop %v2878
    %v2880 = vmul.f32 %v2879, 0.6931472
    %v2881 = vsel %vm2874, %v2869, %v2880
    %2883 = vrot.lane.b32.xlu0 %v2881, 112
    %v2884 = vpop.permute.xlu0 %2883
    %v2886 = vmul.f32 %v267, %v2884
    %v2887 = vadd.f32 %v2886, %v2869
    %v2888 = vpack.c.bf16 %v2887, %v2887
    %v2890 = vsel %vm904, %v2888, 0
    %2892 = vmatprep.subr.bf16.mxu0 0
    %2893 = vmatpush1.bf16.msra.mxu0 %v130
    %2894 = vmatprep.subr.bf16.mxu0 0
    %2895 = vmatpush1.bf16.msra.mxu0 0
    %2896 = vmatprep.subr.bf16.mxu0 0
    %2897 = vmatpush1.bf16.msra.mxu0 0
    %2898 = vmatprep.subr.bf16.mxu0 0
    %2899 = vmatpush1.bf16.msra.mxu0 0
    %2900 = vmatprep.subr.bf16.mxu0 0
    %2901 = vmatpush1.bf16.msra.mxu0 0
    %2902 = vmatprep.subr.bf16.mxu0 0
    %2903 = vmatpush1.bf16.msra.mxu0 0
    %2904 = vmatprep.subr.bf16.mxu0 0
    %2905 = vmatpush1.bf16.msra.mxu0 0
    %2906 = vmatprep.subr.bf16.mxu0 0
    %2907 = vmatpush1.bf16.msra.mxu0 0
    %2908 = vmatprep.subr.bf16.mxu0 0
    %2909 = vmatpush1.bf16.msra.mxu0 0
    %2910 = vmatprep.subr.bf16.mxu0 0
    %2911 = vmatpush1.bf16.msra.mxu0 0
    %2912 = vmatprep.subr.bf16.mxu0 0
    %2913 = vmatpush1.bf16.msra.mxu0 0
    %2914 = vmatprep.subr.bf16.mxu0 0
    %2915 = vmatpush1.bf16.msra.mxu0 0
    %2916 = vmatprep.subr.bf16.mxu0 0
    %2917 = vmatpush1.bf16.msra.mxu0 0
    %2918 = vmatprep.subr.bf16.mxu0 0
    %2919 = vmatpush1.bf16.msra.mxu0 0
    %2920 = vmatprep.subr.bf16.mxu0 0
    %2921 = vmatpush1.bf16.msra.mxu0 0
    %2922 = vmatprep.subr.bf16.mxu0 0
    %2923 = vmatpush1.bf16.msra.mxu0 0
    %2924 = vmatprep.mubr.bf16.mxu0 0
    %2925 = vmatmul.mubr.bf16.gmra.mrb[0].mxu0 %v2890
    %v2926 = vpop.f32.mrb[0].mxu0
    %v2927 = vadd.f32 %v153, %v2926
    %v2928 = vpop.f32.mrb[0].mxu0
    %v2929 = vpop.f32.mrb[0].mxu0
    %v2930 = vpop.f32.mrb[0].mxu0
    %2931 = vdwg.mxu0
    %v2932 = vmax.f32 %v2927, 0.0
    %v2933 = vpack.c.bf16 %v2932, %v2932
    %v2935 = vsel %vm360, %v2933, 0
    %2937 = vmatprep.subr.bf16.mxu0 0
    %2938 = vmatpush1.bf16.msra.mxu0 %v135
    %2939 = vmatprep.subr.bf16.mxu0 0
    %2940 = vmatpush1.bf16.msra.mxu0 %v136
    %2941 = vmatprep.subr.bf16.mxu0 0
    %2942 = vmatpush1.bf16.msra.mxu0 0
    %2943 = vmatprep.subr.bf16.mxu0 0
    %2944 = vmatpush1.bf16.msra.mxu0 0
    %2945 = vmatprep.subr.bf16.mxu0 0
    %2946 = vmatpush1.bf16.msra.mxu0 0
    %2947 = vmatprep.subr.bf16.mxu0 0
    %2948 = vmatpush1.bf16.msra.mxu0 0
    %2949 = vmatprep.subr.bf16.mxu0 0
    %2950 = vmatpush1.bf16.msra.mxu0 0
    %2951 = vmatprep.subr.bf16.mxu0 0
    %2952 = vmatpush1.bf16.msra.mxu0 0
    %2953 = vmatprep.subr.bf16.mxu0 0
    %2954 = vmatpush1.bf16.msra.mxu0 0
    %2955 = vmatprep.subr.bf16.mxu0 0
    %2956 = vmatpush1.bf16.msra.mxu0 0
    %2957 = vmatprep.subr.bf16.mxu0 0
    %2958 = vmatpush1.bf16.msra.mxu0 0
    %2959 = vmatprep.subr.bf16.mxu0 0
    %2960 = vmatpush1.bf16.msra.mxu0 0
    %2961 = vmatprep.subr.bf16.mxu0 0
    %2962 = vmatpush1.bf16.msra.mxu0 0
    %2963 = vmatprep.subr.bf16.mxu0 0
    %2964 = vmatpush1.bf16.msra.mxu0 0
    %2965 = vmatprep.subr.bf16.mxu0 0
    %2966 = vmatpush1.bf16.msra.mxu0 0
    %2967 = vmatprep.subr.bf16.mxu0 0
    %2968 = vmatpush1.bf16.msra.mxu0 0
    %2969 = vmatprep.mubr.bf16.mxu0 0
    %2970 = vmatmul.mubr.bf16.gmra.mrb[0].mxu0 %v2935
    %v2971 = vpop.f32.mrb[0].mxu0
    %v2972 = vadd.f32 %v158, %v2971
    %v2973 = vpop.f32.mrb[0].mxu0
    %v2974 = vpop.f32.mrb[0].mxu0
    %v2975 = vpop.f32.mrb[0].mxu0
    %2976 = vdwg.mxu0
    %v2977 = vmax.f32 %v2972, 0.0
    %v2978 = vpack.c.bf16 %v2977, %v2977
    %v2980 = vsel %vm360, %v2978, 0
    %2982 = vmatprep.subr.bf16.mxu0 0
    %2983 = vmatpush1.bf16.msra.mxu0 %v141
    %2984 = vmatprep.subr.bf16.mxu0 0
    %2985 = vmatpush1.bf16.msra.mxu0 %v142
    %2986 = vmatprep.subr.bf16.mxu0 0
    %2987 = vmatpush1.bf16.msra.mxu0 0
    %2988 = vmatprep.subr.bf16.mxu0 0
    %2989 = vmatpush1.bf16.msra.mxu0 0
    %2990 = vmatprep.subr.bf16.mxu0 0
    %2991 = vmatpush1.bf16.msra.mxu0 0
    %2992 = vmatprep.subr.bf16.mxu0 0
    %2993 = vmatpush1.bf16.msra.mxu0 0
    %2994 = vmatprep.subr.bf16.mxu0 0
    %2995 = vmatpush1.bf16.msra.mxu0 0
    %2996 = vmatprep.subr.bf16.mxu0 0
    %2997 = vmatpush1.bf16.msra.mxu0 0
    %2998 = vmatprep.subr.bf16.mxu0 0
    %2999 = vmatpush1.bf16.msra.mxu0 0
    %3000 = vmatprep.subr.bf16.mxu0 0
    %3001 = vmatpush1.bf16.msra.mxu0 0
    %3002 = vmatprep.subr.bf16.mxu0 0
    %3003 = vmatpush1.bf16.msra.mxu0 0
    %3004 = vmatprep.subr.bf16.mxu0 0
    %3005 = vmatpush1.bf16.msra.mxu0 0
    %3006 = vmatprep.subr.bf16.mxu0 0
    %3007 = vmatpush1.bf16.msra.mxu0 0
    %3008 = vmatprep.subr.bf16.mxu0 0
    %3009 = vmatpush1.bf16.msra.mxu0 0
    %3010 = vmatprep.subr.bf16.mxu0 0
    %3011 = vmatpush1.bf16.msra.mxu0 0
    %3012 = vmatprep.subr.bf16.mxu0 0
    %3013 = vmatpush1.bf16.msra.mxu0 0
    %3014 = vmatprep.mubr.bf16.mxu0 0
    %3015 = vmatmul.mubr.bf16.gmra.mrb[0].mxu0 %v2980
    %v3016 = vpop.f32.mrb[0].mxu0
    %v3017 = vadd.f32 %v163, %v3016
    %v3018 = vpop.f32.mrb[0].mxu0
    %v3019 = vpop.f32.mrb[0].mxu0
    %v3020 = vpop.f32.mrb[0].mxu0
    %3021 = vdwg.mxu0
    %v3022 = vmax.f32 %v3017, 0.0
    %v3023 = vpack.c.bf16 %v3022, %v3022
    %v3025 = vsel %vm360, %v3023, 0
    %3027 = vmatprep.subr.bf16.mxu0 0
    %3028 = vmatpush1.bf16.msra.mxu0 %v147
    %3029 = vmatprep.subr.bf16.mxu0 0
    %3030 = vmatpush1.bf16.msra.mxu0 %v148
    %3031 = vmatprep.subr.bf16.mxu0 0
    %3032 = vmatpush1.bf16.msra.mxu0 0
    %3033 = vmatprep.subr.bf16.mxu0 0
    %3034 = vmatpush1.bf16.msra.mxu0 0
    %3035 = vmatprep.subr.bf16.mxu0 0
    %3036 = vmatpush1.bf16.msra.mxu0 0
    %3037 = vmatprep.subr.bf16.mxu0 0
    %3038 = vmatpush1.bf16.msra.mxu0 0
    %3039 = vmatprep.subr.bf16.mxu0 0
    %3040 = vmatpush1.bf16.msra.mxu0 0
    %3041 = vmatprep.subr.bf16.mxu0 0
    %3042 = vmatpush1.bf16.msra.mxu0 0
    %3043 = vmatprep.subr.bf16.mxu0 0
    %3044 = vmatpush1.bf16.msra.mxu0 0
    %3045 = vmatprep.subr.bf16.mxu0 0
    %3046 = vmatpush1.bf16.msra.mxu0 0
    %3047 = vmatprep.subr.bf16.mxu0 0
    %3048 = vmatpush1.bf16.msra.mxu0 0
    %3049 = vmatprep.subr.bf16.mxu0 0
    %3050 = vmatpush1.bf16.msra.mxu0 0
    %3051 = vmatprep.subr.bf16.mxu0 0
    %3052 = vmatpush1.bf16.msra.mxu0 0
    %3053 = vmatprep.subr.bf16.mxu0 0
    %3054 = vmatpush1.bf16.msra.mxu0 0
    %3055 = vmatprep.subr.bf16.mxu0 0
    %3056 = vmatpush1.bf16.msra.mxu0 0
    %3057 = vmatprep.subr.bf16.mxu0 0
    %3058 = vmatpush1.bf16.msra.mxu0 0
    %3059 = vmatprep.mubr.bf16.mxu0 0
    %3060 = vmatmul.mubr.bf16.gmra.mrb[0].mxu0 %v3025
    %v3061 = vpop.f32.mrb[0].mxu0
    %v3062 = vadd.f32 %v168, %v3061
    %v3063 = vpop.f32.mrb[0].mxu0
    %v3064 = vpop.f32.mrb[0].mxu0
    %v3065 = vpop.f32.mrb[0].mxu0
    %3066 = vdwg.mxu0
    %v3067 = vmax.f32 %v3062, 0.0
    %v3068 = vpack.c.bf16 %v3067, %v3067
    %v3070 = vsel %vm360, %v3068, 0
    %3072 = vmatprep.subr.bf16.mxu0 0
    %3073 = vmatpush1.bf16.msra.mxu0 %v173
    %3074 = vmatprep.subr.bf16.mxu0 0
    %3075 = vmatpush1.bf16.msra.mxu0 %v174
    %3076 = vmatprep.subr.bf16.mxu0 0
    %3077 = vmatpush1.bf16.msra.mxu0 0
    %3078 = vmatprep.subr.bf16.mxu0 0
    %3079 = vmatpush1.bf16.msra.mxu0 0
    %3080 = vmatprep.subr.bf16.mxu0 0
    %3081 = vmatpush1.bf16.msra.mxu0 0
    %3082 = vmatprep.subr.bf16.mxu0 0
    %3083 = vmatpush1.bf16.msra.mxu0 0
    %3084 = vmatprep.subr.bf16.mxu0 0
    %3085 = vmatpush1.bf16.msra.mxu0 0
    %3086 = vmatprep.subr.bf16.mxu0 0
    %3087 = vmatpush1.bf16.msra.mxu0 0
    %3088 = vmatprep.subr.bf16.mxu0 0
    %3089 = vmatpush1.bf16.msra.mxu0 0
    %3090 = vmatprep.subr.bf16.mxu0 0
    %3091 = vmatpush1.bf16.msra.mxu0 0
    %3092 = vmatprep.subr.bf16.mxu0 0
    %3093 = vmatpush1.bf16.msra.mxu0 0
    %3094 = vmatprep.subr.bf16.mxu0 0
    %3095 = vmatpush1.bf16.msra.mxu0 0
    %3096 = vmatprep.subr.bf16.mxu0 0
    %3097 = vmatpush1.bf16.msra.mxu0 0
    %3098 = vmatprep.subr.bf16.mxu0 0
    %3099 = vmatpush1.bf16.msra.mxu0 0
    %3100 = vmatprep.subr.bf16.mxu0 0
    %3101 = vmatpush1.bf16.msra.mxu0 0
    %3102 = vmatprep.subr.bf16.mxu0 0
    %3103 = vmatpush1.bf16.msra.mxu0 0
    %3104 = vmatprep.mubr.bf16.mxu0 0
    %3105 = vmatmul.mubr.bf16.gmra.mrb[0].mxu0 %v3070
    %v3106 = vpop.f32.mrb[0].mxu0
    %v3107 = vadd.f32 0.0, %v3106
    %v3108 = vpop.f32.mrb[0].mxu0
    %v3109 = vpop.f32.mrb[0].mxu0
    %v3110 = vpop.f32.mrb[0].mxu0
    %3111 = vdwg.mxu0
    %3113 = vrot.lane.b32.xlu0 %v3107, 32
    %v3114 = vpop.permute.xlu0 %3113
    %v3116 = vadd.f32 %v658, %v3114
    %v3117 = vadd.f32 %v3116, %v2688
    %v3118 = vsub.f32 0.0, %v3117
    %v3119 = vmul.f32 %v3118, 1.442695
    %v3120 = vpow.pop %v3119
    %v3121 = vadd.f32 %v3120, 1.0
    %v3122 = vrcp.pop %v3121
    %3124 = vrot.lane.b32.xlu0 %v2688, 64
    %v3125 = vpop.permute.xlu0 %3124
    %v3127 = vmul.f32 %v3122, %v3125
    %3129 = vrot.lane.b32.xlu0 %v3127, 64
    %v3130 = vpop.permute.xlu0 %3129
    %v3132 = vadd.f32 %v3116, %v3130
    %v3133 = vtanh.pop %v3132
    %v3134 = vsub.f32 1.0, %v3122
    %3136 = vrot.lane.b32.xlu0 %v3133, 96
    %v3137 = vpop.permute.xlu0 %3136
    %v3139 = vmul.f32 %v3134, %v3137
    %v3140 = vmul.f32 %v3122, %v2645
    %v3141 = vadd.f32 %v3139, %v3140
    %v3142 = vpack.c.bf16 %v3141, %v3141
    %3144 = vrot.lane.b32.xlu0 %v3142, 64
    %v3145 = vpop.permute.xlu0 %3144
    %v3147 = vsel %vm360, %v3145, 0
    %3149 = vmatprep.subr.bf16.mxu0 0
    %3150 = vmatpush1.bf16.msra.mxu0 %v65
    %3151 = vmatprep.subr.bf16.mxu0 0
    %3152 = vmatpush1.bf16.msra.mxu0 %v66
    %3153 = vmatprep.subr.bf16.mxu0 0
    %3154 = vmatpush1.bf16.msra.mxu0 0
    %3155 = vmatprep.subr.bf16.mxu0 0
    %3156 = vmatpush1.bf16.msra.mxu0 0
    %3157 = vmatprep.subr.bf16.mxu0 0
    %3158 = vmatpush1.bf16.msra.mxu0 0
    %3159 = vmatprep.subr.bf16.mxu0 0
    %3160 = vmatpush1.bf16.msra.mxu0 0
    %3161 = vmatprep.subr.bf16.mxu0 0
    %3162 = vmatpush1.bf16.msra.mxu0 0
    %3163 = vmatprep.subr.bf16.mxu0 0
    %3164 = vmatpush1.bf16.msra.mxu0 0
    %3165 = vmatprep.subr.bf16.mxu0 0
    %3166 = vmatpush1.bf16.msra.mxu0 0
    %3167 = vmatprep.subr.bf16.mxu0 0
    %3168 = vmatpush1.bf16.msra.mxu0 0
    %3169 = vmatprep.subr.bf16.mxu0 0
    %3170 = vmatpush1.bf16.msra.mxu0 0
    %3171 = vmatprep.subr.bf16.mxu0 0
    %3172 = vmatpush1.bf16.msra.mxu0 0
    %3173 = vmatprep.subr.bf16.mxu0 0
    %3174 = vmatpush1.bf16.msra.mxu0 0
    %3175 = vmatprep.subr.bf16.mxu0 0
    %3176 = vmatpush1.bf16.msra.mxu0 0
    %3177 = vmatprep.subr.bf16.mxu0 0
    %3178 = vmatpush1.bf16.msra.mxu0 0
    %3179 = vmatprep.subr.bf16.mxu0 0
    %3180 = vmatpush1.bf16.msra.mxu0 0
    %3181 = vmatprep.mubr.bf16.mxu0 0
    %3182 = vmatmul.mubr.bf16.gmra.mrb[0].mxu0 %v3147
    %v3183 = vpop.f32.mrb[0].mxu0
    %v3184 = vadd.f32 %v71, %v3183
    %v3185 = vpop.f32.mrb[0].mxu0
    %v3186 = vpop.f32.mrb[0].mxu0
    %v3187 = vpop.f32.mrb[0].mxu0
    %3188 = vdwg.mxu0
    %v3189 = vadd.f32 %v661, %v3184
    %v3190 = vmax.f32 %v3189, 0.0
    %v3191 = vpack.c.bf16 %v3190, %v3190
    %v3193 = vsel %vm360, %v3191, 0
    %3195 = vmatprep.subr.bf16.mxu0 0
    %3196 = vmatpush1.bf16.msra.mxu0 %v76
    %3197 = vmatprep.subr.bf16.mxu0 0
    %3198 = vmatpush1.bf16.msra.mxu0 %v77
    %3199 = vmatprep.subr.bf16.mxu0 0
    %3200 = vmatpush1.bf16.msra.mxu0 0
    %3201 = vmatprep.subr.bf16.mxu0 0
    %3202 = vmatpush1.bf16.msra.mxu0 0
    %3203 = vmatprep.subr.bf16.mxu0 0
    %3204 = vmatpush1.bf16.msra.mxu0 0
    %3205 = vmatprep.subr.bf16.mxu0 0
    %3206 = vmatpush1.bf16.msra.mxu0 0
    %3207 = vmatprep.subr.bf16.mxu0 0
    %3208 = vmatpush1.bf16.msra.mxu0 0
    %3209 = vmatprep.subr.bf16.mxu0 0
    %3210 = vmatpush1.bf16.msra.mxu0 0
    %3211 = vmatprep.subr.bf16.mxu0 0
    %3212 = vmatpush1.bf16.msra.mxu0 0
    %3213 = vmatprep.subr.bf16.mxu0 0
    %3214 = vmatpush1.bf16.msra.mxu0 0
    %3215 = vmatprep.subr.bf16.mxu0 0
    %3216 = vmatpush1.bf16.msra.mxu0 0
    %3217 = vmatprep.subr.bf16.mxu0 0
    %3218 = vmatpush1.bf16.msra.mxu0 0
    %3219 = vmatprep.subr.bf16.mxu0 0
    %3220 = vmatpush1.bf16.msra.mxu0 0
    %3221 = vmatprep.subr.bf16.mxu0 0
    %3222 = vmatpush1.bf16.msra.mxu0 0
    %3223 = vmatprep.subr.bf16.mxu0 0
    %3224 = vmatpush1.bf16.msra.mxu0 0
    %3225 = vmatprep.subr.bf16.mxu0 0
    %3226 = vmatpush1.bf16.msra.mxu0 0
    %3227 = vmatprep.mubr.bf16.mxu0 0
    %3228 = vmatmul.mubr.bf16.gmra.mrb[0].mxu0 %v3193
    %v3229 = vpop.f32.mrb[0].mxu0
    %v3230 = vadd.f32 %v82, %v3229
    %v3231 = vpop.f32.mrb[0].mxu0
    %v3232 = vpop.f32.mrb[0].mxu0
    %v3233 = vpop.f32.mrb[0].mxu0
    %3234 = vdwg.mxu0
    %v3235 = vmax.f32 %v3230, 0.0
    %v3236 = vpack.c.bf16 %v3235, %v3235
    %v3238 = vsel %vm360, %v3236, 0
    %3240 = vmatprep.subr.bf16.mxu0 0
    %3241 = vmatpush1.bf16.msra.mxu0 %v87
    %3242 = vmatprep.subr.bf16.mxu0 0
    %3243 = vmatpush1.bf16.msra.mxu0 %v88
    %3244 = vmatprep.subr.bf16.mxu0 0
    %3245 = vmatpush1.bf16.msra.mxu0 0
    %3246 = vmatprep.subr.bf16.mxu0 0
    %3247 = vmatpush1.bf16.msra.mxu0 0
    %3248 = vmatprep.subr.bf16.mxu0 0
    %3249 = vmatpush1.bf16.msra.mxu0 0
    %3250 = vmatprep.subr.bf16.mxu0 0
    %3251 = vmatpush1.bf16.msra.mxu0 0
    %3252 = vmatprep.subr.bf16.mxu0 0
    %3253 = vmatpush1.bf16.msra.mxu0 0
    %3254 = vmatprep.subr.bf16.mxu0 0
    %3255 = vmatpush1.bf16.msra.mxu0 0
    %3256 = vmatprep.subr.bf16.mxu0 0
    %3257 = vmatpush1.bf16.msra.mxu0 0
    %3258 = vmatprep.subr.bf16.mxu0 0
    %3259 = vmatpush1.bf16.msra.mxu0 0
    %3260 = vmatprep.subr.bf16.mxu0 0
    %3261 = vmatpush1.bf16.msra.mxu0 0
    %3262 = vmatprep.subr.bf16.mxu0 0
    %3263 = vmatpush1.bf16.msra.mxu0 0
    %3264 = vmatprep.subr.bf16.mxu0 0
    %3265 = vmatpush1.bf16.msra.mxu0 0
    %3266 = vmatprep.subr.bf16.mxu0 0
    %3267 = vmatpush1.bf16.msra.mxu0 0
    %3268 = vmatprep.subr.bf16.mxu0 0
    %3269 = vmatpush1.bf16.msra.mxu0 0
    %3270 = vmatprep.subr.bf16.mxu0 0
    %3271 = vmatpush1.bf16.msra.mxu0 0
    %3272 = vmatprep.mubr.bf16.mxu0 0
    %3273 = vmatmul.mubr.bf16.gmra.mrb[0].mxu0 %v3238
    %v3274 = vpop.f32.mrb[0].mxu0
    %v3275 = vadd.f32 %v117, %v3274
    %v3276 = vpop.f32.mrb[0].mxu0
    %v3277 = vpop.f32.mrb[0].mxu0
    %v3278 = vpop.f32.mrb[0].mxu0
    %3279 = vdwg.mxu0
    %v3280 = vmax.f32 %v3275, 0.0
    %v3281 = vpack.c.bf16 %v3280, %v3280
    %v3283 = vsel %vm800, %v3281, 0
    %3285 = vmatprep.subr.bf16.mxu0 0
    %3286 = vmatpush1.bf16.msra.mxu0 %v97
    %3287 = vmatprep.subr.bf16.mxu0 0
    %3288 = vmatpush1.bf16.msra.mxu0 %v98
    %3289 = vmatprep.subr.bf16.mxu0 0
    %3290 = vmatpush1.bf16.msra.mxu0 %v99
    %3291 = vmatprep.subr.bf16.mxu0 0
    %3292 = vmatpush1.bf16.msra.mxu0 %v100
    %3293 = vmatprep.subr.bf16.mxu0 0
    %3294 = vmatpush1.bf16.msra.mxu0 0
    %3295 = vmatprep.subr.bf16.mxu0 0
    %3296 = vmatpush1.bf16.msra.mxu0 0
    %3297 = vmatprep.subr.bf16.mxu0 0
    %3298 = vmatpush1.bf16.msra.mxu0 0
    %3299 = vmatprep.subr.bf16.mxu0 0
    %3300 = vmatpush1.bf16.msra.mxu0 0
    %3301 = vmatprep.subr.bf16.mxu0 0
    %3302 = vmatpush1.bf16.msra.mxu0 0
    %3303 = vmatprep.subr.bf16.mxu0 0
    %3304 = vmatpush1.bf16.msra.mxu0 0
    %3305 = vmatprep.subr.bf16.mxu0 0
    %3306 = vmatpush1.bf16.msra.mxu0 0
    %3307 = vmatprep.subr.bf16.mxu0 0
    %3308 = vmatpush1.bf16.msra.mxu0 0
    %3309 = vmatprep.subr.bf16.mxu0 0
    %3310 = vmatpush1.bf16.msra.mxu0 0
    %3311 = vmatprep.subr.bf16.mxu0 0
    %3312 = vmatpush1.bf16.msra.mxu0 0
    %3313 = vmatprep.subr.bf16.mxu0 0
    %3314 = vmatpush1.bf16.msra.mxu0 0
    %3315 = vmatprep.subr.bf16.mxu0 0
    %3316 = vmatpush1.bf16.msra.mxu0 0
    %3317 = vmatprep.mubr.bf16.mxu0 0
    %3318 = vmatmul.mubr.bf16.gmra.mrb[0].mxu0 %v3283
    %v3319 = vpop.f32.mrb[0].mxu0
    %v3320 = vadd.f32 %v122, %v3319
    %v3321 = vpop.f32.mrb[0].mxu0
    %v3322 = vpop.f32.mrb[0].mxu0
    %v3323 = vpop.f32.mrb[0].mxu0
    %3324 = vdwg.mxu0
    %v3325 = vmax.f32 %v3320, 0.0
    %v3326 = vpack.c.bf16 %v3325, %v3325
    %v3328 = vsel %vm800, %v3326, 0
    %3330 = vmatprep.subr.bf16.mxu0 0
    %3331 = vmatpush1.bf16.msra.mxu0 %v109
    %3332 = vmatprep.subr.bf16.mxu0 0
    %3333 = vmatpush1.bf16.msra.mxu0 %v110
    %3334 = vmatprep.subr.bf16.mxu0 0
    %3335 = vmatpush1.bf16.msra.mxu0 %v111
    %3336 = vmatprep.subr.bf16.mxu0 0
    %3337 = vmatpush1.bf16.msra.mxu0 %v112
    %3338 = vmatprep.subr.bf16.mxu0 0
    %3339 = vmatpush1.bf16.msra.mxu0 0
    %3340 = vmatprep.subr.bf16.mxu0 0
    %3341 = vmatpush1.bf16.msra.mxu0 0
    %3342 = vmatprep.subr.bf16.mxu0 0
    %3343 = vmatpush1.bf16.msra.mxu0 0
    %3344 = vmatprep.subr.bf16.mxu0 0
    %3345 = vmatpush1.bf16.msra.mxu0 0
    %3346 = vmatprep.subr.bf16.mxu0 0
    %3347 = vmatpush1.bf16.msra.mxu0 0
    %3348 = vmatprep.subr.bf16.mxu0 0
    %3349 = vmatpush1.bf16.msra.mxu0 0
    %3350 = vmatprep.subr.bf16.mxu0 0
    %3351 = vmatpush1.bf16.msra.mxu0 0
    %3352 = vmatprep.subr.bf16.mxu0 0
    %3353 = vmatpush1.bf16.msra.mxu0 0
    %3354 = vmatprep.subr.bf16.mxu0 0
    %3355 = vmatpush1.bf16.msra.mxu0 0
    %3356 = vmatprep.subr.bf16.mxu0 0
    %3357 = vmatpush1.bf16.msra.mxu0 0
    %3358 = vmatprep.subr.bf16.mxu0 0
    %3359 = vmatpush1.bf16.msra.mxu0 0
    %3360 = vmatprep.subr.bf16.mxu0 0
    %3361 = vmatpush1.bf16.msra.mxu0 0
    %3362 = vmatprep.mubr.bf16.mxu0 0
    %3363 = vmatmul.mubr.bf16.gmra.mrb[0].mxu0 %v3328
    %v3364 = vpop.f32.mrb[0].mxu0
    %v3365 = vadd.f32 %v127, %v3364
    %v3366 = vpop.f32.mrb[0].mxu0
    %v3367 = vpop.f32.mrb[0].mxu0
    %v3368 = vpop.f32.mrb[0].mxu0
    %3369 = vdwg.mxu0
    %vm3370 = vcmp.gt.f32.partialorder %v3365, 20.0
    %v3371 = vmin.f32 %v3365, 20.0
    %v3372 = vmul.f32 %v3371, 1.442695
    %v3373 = vpow.pop %v3372
    %v3374 = vadd.f32 %v3373, 1.0
    %v3375 = vlog2.pop %v3374
    %v3376 = vmul.f32 %v3375, 0.6931472
    %v3377 = vsel %vm3370, %v3365, %v3376
    %3379 = vrot.lane.b32.xlu0 %v3377, 112
    %v3380 = vpop.permute.xlu0 %3379
    %v3382 = vmul.f32 %v268, %v3380
    %v3383 = vadd.f32 %v3382, %v3365
    %v3384 = vpack.c.bf16 %v3383, %v3383
    %v3386 = vsel %vm904, %v3384, 0
    %3388 = vmatprep.subr.bf16.mxu0 0
    %3389 = vmatpush1.bf16.msra.mxu0 %v130
    %3390 = vmatprep.subr.bf16.mxu0 0
    %3391 = vmatpush1.bf16.msra.mxu0 0
    %3392 = vmatprep.subr.bf16.mxu0 0
    %3393 = vmatpush1.bf16.msra.mxu0 0
    %3394 = vmatprep.subr.bf16.mxu0 0
    %3395 = vmatpush1.bf16.msra.mxu0 0
    %3396 = vmatprep.subr.bf16.mxu0 0
    %3397 = vmatpush1.bf16.msra.mxu0 0
    %3398 = vmatprep.subr.bf16.mxu0 0
    %3399 = vmatpush1.bf16.msra.mxu0 0
    %3400 = vmatprep.subr.bf16.mxu0 0
    %3401 = vmatpush1.bf16.msra.mxu0 0
    %3402 = vmatprep.subr.bf16.mxu0 0
    %3403 = vmatpush1.bf16.msra.mxu0 0
    %3404 = vmatprep.subr.bf16.mxu0 0
    %3405 = vmatpush1.bf16.msra.mxu0 0
    %3406 = vmatprep.subr.bf16.mxu0 0
    %3407 = vmatpush1.bf16.msra.mxu0 0
    %3408 = vmatprep.subr.bf16.mxu0 0
    %3409 = vmatpush1.bf16.msra.mxu0 0
    %3410 = vmatprep.subr.bf16.mxu0 0
    %3411 = vmatpush1.bf16.msra.mxu0 0
    %3412 = vmatprep.subr.bf16.mxu0 0
    %3413 = vmatpush1.bf16.msra.mxu0 0
    %3414 = vmatprep.subr.bf16.mxu0 0
    %3415 = vmatpush1.bf16.msra.mxu0 0
    %3416 = vmatprep.subr.bf16.mxu0 0
    %3417 = vmatpush1.bf16.msra.mxu0 0
    %3418 = vmatprep.subr.bf16.mxu0 0
    %3419 = vmatpush1.bf16.msra.mxu0 0
    %3420 = vmatprep.mubr.bf16.mxu0 0
    %3421 = vmatmul.mubr.bf16.gmra.mrb[0].mxu0 %v3386
    %v3422 = vpop.f32.mrb[0].mxu0
    %v3423 = vadd.f32 %v153, %v3422
    %v3424 = vpop.f32.mrb[0].mxu0
    %v3425 = vpop.f32.mrb[0].mxu0
    %v3426 = vpop.f32.mrb[0].mxu0
    %3427 = vdwg.mxu0
    %v3428 = vmax.f32 %v3423, 0.0
    %v3429 = vpack.c.bf16 %v3428, %v3428
    %v3431 = vsel %vm360, %v3429, 0
    %3433 = vmatprep.subr.bf16.mxu0 0
    %3434 = vmatpush1.bf16.msra.mxu0 %v135
    %3435 = vmatprep.subr.bf16.mxu0 0
    %3436 = vmatpush1.bf16.msra.mxu0 %v136
    %3437 = vmatprep.subr.bf16.mxu0 0
    %3438 = vmatpush1.bf16.msra.mxu0 0
    %3439 = vmatprep.subr.bf16.mxu0 0
    %3440 = vmatpush1.bf16.msra.mxu0 0
    %3441 = vmatprep.subr.bf16.mxu0 0
    %3442 = vmatpush1.bf16.msra.mxu0 0
    %3443 = vmatprep.subr.bf16.mxu0 0
    %3444 = vmatpush1.bf16.msra.mxu0 0
    %3445 = vmatprep.subr.bf16.mxu0 0
    %3446 = vmatpush1.bf16.msra.mxu0 0
    %3447 = vmatprep.subr.bf16.mxu0 0
    %3448 = vmatpush1.bf16.msra.mxu0 0
    %3449 = vmatprep.subr.bf16.mxu0 0
    %3450 = vmatpush1.bf16.msra.mxu0 0
    %3451 = vmatprep.subr.bf16.mxu0 0
    %3452 = vmatpush1.bf16.msra.mxu0 0
    %3453 = vmatprep.subr.bf16.mxu0 0
    %3454 = vmatpush1.bf16.msra.mxu0 0
    %3455 = vmatprep.subr.bf16.mxu0 0
    %3456 = vmatpush1.bf16.msra.mxu0 0
    %3457 = vmatprep.subr.bf16.mxu0 0
    %3458 = vmatpush1.bf16.msra.mxu0 0
    %3459 = vmatprep.subr.bf16.mxu0 0
    %3460 = vmatpush1.bf16.msra.mxu0 0
    %3461 = vmatprep.subr.bf16.mxu0 0
    %3462 = vmatpush1.bf16.msra.mxu0 0
    %3463 = vmatprep.subr.bf16.mxu0 0
    %3464 = vmatpush1.bf16.msra.mxu0 0
    %3465 = vmatprep.mubr.bf16.mxu0 0
    %3466 = vmatmul.mubr.bf16.gmra.mrb[0].mxu0 %v3431
    %v3467 = vpop.f32.mrb[0].mxu0
    %v3468 = vadd.f32 %v158, %v3467
    %v3469 = vpop.f32.mrb[0].mxu0
    %v3470 = vpop.f32.mrb[0].mxu0
    %v3471 = vpop.f32.mrb[0].mxu0
    %3472 = vdwg.mxu0
    %v3473 = vmax.f32 %v3468, 0.0
    %v3474 = vpack.c.bf16 %v3473, %v3473
    %v3476 = vsel %vm360, %v3474, 0
    %3478 = vmatprep.subr.bf16.mxu0 0
    %3479 = vmatpush1.bf16.msra.mxu0 %v141
    %3480 = vmatprep.subr.bf16.mxu0 0
    %3481 = vmatpush1.bf16.msra.mxu0 %v142
    %3482 = vmatprep.subr.bf16.mxu0 0
    %3483 = vmatpush1.bf16.msra.mxu0 0
    %3484 = vmatprep.subr.bf16.mxu0 0
    %3485 = vmatpush1.bf16.msra.mxu0 0
    %3486 = vmatprep.subr.bf16.mxu0 0
    %3487 = vmatpush1.bf16.msra.mxu0 0
    %3488 = vmatprep.subr.bf16.mxu0 0
    %3489 = vmatpush1.bf16.msra.mxu0 0
    %3490 = vmatprep.subr.bf16.mxu0 0
    %3491 = vmatpush1.bf16.msra.mxu0 0
    %3492 = vmatprep.subr.bf16.mxu0 0
    %3493 = vmatpush1.bf16.msra.mxu0 0
    %3494 = vmatprep.subr.bf16.mxu0 0
    %3495 = vmatpush1.bf16.msra.mxu0 0
    %3496 = vmatprep.subr.bf16.mxu0 0
    %3497 = vmatpush1.bf16.msra.mxu0 0
    %3498 = vmatprep.subr.bf16.mxu0 0
    %3499 = vmatpush1.bf16.msra.mxu0 0
    %3500 = vmatprep.subr.bf16.mxu0 0
    %3501 = vmatpush1.bf16.msra.mxu0 0
    %3502 = vmatprep.subr.bf16.mxu0 0
    %3503 = vmatpush1.bf16.msra.mxu0 0
    %3504 = vmatprep.subr.bf16.mxu0 0
    %3505 = vmatpush1.bf16.msra.mxu0 0
    %3506 = vmatprep.subr.bf16.mxu0 0
    %3507 = vmatpush1.bf16.msra.mxu0 0
    %3508 = vmatprep.subr.bf16.mxu0 0
    %3509 = vmatpush1.bf16.msra.mxu0 0
    %3510 = vmatprep.mubr.bf16.mxu0 0
    %3511 = vmatmul.mubr.bf16.gmra.mrb[0].mxu0 %v3476
    %v3512 = vpop.f32.mrb[0].mxu0
    %v3513 = vadd.f32 %v163, %v3512
    %v3514 = vpop.f32.mrb[0].mxu0
    %v3515 = vpop.f32.mrb[0].mxu0
    %v3516 = vpop.f32.mrb[0].mxu0
    %3517 = vdwg.mxu0
    %v3518 = vmax.f32 %v3513, 0.0
    %v3519 = vpack.c.bf16 %v3518, %v3518
    %v3521 = vsel %vm360, %v3519, 0
    %3523 = vmatprep.subr.bf16.mxu0 0
    %3524 = vmatpush1.bf16.msra.mxu0 %v147
    %3525 = vmatprep.subr.bf16.mxu0 0
    %3526 = vmatpush1.bf16.msra.mxu0 %v148
    %3527 = vmatprep.subr.bf16.mxu0 0
    %3528 = vmatpush1.bf16.msra.mxu0 0
    %3529 = vmatprep.subr.bf16.mxu0 0
    %3530 = vmatpush1.bf16.msra.mxu0 0
    %3531 = vmatprep.subr.bf16.mxu0 0
    %3532 = vmatpush1.bf16.msra.mxu0 0
    %3533 = vmatprep.subr.bf16.mxu0 0
    %3534 = vmatpush1.bf16.msra.mxu0 0
    %3535 = vmatprep.subr.bf16.mxu0 0
    %3536 = vmatpush1.bf16.msra.mxu0 0
    %3537 = vmatprep.subr.bf16.mxu0 0
    %3538 = vmatpush1.bf16.msra.mxu0 0
    %3539 = vmatprep.subr.bf16.mxu0 0
    %3540 = vmatpush1.bf16.msra.mxu0 0
    %3541 = vmatprep.subr.bf16.mxu0 0
    %3542 = vmatpush1.bf16.msra.mxu0 0
    %3543 = vmatprep.subr.bf16.mxu0 0
    %3544 = vmatpush1.bf16.msra.mxu0 0
    %3545 = vmatprep.subr.bf16.mxu0 0
    %3546 = vmatpush1.bf16.msra.mxu0 0
    %3547 = vmatprep.subr.bf16.mxu0 0
    %3548 = vmatpush1.bf16.msra.mxu0 0
    %3549 = vmatprep.subr.bf16.mxu0 0
    %3550 = vmatpush1.bf16.msra.mxu0 0
    %3551 = vmatprep.subr.bf16.mxu0 0
    %3552 = vmatpush1.bf16.msra.mxu0 0
    %3553 = vmatprep.subr.bf16.mxu0 0
    %3554 = vmatpush1.bf16.msra.mxu0 0
    %3555 = vmatprep.mubr.bf16.mxu0 0
    %3556 = vmatmul.mubr.bf16.gmra.mrb[0].mxu0 %v3521
    %v3557 = vpop.f32.mrb[0].mxu0
    %v3558 = vadd.f32 %v168, %v3557
    %v3559 = vpop.f32.mrb[0].mxu0
    %v3560 = vpop.f32.mrb[0].mxu0
    %v3561 = vpop.f32.mrb[0].mxu0
    %3562 = vdwg.mxu0
    %v3563 = vmax.f32 %v3558, 0.0
    %3565 = vrot.lane.b32.xlu0 %v1157, 64
    %v3566 = vpop.permute.xlu0 %3565
    %3569 = vrot.lane.b32.xlu0 %v1653, 64
    %v3570 = vpop.permute.xlu0 %3569
    %3573 = vrot.lane.b32.xlu0 %v2149, 64
    %v3574 = vpop.permute.xlu0 %3573
    %3577 = vrot.lane.b32.xlu0 %v2645, 64
    %v3578 = vpop.permute.xlu0 %3577
    %3581 = vrot.lane.b32.xlu0 %v3141, 64
    %v3582 = vpop.permute.xlu0 %3581
    %v3584 = vpack.c.bf16 %v3566, 0.0
    %v3585 = vpack.c.bf16 %v3574, %v3570
    %v3586 = vpack.c.bf16 %v3582, %v3578
    %v3587 = vlaneseq
    %v3588 = vshrl.u32 %v3587, 7
    %v3589 = vsub.s32 0, %v3588
    %v3590 = vrot.slane %v181, %v3589
    %v3592 = vsel %vm360, %v3584, 0
    %v3595 = vsel %vm360, %v3585, 0
    %v3598 = vsel %vm360, %v3586, 0
    %3600 = vmatprep.subr.bf16.mxu0 0
    %3601 = vmatpush1.bf16.msra.mxu0 %v179
    %3602 = vmatprep.subr.bf16.mxu0 0
    %3603 = vmatpush1.bf16.msra.mxu0 %v180
    %3604 = vmatprep.subr.bf16.mxu0 0
    %3605 = vmatpush1.bf16.msra.mxu0 0
    %3606 = vmatprep.subr.bf16.mxu0 0
    %3607 = vmatpush1.bf16.msra.mxu0 0
    %3608 = vmatprep.subr.bf16.mxu0 0
    %3609 = vmatpush1.bf16.msra.mxu0 0
    %3610 = vmatprep.subr.bf16.mxu0 0
    %3611 = vmatpush1.bf16.msra.mxu0 0
    %3612 = vmatprep.subr.bf16.mxu0 0
    %3613 = vmatpush1.bf16.msra.mxu0 0
    %3614 = vmatprep.subr.bf16.mxu0 0
    %3615 = vmatpush1.bf16.msra.mxu0 0
    %3616 = vmatprep.subr.bf16.mxu0 0
    %3617 = vmatpush1.bf16.msra.mxu0 0
    %3618 = vmatprep.subr.bf16.mxu0 0
    %3619 = vmatpush1.bf16.msra.mxu0 0
    %3620 = vmatprep.subr.bf16.mxu0 0
    %3621 = vmatpush1.bf16.msra.mxu0 0
    %3622 = vmatprep.subr.bf16.mxu0 0
    %3623 = vmatpush1.bf16.msra.mxu0 0
    %3624 = vmatprep.subr.bf16.mxu0 0
    %3625 = vmatpush1.bf16.msra.mxu0 0
    %3626 = vmatprep.subr.bf16.mxu0 0
    %3627 = vmatpush1.bf16.msra.mxu0 0
    %3628 = vmatprep.subr.bf16.mxu0 0
    %3629 = vmatpush1.bf16.msra.mxu0 0
    %3630 = vmatprep.subr.bf16.mxu0 0
    %3631 = vmatpush1.bf16.msra.mxu0 0
    %3632 = vmatprep.mubr.bf16.mxu0 0
    %3633 = vmatmul.mubr.bf16.gmra.mrb[0].mxu0 %v3592
    %v3634 = vpop.f32.mrb[0].mxu0
    %v3635 = vadd.f32 %v3590, %v3634
    %v3636 = vpop.f32.mrb[0].mxu0
    %v3637 = vpop.f32.mrb[0].mxu0
    %v3638 = vadd.f32 %v3590, %v3637
    %v3639 = vpop.f32.mrb[0].mxu0
    %3640 = vmatprep.mubr.bf16.mxu0 0
    %3641 = vmatmul.mubr.bf16.gmra.mrb[0].mxu0 %v3595
    %v3642 = vpop.f32.mrb[0].mxu0
    %v3643 = vadd.f32 %v3590, %v3642
    %v3644 = vpop.f32.mrb[0].mxu0
    %v3645 = vpop.f32.mrb[0].mxu0
    %v3646 = vadd.f32 %v3590, %v3645
    %v3647 = vpop.f32.mrb[0].mxu0
    %3648 = vmatprep.mubr.bf16.mxu0 0
    %3649 = vmatmul.mubr.bf16.gmra.mrb[0].mxu0 %v3598
    %v3650 = vpop.f32.mrb[0].mxu0
    %v3651 = vadd.f32 %v3590, %v3650
    %v3652 = vpop.f32.mrb[0].mxu0
    %v3653 = vpop.f32.mrb[0].mxu0
    %v3654 = vadd.f32 %v3590, %v3653
    %v3655 = vpop.f32.mrb[0].mxu0
    %3656 = vdwg.mxu0
    %v3657 = vmax.f32 %v3635, 0.0
    %v3658 = vmax.f32 %v3638, 0.0
    %v3659 = vmax.f32 %v3643, 0.0
    %v3660 = vmax.f32 %v3646, 0.0
    %v3661 = vmax.f32 %v3651, 0.0
    %v3662 = vmax.f32 %v3654, 0.0
    %v3663 = vpack.c.bf16 %v3658, %v3657
    %v3664 = vpack.c.bf16 %v3660, %v3659
    %v3665 = vpack.c.bf16 %v3662, %v3661
    %v3666 = vlaneseq
    %v3667 = vshrl.u32 %v3666, 7
    %v3668 = vsub.s32 0, %v3667
    %v3669 = vrot.slane %v212, %v3668
    %v3671 = vsel %vm360, %v3663, 0
    %v3674 = vsel %vm360, %v3664, 0
    %v3677 = vsel %vm360, %v3665, 0
    %3679 = vmatprep.subr.bf16.mxu0 0
    %3680 = vmatpush1.bf16.msra.mxu0 %v186
    %3681 = vmatprep.subr.bf16.mxu0 0
    %3682 = vmatpush1.bf16.msra.mxu0 %v187
    %3683 = vmatprep.subr.bf16.mxu0 0
    %3684 = vmatpush1.bf16.msra.mxu0 0
    %3685 = vmatprep.subr.bf16.mxu0 0
    %3686 = vmatpush1.bf16.msra.mxu0 0
    %3687 = vmatprep.subr.bf16.mxu0 0
    %3688 = vmatpush1.bf16.msra.mxu0 0
    %3689 = vmatprep.subr.bf16.mxu0 0
    %3690 = vmatpush1.bf16.msra.mxu0 0
    %3691 = vmatprep.subr.bf16.mxu0 0
    %3692 = vmatpush1.bf16.msra.mxu0 0
    %3693 = vmatprep.subr.bf16.mxu0 0
    %3694 = vmatpush1.bf16.msra.mxu0 0
    %3695 = vmatprep.subr.bf16.mxu0 0
    %3696 = vmatpush1.bf16.msra.mxu0 0
    %3697 = vmatprep.subr.bf16.mxu0 0
    %3698 = vmatpush1.bf16.msra.mxu0 0
    %3699 = vmatprep.subr.bf16.mxu0 0
    %3700 = vmatpush1.bf16.msra.mxu0 0
    %3701 = vmatprep.subr.bf16.mxu0 0
    %3702 = vmatpush1.bf16.msra.mxu0 0
    %3703 = vmatprep.subr.bf16.mxu0 0
    %3704 = vmatpush1.bf16.msra.mxu0 0
    %3705 = vmatprep.subr.bf16.mxu0 0
    %3706 = vmatpush1.bf16.msra.mxu0 0
    %3707 = vmatprep.subr.bf16.mxu0 0
    %3708 = vmatpush1.bf16.msra.mxu0 0
    %3709 = vmatprep.subr.bf16.mxu0 0
    %3710 = vmatpush1.bf16.msra.mxu0 0
    %3711 = vmatprep.mubr.bf16.mxu0 0
    %3712 = vmatmul.mubr.bf16.gmra.mrb[0].mxu0 %v3671
    %v3713 = vpop.f32.mrb[0].mxu0
    %v3714 = vadd.f32 %v3669, %v3713
    %v3715 = vpop.f32.mrb[0].mxu0
    %v3716 = vpop.f32.mrb[0].mxu0
    %v3717 = vadd.f32 %v3669, %v3716
    %v3718 = vpop.f32.mrb[0].mxu0
    %3719 = vmatprep.mubr.bf16.mxu0 0
    %3720 = vmatmul.mubr.bf16.gmra.mrb[0].mxu0 %v3674
    %v3721 = vpop.f32.mrb[0].mxu0
    %v3722 = vadd.f32 %v3669, %v3721
    %v3723 = vpop.f32.mrb[0].mxu0
    %v3724 = vpop.f32.mrb[0].mxu0
    %v3725 = vadd.f32 %v3669, %v3724
    %v3726 = vpop.f32.mrb[0].mxu0
    %3727 = vmatprep.mubr.bf16.mxu0 0
    %3728 = vmatmul.mubr.bf16.gmra.mrb[0].mxu0 %v3677
    %v3729 = vpop.f32.mrb[0].mxu0
    %v3730 = vadd.f32 %v3669, %v3729
    %v3731 = vpop.f32.mrb[0].mxu0
    %v3732 = vpop.f32.mrb[0].mxu0
    %v3733 = vadd.f32 %v3669, %v3732
    %v3734 = vpop.f32.mrb[0].mxu0
    %3735 = vdwg.mxu0
    %v3736 = vmax.f32 %v3714, 0.0
    %v3737 = vmax.f32 %v3717, 0.0
    %v3738 = vmax.f32 %v3722, 0.0
    %v3739 = vmax.f32 %v3725, 0.0
    %v3740 = vmax.f32 %v3730, 0.0
    %v3741 = vmax.f32 %v3733, 0.0
    %v3742 = vpack.c.bf16 %v3737, %v3736
    %v3743 = vpack.c.bf16 %v3739, %v3738
    %v3744 = vpack.c.bf16 %v3741, %v3740
    %v3745 = vlaneseq
    %v3746 = vshrl.u32 %v3745, 7
    %v3747 = vsub.s32 0, %v3746
    %v3748 = vrot.slane %v213, %v3747
    %v3750 = vsel %vm800, %v3742, 0
    %v3753 = vsel %vm800, %v3743, 0
    %v3756 = vsel %vm800, %v3744, 0
    %3758 = vmatprep.subr.bf16.mxu0 0
    %3759 = vmatpush1.bf16.msra.mxu0 %v196
    %3760 = vmatprep.subr.bf16.mxu0 0
    %3761 = vmatpush1.bf16.msra.mxu0 %v197
    %3762 = vmatprep.subr.bf16.mxu0 0
    %3763 = vmatpush1.bf16.msra.mxu0 %v198
    %3764 = vmatprep.subr.bf16.mxu0 0
    %3765 = vmatpush1.bf16.msra.mxu0 %v199
    %3766 = vmatprep.subr.bf16.mxu0 0
    %3767 = vmatpush1.bf16.msra.mxu0 0
    %3768 = vmatprep.subr.bf16.mxu0 0
    %3769 = vmatpush1.bf16.msra.mxu0 0
    %3770 = vmatprep.subr.bf16.mxu0 0
    %3771 = vmatpush1.bf16.msra.mxu0 0
    %3772 = vmatprep.subr.bf16.mxu0 0
    %3773 = vmatpush1.bf16.msra.mxu0 0
    %3774 = vmatprep.subr.bf16.mxu0 0
    %3775 = vmatpush1.bf16.msra.mxu0 0
    %3776 = vmatprep.subr.bf16.mxu0 0
    %3777 = vmatpush1.bf16.msra.mxu0 0
    %3778 = vmatprep.subr.bf16.mxu0 0
    %3779 = vmatpush1.bf16.msra.mxu0 0
    %3780 = vmatprep.subr.bf16.mxu0 0
    %3781 = vmatpush1.bf16.msra.mxu0 0
    %3782 = vmatprep.subr.bf16.mxu0 0
    %3783 = vmatpush1.bf16.msra.mxu0 0
    %3784 = vmatprep.subr.bf16.mxu0 0
    %3785 = vmatpush1.bf16.msra.mxu0 0
    %3786 = vmatprep.subr.bf16.mxu0 0
    %3787 = vmatpush1.bf16.msra.mxu0 0
    %3788 = vmatprep.subr.bf16.mxu0 0
    %3789 = vmatpush1.bf16.msra.mxu0 0
    %3790 = vmatprep.mubr.bf16.mxu0 0
    %3791 = vmatmul.mubr.bf16.gmra.mrb[0].mxu0 %v3750
    %v3792 = vpop.f32.mrb[0].mxu0
    %v3793 = vadd.f32 %v3748, %v3792
    %v3794 = vpop.f32.mrb[0].mxu0
    %v3795 = vpop.f32.mrb[0].mxu0
    %v3796 = vadd.f32 %v3748, %v3795
    %v3797 = vpop.f32.mrb[0].mxu0
    %3798 = vmatprep.mubr.bf16.mxu0 0
    %3799 = vmatmul.mubr.bf16.gmra.mrb[0].mxu0 %v3753
    %v3800 = vpop.f32.mrb[0].mxu0
    %v3801 = vadd.f32 %v3748, %v3800
    %v3802 = vpop.f32.mrb[0].mxu0
    %v3803 = vpop.f32.mrb[0].mxu0
    %v3804 = vadd.f32 %v3748, %v3803
    %v3805 = vpop.f32.mrb[0].mxu0
    %3806 = vmatprep.mubr.bf16.mxu0 0
    %3807 = vmatmul.mubr.bf16.gmra.mrb[0].mxu0 %v3756
    %v3808 = vpop.f32.mrb[0].mxu0
    %v3809 = vadd.f32 %v3748, %v3808
    %v3810 = vpop.f32.mrb[0].mxu0
    %v3811 = vpop.f32.mrb[0].mxu0
    %v3812 = vadd.f32 %v3748, %v3811
    %v3813 = vpop.f32.mrb[0].mxu0
    %3814 = vdwg.mxu0
    %v3815 = vmax.f32 %v3793, 0.0
    %v3816 = vmax.f32 %v3796, 0.0
    %v3817 = vmax.f32 %v3801, 0.0
    %v3818 = vmax.f32 %v3804, 0.0
    %v3819 = vmax.f32 %v3809, 0.0
    %v3820 = vmax.f32 %v3812, 0.0
    %v3821 = vpack.c.bf16 %v3816, %v3815
    %v3822 = vpack.c.bf16 %v3818, %v3817
    %v3823 = vpack.c.bf16 %v3820, %v3819
    %v3824 = vlaneseq
    %v3825 = vshrl.u32 %v3824, 7
    %v3826 = vsub.s32 0, %v3825
    %v3827 = vrot.slane %v214, %v3826
    %v3829 = vsel %vm800, %v3821, 0
    %v3832 = vsel %vm800, %v3822, 0
    %v3835 = vsel %vm800, %v3823, 0
    %3837 = vmatprep.subr.bf16.mxu0 0
    %3838 = vmatpush1.bf16.msra.mxu0 %v208
    %3839 = vmatprep.subr.bf16.mxu0 0
    %3840 = vmatpush1.bf16.msra.mxu0 %v209
    %3841 = vmatprep.subr.bf16.mxu0 0
    %3842 = vmatpush1.bf16.msra.mxu0 %v210
    %3843 = vmatprep.subr.bf16.mxu0 0
    %3844 = vmatpush1.bf16.msra.mxu0 %v211
    %3845 = vmatprep.subr.bf16.mxu0 0
    %3846 = vmatpush1.bf16.msra.mxu0 0
    %3847 = vmatprep.subr.bf16.mxu0 0
    %3848 = vmatpush1.bf16.msra.mxu0 0
    %3849 = vmatprep.subr.bf16.mxu0 0
    %3850 = vmatpush1.bf16.msra.mxu0 0
    %3851 = vmatprep.subr.bf16.mxu0 0
    %3852 = vmatpush1.bf16.msra.mxu0 0
    %3853 = vmatprep.subr.bf16.mxu0 0
    %3854 = vmatpush1.bf16.msra.mxu0 0
    %3855 = vmatprep.subr.bf16.mxu0 0
    %3856 = vmatpush1.bf16.msra.mxu0 0
    %3857 = vmatprep.subr.bf16.mxu0 0
    %3858 = vmatpush1.bf16.msra.mxu0 0
    %3859 = vmatprep.subr.bf16.mxu0 0
    %3860 = vmatpush1.bf16.msra.mxu0 0
    %3861 = vmatprep.subr.bf16.mxu0 0
    %3862 = vmatpush1.bf16.msra.mxu0 0
    %3863 = vmatprep.subr.bf16.mxu0 0
    %3864 = vmatpush1.bf16.msra.mxu0 0
    %3865 = vmatprep.subr.bf16.mxu0 0
    %3866 = vmatpush1.bf16.msra.mxu0 0
    %3867 = vmatprep.subr.bf16.mxu0 0
    %3868 = vmatpush1.bf16.msra.mxu0 0
    %3869 = vmatprep.mubr.bf16.mxu0 0
    %3870 = vmatmul.mubr.bf16.gmra.mrb[0].mxu0 %v3829
    %v3871 = vpop.f32.mrb[0].mxu0
    %v3872 = vadd.f32 %v3827, %v3871
    %v3873 = vpop.f32.mrb[0].mxu0
    %v3874 = vpop.f32.mrb[0].mxu0
    %v3875 = vadd.f32 %v3827, %v3874
    %v3876 = vpop.f32.mrb[0].mxu0
    %3877 = vmatprep.mubr.bf16.mxu0 0
    %3878 = vmatmul.mubr.bf16.gmra.mrb[0].mxu0 %v3832
    %v3879 = vpop.f32.mrb[0].mxu0
    %v3880 = vadd.f32 %v3827, %v3879
    %v3881 = vpop.f32.mrb[0].mxu0
    %v3882 = vpop.f32.mrb[0].mxu0
    %v3883 = vadd.f32 %v3827, %v3882
    %v3884 = vpop.f32.mrb[0].mxu0
    %3885 = vmatprep.mubr.bf16.mxu0 0
    %3886 = vmatmul.mubr.bf16.gmra.mrb[0].mxu0 %v3835
    %v3887 = vpop.f32.mrb[0].mxu0
    %v3888 = vadd.f32 %v3827, %v3887
    %v3889 = vpop.f32.mrb[0].mxu0
    %v3890 = vpop.f32.mrb[0].mxu0
    %v3891 = vadd.f32 %v3827, %v3890
    %v3892 = vpop.f32.mrb[0].mxu0
    %3893 = vdwg.mxu0
    %vm3894 = vcmp.gt.f32.partialorder %v3872, 20.0
    %vm3895 = vcmp.gt.f32.partialorder %v3875, 20.0
    %vm3896 = vcmp.gt.f32.partialorder %v3880, 20.0
    %vm3897 = vcmp.gt.f32.partialorder %v3883, 20.0
    %vm3898 = vcmp.gt.f32.partialorder %v3888, 20.0
    %vm3899 = vcmp.gt.f32.partialorder %v3891, 20.0
    %v3900 = vmin.f32 %v3872, 20.0
    %v3901 = vmin.f32 %v3875, 20.0
    %v3902 = vmin.f32 %v3880, 20.0
    %v3903 = vmin.f32 %v3883, 20.0
    %v3904 = vmin.f32 %v3888, 20.0
    %v3905 = vmin.f32 %v3891, 20.0
    %v3906 = vmul.f32 %v3900, 1.442695
    %v3907 = vpow.pop %v3906
    %v3908 = vmul.f32 %v3901, 1.442695
    %v3909 = vpow.pop %v3908
    %v3910 = vmul.f32 %v3902, 1.442695
    %v3911 = vpow.pop %v3910
    %v3912 = vmul.f32 %v3903, 1.442695
    %v3913 = vpow.pop %v3912
    %v3914 = vmul.f32 %v3904, 1.442695
    %v3915 = vpow.pop %v3914
    %v3916 = vmul.f32 %v3905, 1.442695
    %v3917 = vpow.pop %v3916
    %v3918 = vadd.f32 %v3907, 1.0
    %v3919 = vadd.f32 %v3909, 1.0
    %v3920 = vadd.f32 %v3911, 1.0
    %v3921 = vadd.f32 %v3913, 1.0
    %v3922 = vadd.f32 %v3915, 1.0
    %v3923 = vadd.f32 %v3917, 1.0
    %v3924 = vlog2.pop %v3918
    %v3925 = vmul.f32 %v3924, 0.6931472
    %v3926 = vlog2.pop %v3919
    %v3927 = vmul.f32 %v3926, 0.6931472
    %v3928 = vlog2.pop %v3920
    %v3929 = vmul.f32 %v3928, 0.6931472
    %v3930 = vlog2.pop %v3921
    %v3931 = vmul.f32 %v3930, 0.6931472
    %v3932 = vlog2.pop %v3922
    %v3933 = vmul.f32 %v3932, 0.6931472
    %v3934 = vlog2.pop %v3923
    %v3935 = vmul.f32 %v3934, 0.6931472
    %v3936 = vsel %vm3894, %v3872, %v3925
    %v3937 = vsel %vm3895, %v3875, %v3927
    %v3938 = vsel %vm3896, %v3880, %v3929
    %v3939 = vsel %vm3897, %v3883, %v3931
    %v3940 = vsel %vm3898, %v3888, %v3933
    %v3941 = vsel %vm3899, %v3891, %v3935
    %v3942 = vpack.c.bf16 %v1579, %v1083
    %v3943 = vpack.c.bf16 %v2571, %v2075
    %v3944 = vpack.c.bf16 %v3563, %v3067
    %3945 = vmatprep.subr.bf16.mxu0 0
    %3946 = vmatpush1.bf16.msra.mxu0 %v225
    %3947 = vmatprep.subr.bf16.mxu0 0
    %3948 = vmatpush1.bf16.msra.mxu0 %v226
    %3949 = vmatprep.subr.bf16.mxu0 0
    %3950 = vmatpush1.bf16.msra.mxu0 0
    %3951 = vmatprep.subr.bf16.mxu0 0
    %3952 = vmatpush1.bf16.msra.mxu0 0
    %3953 = vmatprep.subr.bf16.mxu0 0
    %3954 = vmatpush1.bf16.msra.mxu0 0
    %3955 = vmatprep.subr.bf16.mxu0 0
    %3956 = vmatpush1.bf16.msra.mxu0 0
    %3957 = vmatprep.subr.bf16.mxu0 0
    %3958 = vmatpush1.bf16.msra.mxu0 0
    %3959 = vmatprep.subr.bf16.mxu0 0
    %3960 = vmatpush1.bf16.msra.mxu0 0
    %3961 = vmatprep.subr.bf16.mxu0 0
    %3962 = vmatpush1.bf16.msra.mxu0 0
    %3963 = vmatprep.subr.bf16.mxu0 0
    %3964 = vmatpush1.bf16.msra.mxu0 0
    %3965 = vmatprep.subr.bf16.mxu0 0
    %3966 = vmatpush1.bf16.msra.mxu0 0
    %3967 = vmatprep.subr.bf16.mxu0 0
    %3968 = vmatpush1.bf16.msra.mxu0 0
    %3969 = vmatprep.subr.bf16.mxu0 0
    %3970 = vmatpush1.bf16.msra.mxu0 0
    %3971 = vmatprep.subr.bf16.mxu0 0
    %3972 = vmatpush1.bf16.msra.mxu0 0
    %3973 = vmatprep.subr.bf16.mxu0 0
    %3974 = vmatpush1.bf16.msra.mxu0 0
    %3975 = vmatprep.subr.bf16.mxu0 0
    %3976 = vmatpush1.bf16.msra.mxu0 0
    %3977 = vmatprep.mubr.bf16.mxu0 0
    %3978 = vmatmul.mubr.bf16.gmra.mrb[0].mxu0 %v3592
    %v3979 = vpop.f32.mrb[0].mxu0
    %v3980 = vadd.f32 0.0, %v3979
    %v3981 = vpop.f32.mrb[0].mxu0
    %v3982 = vpop.f32.mrb[0].mxu0
    %v3983 = vadd.f32 0.0, %v3982
    %v3984 = vpop.f32.mrb[0].mxu0
    %3985 = vmatprep.mubr.bf16.mxu0 0
    %3986 = vmatmul.mubr.bf16.gmra.mrb[0].mxu0 %v3595
    %v3987 = vpop.f32.mrb[0].mxu0
    %v3988 = vadd.f32 0.0, %v3987
    %v3989 = vpop.f32.mrb[0].mxu0
    %v3990 = vpop.f32.mrb[0].mxu0
    %v3991 = vadd.f32 0.0, %v3990
    %v3992 = vpop.f32.mrb[0].mxu0
    %3993 = vmatprep.mubr.bf16.mxu0 0
    %3994 = vmatmul.mubr.bf16.gmra.mrb[0].mxu0 %v3598
    %v3995 = vpop.f32.mrb[0].mxu0
    %v3996 = vadd.f32 0.0, %v3995
    %v3997 = vpop.f32.mrb[0].mxu0
    %v3998 = vpop.f32.mrb[0].mxu0
    %v3999 = vadd.f32 0.0, %v3998
    %v4000 = vpop.f32.mrb[0].mxu0
    %4001 = vdwg.mxu0
    %v4003 = vsel %vm360, %v3942, 0
    %v4006 = vsel %vm360, %v3943, 0
    %v4009 = vsel %vm360, %v3944, 0
    %4011 = vmatprep.subr.bf16.mxu0 0
    %4012 = vmatpush1.bf16.msra.mxu0 %v219
    %4013 = vmatprep.subr.bf16.mxu0 0
    %4014 = vmatpush1.bf16.msra.mxu0 %v220
    %4015 = vmatprep.subr.bf16.mxu0 0
    %4016 = vmatpush1.bf16.msra.mxu0 0
    %4017 = vmatprep.subr.bf16.mxu0 0
    %4018 = vmatpush1.bf16.msra.mxu0 0
    %4019 = vmatprep.subr.bf16.mxu0 0
    %4020 = vmatpush1.bf16.msra.mxu0 0
    %4021 = vmatprep.subr.bf16.mxu0 0
    %4022 = vmatpush1.bf16.msra.mxu0 0
    %4023 = vmatprep.subr.bf16.mxu0 0
    %4024 = vmatpush1.bf16.msra.mxu0 0
    %4025 = vmatprep.subr.bf16.mxu0 0
    %4026 = vmatpush1.bf16.msra.mxu0 0
    %4027 = vmatprep.subr.bf16.mxu0 0
    %4028 = vmatpush1.bf16.msra.mxu0 0
    %4029 = vmatprep.subr.bf16.mxu0 0
    %4030 = vmatpush1.bf16.msra.mxu0 0
    %4031 = vmatprep.subr.bf16.mxu0 0
    %4032 = vmatpush1.bf16.msra.mxu0 0
    %4033 = vmatprep.subr.bf16.mxu0 0
    %4034 = vmatpush1.bf16.msra.mxu0 0
    %4035 = vmatprep.subr.bf16.mxu0 0
    %4036 = vmatpush1.bf16.msra.mxu0 0
    %4037 = vmatprep.subr.bf16.mxu0 0
    %4038 = vmatpush1.bf16.msra.mxu0 0
    %4039 = vmatprep.subr.bf16.mxu0 0
    %4040 = vmatpush1.bf16.msra.mxu0 0
    %4041 = vmatprep.subr.bf16.mxu0 0
    %4042 = vmatpush1.bf16.msra.mxu0 0
    %4043 = vmatprep.mubr.bf16.mxu0 0
    %4044 = vmatmul.mubr.bf16.gmra.mrb[0].mxu0 %v4003
    %v4045 = vpop.f32.mrb[0].mxu0
    %v4046 = vadd.f32 %v3980, %v4045
    %v4047 = vpop.f32.mrb[0].mxu0
    %v4048 = vpop.f32.mrb[0].mxu0
    %v4049 = vadd.f32 %v3983, %v4048
    %v4050 = vpop.f32.mrb[0].mxu0
    %4051 = vmatprep.mubr.bf16.mxu0 0
    %4052 = vmatmul.mubr.bf16.gmra.mrb[0].mxu0 %v4006
    %v4053 = vpop.f32.mrb[0].mxu0
    %v4054 = vadd.f32 %v3988, %v4053
    %v4055 = vpop.f32.mrb[0].mxu0
    %v4056 = vpop.f32.mrb[0].mxu0
    %v4057 = vadd.f32 %v3991, %v4056
    %v4058 = vpop.f32.mrb[0].mxu0
    %4059 = vmatprep.mubr.bf16.mxu0 0
    %4060 = vmatmul.mubr.bf16.gmra.mrb[0].mxu0 %v4009
    %v4061 = vpop.f32.mrb[0].mxu0
    %v4062 = vadd.f32 %v3996, %v4061
    %v4063 = vpop.f32.mrb[0].mxu0
    %v4064 = vpop.f32.mrb[0].mxu0
    %v4065 = vadd.f32 %v3999, %v4064
    %v4066 = vpop.f32.mrb[0].mxu0
    %4067 = vdwg.mxu0
    %v4068 = vlaneseq
    %v4069 = vshrl.u32 %v4068, 7
    %v4070 = vsub.s32 0, %v4069
    %v4071 = vrot.slane %v227, %v4070
    %v4072 = vadd.f32 %v4046, %v4071
    %v4073 = vadd.f32 %v4049, %v4071
    %v4074 = vadd.f32 %v4054, %v4071
    %v4075 = vadd.f32 %v4057, %v4071
    %v4076 = vadd.f32 %v4062, %v4071
    %v4077 = vadd.f32 %v4065, %v4071
    %v4078 = vmax.f32 %v4072, 0.0
    %v4079 = vmax.f32 %v4073, 0.0
    %v4080 = vmax.f32 %v4074, 0.0
    %v4081 = vmax.f32 %v4075, 0.0
    %v4082 = vmax.f32 %v4076, 0.0
    %v4083 = vmax.f32 %v4077, 0.0
    %v4084 = vpack.c.bf16 %v4079, %v4078
    %v4085 = vpack.c.bf16 %v4081, %v4080
    %v4086 = vpack.c.bf16 %v4083, %v4082
    %v4087 = vlaneseq
    %v4088 = vshrl.u32 %v4087, 7
    %v4089 = vsub.s32 0, %v4088
    %v4090 = vrot.slane %v234, %v4089
    %v4092 = vsel %vm360, %v4084, 0
    %v4095 = vsel %vm360, %v4085, 0
    %v4098 = vsel %vm360, %v4086, 0
    %4100 = vmatprep.subr.bf16.mxu0 0
    %4101 = vmatpush1.bf16.msra.mxu0 %v232
    %4102 = vmatprep.subr.bf16.mxu0 0
    %4103 = vmatpush1.bf16.msra.mxu0 %v233
    %4104 = vmatprep.subr.bf16.mxu0 0
    %4105 = vmatpush1.bf16.msra.mxu0 0
    %4106 = vmatprep.subr.bf16.mxu0 0
    %4107 = vmatpush1.bf16.msra.mxu0 0
    %4108 = vmatprep.subr.bf16.mxu0 0
    %4109 = vmatpush1.bf16.msra.mxu0 0
    %4110 = vmatprep.subr.bf16.mxu0 0
    %4111 = vmatpush1.bf16.msra.mxu0 0
    %4112 = vmatprep.subr.bf16.mxu0 0
    %4113 = vmatpush1.bf16.msra.mxu0 0
    %4114 = vmatprep.subr.bf16.mxu0 0
    %4115 = vmatpush1.bf16.msra.mxu0 0
    %4116 = vmatprep.subr.bf16.mxu0 0
    %4117 = vmatpush1.bf16.msra.mxu0 0
    %4118 = vmatprep.subr.bf16.mxu0 0
    %4119 = vmatpush1.bf16.msra.mxu0 0
    %4120 = vmatprep.subr.bf16.mxu0 0
    %4121 = vmatpush1.bf16.msra.mxu0 0
    %4122 = vmatprep.subr.bf16.mxu0 0
    %4123 = vmatpush1.bf16.msra.mxu0 0
    %4124 = vmatprep.subr.bf16.mxu0 0
    %4125 = vmatpush1.bf16.msra.mxu0 0
    %4126 = vmatprep.subr.bf16.mxu0 0
    %4127 = vmatpush1.bf16.msra.mxu0 0
    %4128 = vmatprep.subr.bf16.mxu0 0
    %4129 = vmatpush1.bf16.msra.mxu0 0
    %4130 = vmatprep.subr.bf16.mxu0 0
    %4131 = vmatpush1.bf16.msra.mxu0 0
    %4132 = vmatprep.mubr.bf16.mxu0 0
    %4133 = vmatmul.mubr.bf16.gmra.mrb[0].mxu0 %v4092
    %v4134 = vpop.f32.mrb[0].mxu0
    %v4135 = vadd.f32 %v4090, %v4134
    %v4136 = vpop.f32.mrb[0].mxu0
    %v4137 = vpop.f32.mrb[0].mxu0
    %v4138 = vadd.f32 %v4090, %v4137
    %v4139 = vpop.f32.mrb[0].mxu0
    %4140 = vmatprep.mubr.bf16.mxu0 0
    %4141 = vmatmul.mubr.bf16.gmra.mrb[0].mxu0 %v4095
    %v4142 = vpop.f32.mrb[0].mxu0
    %v4143 = vadd.f32 %v4090, %v4142
    %v4144 = vpop.f32.mrb[0].mxu0
    %v4145 = vpop.f32.mrb[0].mxu0
    %v4146 = vadd.f32 %v4090, %v4145
    %v4147 = vpop.f32.mrb[0].mxu0
    %4148 = vmatprep.mubr.bf16.mxu0 0
    %4149 = vmatmul.mubr.bf16.gmra.mrb[0].mxu0 %v4098
    %v4150 = vpop.f32.mrb[0].mxu0
    %v4151 = vadd.f32 %v4090, %v4150
    %v4152 = vpop.f32.mrb[0].mxu0
    %v4153 = vpop.f32.mrb[0].mxu0
    %v4154 = vadd.f32 %v4090, %v4153
    %v4155 = vpop.f32.mrb[0].mxu0
    %4156 = vdwg.mxu0
    %v4157 = vmax.f32 %v4135, 0.0
    %v4158 = vmax.f32 %v4138, 0.0
    %v4159 = vmax.f32 %v4143, 0.0
    %v4160 = vmax.f32 %v4146, 0.0
    %v4161 = vmax.f32 %v4151, 0.0
    %v4162 = vmax.f32 %v4154, 0.0
    %v4163 = vpack.c.bf16 %v4158, %v4157
    %v4164 = vpack.c.bf16 %v4160, %v4159
    %v4165 = vpack.c.bf16 %v4162, %v4161
    %v4166 = vlaneseq
    %v4167 = vshrl.u32 %v4166, 7
    %v4168 = vsub.s32 0, %v4167
    %v4169 = vrot.slane %v241, %v4168
    %v4171 = vsel %vm360, %v4163, 0
    %v4174 = vsel %vm360, %v4164, 0
    %v4177 = vsel %vm360, %v4165, 0
    %4179 = vmatprep.subr.bf16.mxu0 0
    %4180 = vmatpush1.bf16.msra.mxu0 %v239
    %4181 = vmatprep.subr.bf16.mxu0 0
    %4182 = vmatpush1.bf16.msra.mxu0 %v240
    %4183 = vmatprep.subr.bf16.mxu0 0
    %4184 = vmatpush1.bf16.msra.mxu0 0
    %4185 = vmatprep.subr.bf16.mxu0 0
    %4186 = vmatpush1.bf16.msra.mxu0 0
    %4187 = vmatprep.subr.bf16.mxu0 0
    %4188 = vmatpush1.bf16.msra.mxu0 0
    %4189 = vmatprep.subr.bf16.mxu0 0
    %4190 = vmatpush1.bf16.msra.mxu0 0
    %4191 = vmatprep.subr.bf16.mxu0 0
    %4192 = vmatpush1.bf16.msra.mxu0 0
    %4193 = vmatprep.subr.bf16.mxu0 0
    %4194 = vmatpush1.bf16.msra.mxu0 0
    %4195 = vmatprep.subr.bf16.mxu0 0
    %4196 = vmatpush1.bf16.msra.mxu0 0
    %4197 = vmatprep.subr.bf16.mxu0 0
    %4198 = vmatpush1.bf16.msra.mxu0 0
    %4199 = vmatprep.subr.bf16.mxu0 0
    %4200 = vmatpush1.bf16.msra.mxu0 0
    %4201 = vmatprep.subr.bf16.mxu0 0
    %4202 = vmatpush1.bf16.msra.mxu0 0
    %4203 = vmatprep.subr.bf16.mxu0 0
    %4204 = vmatpush1.bf16.msra.mxu0 0
    %4205 = vmatprep.subr.bf16.mxu0 0
    %4206 = vmatpush1.bf16.msra.mxu0 0
    %4207 = vmatprep.subr.bf16.mxu0 0
    %4208 = vmatpush1.bf16.msra.mxu0 0
    %4209 = vmatprep.subr.bf16.mxu0 0
    %4210 = vmatpush1.bf16.msra.mxu0 0
    %4211 = vmatprep.mubr.bf16.mxu0 0
    %4212 = vmatmul.mubr.bf16.gmra.mrb[0].mxu0 %v4171
    %v4213 = vpop.f32.mrb[0].mxu0
    %v4214 = vadd.f32 %v4169, %v4213
    %v4215 = vpop.f32.mrb[0].mxu0
    %v4216 = vpop.f32.mrb[0].mxu0
    %v4217 = vadd.f32 %v4169, %v4216
    %v4218 = vpop.f32.mrb[0].mxu0
    %4219 = vmatprep.mubr.bf16.mxu0 0
    %4220 = vmatmul.mubr.bf16.gmra.mrb[0].mxu0 %v4174
    %v4221 = vpop.f32.mrb[0].mxu0
    %v4222 = vadd.f32 %v4169, %v4221
    %v4223 = vpop.f32.mrb[0].mxu0
    %v4224 = vpop.f32.mrb[0].mxu0
    %v4225 = vadd.f32 %v4169, %v4224
    %v4226 = vpop.f32.mrb[0].mxu0
    %4227 = vmatprep.mubr.bf16.mxu0 0
    %4228 = vmatmul.mubr.bf16.gmra.mrb[0].mxu0 %v4177
    %v4229 = vpop.f32.mrb[0].mxu0
    %v4230 = vadd.f32 %v4169, %v4229
    %v4231 = vpop.f32.mrb[0].mxu0
    %v4232 = vpop.f32.mrb[0].mxu0
    %v4233 = vadd.f32 %v4169, %v4232
    %v4234 = vpop.f32.mrb[0].mxu0
    %4235 = vdwg.mxu0
    %v4236 = vmax.f32 %v4214, 0.0
    %v4237 = vmax.f32 %v4217, 0.0
    %v4238 = vmax.f32 %v4222, 0.0
    %v4239 = vmax.f32 %v4225, 0.0
    %v4240 = vmax.f32 %v4230, 0.0
    %v4241 = vmax.f32 %v4233, 0.0
    %v4242 = vpack.c.bf16 %v4237, %v4236
    %v4243 = vpack.c.bf16 %v4239, %v4238
    %v4244 = vpack.c.bf16 %v4241, %v4240
    %v4245 = vlaneseq
    %v4246 = vshrl.u32 %v4245, 7
    %v4247 = vsub.s32 0, %v4246
    %v4248 = vrot.slane %v248, %v4247
    %v4250 = vsel %vm360, %v4242, 0
    %v4253 = vsel %vm360, %v4243, 0
    %v4256 = vsel %vm360, %v4244, 0
    %4258 = vmatprep.subr.bf16.mxu0 0
    %4259 = vmatpush1.bf16.msra.mxu0 %v246
    %4260 = vmatprep.subr.bf16.mxu0 0
    %4261 = vmatpush1.bf16.msra.mxu0 %v247
    %4262 = vmatprep.subr.bf16.mxu0 0
    %4263 = vmatpush1.bf16.msra.mxu0 0
    %4264 = vmatprep.subr.bf16.mxu0 0
    %4265 = vmatpush1.bf16.msra.mxu0 0
    %4266 = vmatprep.subr.bf16.mxu0 0
    %4267 = vmatpush1.bf16.msra.mxu0 0
    %4268 = vmatprep.subr.bf16.mxu0 0
    %4269 = vmatpush1.bf16.msra.mxu0 0
    %4270 = vmatprep.subr.bf16.mxu0 0
    %4271 = vmatpush1.bf16.msra.mxu0 0
    %4272 = vmatprep.subr.bf16.mxu0 0
    %4273 = vmatpush1.bf16.msra.mxu0 0
    %4274 = vmatprep.subr.bf16.mxu0 0
    %4275 = vmatpush1.bf16.msra.mxu0 0
    %4276 = vmatprep.subr.bf16.mxu0 0
    %4277 = vmatpush1.bf16.msra.mxu0 0
    %4278 = vmatprep.subr.bf16.mxu0 0
    %4279 = vmatpush1.bf16.msra.mxu0 0
    %4280 = vmatprep.subr.bf16.mxu0 0
    %4281 = vmatpush1.bf16.msra.mxu0 0
    %4282 = vmatprep.subr.bf16.mxu0 0
    %4283 = vmatpush1.bf16.msra.mxu0 0
    %4284 = vmatprep.subr.bf16.mxu0 0
    %4285 = vmatpush1.bf16.msra.mxu0 0
    %4286 = vmatprep.subr.bf16.mxu0 0
    %4287 = vmatpush1.bf16.msra.mxu0 0
    %4288 = vmatprep.subr.bf16.mxu0 0
    %4289 = vmatpush1.bf16.msra.mxu0 0
    %4290 = vmatprep.mubr.bf16.mxu0 0
    %4291 = vmatmul.mubr.bf16.gmra.mrb[0].mxu0 %v4250
    %v4292 = vpop.f32.mrb[0].mxu0
    %v4293 = vadd.f32 %v4248, %v4292
    %v4294 = vpop.f32.mrb[0].mxu0
    %v4295 = vpop.f32.mrb[0].mxu0
    %v4296 = vadd.f32 %v4248, %v4295
    %v4297 = vpop.f32.mrb[0].mxu0
    %4298 = vmatprep.mubr.bf16.mxu0 0
    %4299 = vmatmul.mubr.bf16.gmra.mrb[0].mxu0 %v4253
    %v4300 = vpop.f32.mrb[0].mxu0
    %v4301 = vadd.f32 %v4248, %v4300
    %v4302 = vpop.f32.mrb[0].mxu0
    %v4303 = vpop.f32.mrb[0].mxu0
    %v4304 = vadd.f32 %v4248, %v4303
    %v4305 = vpop.f32.mrb[0].mxu0
    %4306 = vmatprep.mubr.bf16.mxu0 0
    %4307 = vmatmul.mubr.bf16.gmra.mrb[0].mxu0 %v4256
    %v4308 = vpop.f32.mrb[0].mxu0
    %v4309 = vadd.f32 %v4248, %v4308
    %v4310 = vpop.f32.mrb[0].mxu0
    %v4311 = vpop.f32.mrb[0].mxu0
    %v4312 = vadd.f32 %v4248, %v4311
    %v4313 = vpop.f32.mrb[0].mxu0
    %4314 = vdwg.mxu0
    %v4315 = vmax.f32 %v4293, 0.0
    %v4316 = vmax.f32 %v4296, 0.0
    %v4317 = vmax.f32 %v4301, 0.0
    %v4318 = vmax.f32 %v4304, 0.0
    %v4319 = vmax.f32 %v4309, 0.0
    %v4320 = vmax.f32 %v4312, 0.0
    %v4321 = vpack.c.bf16 %v4316, %v4315
    %v4322 = vpack.c.bf16 %v4318, %v4317
    %v4323 = vpack.c.bf16 %v4320, %v4319
    %v4324 = vlaneseq
    %v4325 = vshrl.u32 %v4324, 7
    %v4326 = vsub.s32 0, %v4325
    %v4327 = vrot.slane %v255, %v4326
    %v4329 = vsel %vm360, %v4321, 0
    %v4332 = vsel %vm360, %v4322, 0
    %v4335 = vsel %vm360, %v4323, 0
    %4337 = vmatprep.subr.bf16.mxu0 0
    %4338 = vmatpush1.bf16.msra.mxu0 %v253
    %4339 = vmatprep.subr.bf16.mxu0 0
    %4340 = vmatpush1.bf16.msra.mxu0 %v254
    %4341 = vmatprep.subr.bf16.mxu0 0
    %4342 = vmatpush1.bf16.msra.mxu0 0
    %4343 = vmatprep.subr.bf16.mxu0 0
    %4344 = vmatpush1.bf16.msra.mxu0 0
    %4345 = vmatprep.subr.bf16.mxu0 0
    %4346 = vmatpush1.bf16.msra.mxu0 0
    %4347 = vmatprep.subr.bf16.mxu0 0
    %4348 = vmatpush1.bf16.msra.mxu0 0
    %4349 = vmatprep.subr.bf16.mxu0 0
    %4350 = vmatpush1.bf16.msra.mxu0 0
    %4351 = vmatprep.subr.bf16.mxu0 0
    %4352 = vmatpush1.bf16.msra.mxu0 0
    %4353 = vmatprep.subr.bf16.mxu0 0
    %4354 = vmatpush1.bf16.msra.mxu0 0
    %4355 = vmatprep.subr.bf16.mxu0 0
    %4356 = vmatpush1.bf16.msra.mxu0 0
    %4357 = vmatprep.subr.bf16.mxu0 0
    %4358 = vmatpush1.bf16.msra.mxu0 0
    %4359 = vmatprep.subr.bf16.mxu0 0
    %4360 = vmatpush1.bf16.msra.mxu0 0
    %4361 = vmatprep.subr.bf16.mxu0 0
    %4362 = vmatpush1.bf16.msra.mxu0 0
    %4363 = vmatprep.subr.bf16.mxu0 0
    %4364 = vmatpush1.bf16.msra.mxu0 0
    %4365 = vmatprep.subr.bf16.mxu0 0
    %4366 = vmatpush1.bf16.msra.mxu0 0
    %4367 = vmatprep.subr.bf16.mxu0 0
    %4368 = vmatpush1.bf16.msra.mxu0 0
    %4369 = vmatprep.mubr.bf16.mxu0 0
    %4370 = vmatmul.mubr.bf16.gmra.mrb[0].mxu0 %v4329
    %v4371 = vpop.f32.mrb[0].mxu0
    %v4372 = vadd.f32 %v4327, %v4371
    %v4373 = vpop.f32.mrb[0].mxu0
    %v4374 = vpop.f32.mrb[0].mxu0
    %v4375 = vadd.f32 %v4327, %v4374
    %v4376 = vpop.f32.mrb[0].mxu0
    %4377 = vmatprep.mubr.bf16.mxu0 0
    %4378 = vmatmul.mubr.bf16.gmra.mrb[0].mxu0 %v4332
    %v4379 = vpop.f32.mrb[0].mxu0
    %v4380 = vadd.f32 %v4327, %v4379
    %v4381 = vpop.f32.mrb[0].mxu0
    %v4382 = vpop.f32.mrb[0].mxu0
    %v4383 = vadd.f32 %v4327, %v4382
    %v4384 = vpop.f32.mrb[0].mxu0
    %4385 = vmatprep.mubr.bf16.mxu0 0
    %4386 = vmatmul.mubr.bf16.gmra.mrb[0].mxu0 %v4335
    %v4387 = vpop.f32.mrb[0].mxu0
    %v4388 = vadd.f32 %v4327, %v4387
    %v4389 = vpop.f32.mrb[0].mxu0
    %v4390 = vpop.f32.mrb[0].mxu0
    %v4391 = vadd.f32 %v4327, %v4390
    %v4392 = vpop.f32.mrb[0].mxu0
    %4393 = vdwg.mxu0
    %v4394 = vsub.f32 0.0, %v4372
    %v4395 = vsub.f32 0.0, %v4375
    %v4396 = vsub.f32 0.0, %v4380
    %v4397 = vsub.f32 0.0, %v4383
    %v4398 = vsub.f32 0.0, %v4388
    %v4399 = vsub.f32 0.0, %v4391
    %v4400 = vmul.f32 %v4394, 1.442695
    %v4401 = vpow.pop %v4400
    %v4402 = vmul.f32 %v4395, 1.442695
    %v4403 = vpow.pop %v4402
    %v4404 = vmul.f32 %v4396, 1.442695
    %v4405 = vpow.pop %v4404
    %v4406 = vmul.f32 %v4397, 1.442695
    %v4407 = vpow.pop %v4406
    %v4408 = vmul.f32 %v4398, 1.442695
    %v4409 = vpow.pop %v4408
    %v4410 = vmul.f32 %v4399, 1.442695
    %v4411 = vpow.pop %v4410
    %v4412 = vadd.f32 %v4401, 1.0
    %v4413 = vadd.f32 %v4403, 1.0
    %v4414 = vadd.f32 %v4405, 1.0
    %v4415 = vadd.f32 %v4407, 1.0
    %v4416 = vadd.f32 %v4409, 1.0
    %v4417 = vadd.f32 %v4411, 1.0
    %v4418 = vrcp.pop %v4412
    %v4419 = vrcp.pop %v4413
    %v4420 = vrcp.pop %v4414
    %v4421 = vrcp.pop %v4415
    %v4422 = vrcp.pop %v4416
    %v4423 = vrcp.pop %v4417
    %v4424 = vrcp.pop %v896
    %v4425 = vmul.f32 %v3936, %v4424
    %v4426 = vrcp.pop %v1393
    %v4427 = vmul.f32 %v3937, %v4426
    %v4428 = vrcp.pop %v1889
    %v4429 = vmul.f32 %v3938, %v4428
    %v4430 = vrcp.pop %v2385
    %v4431 = vmul.f32 %v3939, %v4430
    %v4432 = vrcp.pop %v2881
    %v4433 = vmul.f32 %v3940, %v4432
    %v4434 = vrcp.pop %v3377
    %v4435 = vmul.f32 %v3941, %v4434
    %v4436 = vlog2.pop %v4425
    %v4437 = vmul.f32 %v4436, 0.6931472
    %v4438 = vlog2.pop %v4427
    %v4439 = vmul.f32 %v4438, 0.6931472
    %v4440 = vlog2.pop %v4429
    %v4441 = vmul.f32 %v4440, 0.6931472
    %v4442 = vlog2.pop %v4431
    %v4443 = vmul.f32 %v4442, 0.6931472
    %v4444 = vlog2.pop %v4433
    %v4445 = vmul.f32 %v4444, 0.6931472
    %v4446 = vlog2.pop %v4435
    %v4447 = vmul.f32 %v4446, 0.6931472
    %v4448 = vmul.f32 %v4437, 2.0
    %v4449 = vmul.f32 %v4439, 2.0
    %v4450 = vmul.f32 %v4441, 2.0
    %v4451 = vmul.f32 %v4443, 2.0
    %v4452 = vmul.f32 %v4445, 2.0
    %v4453 = vmul.f32 %v4447, 2.0
    %v4454 = vmul.f32 %v896, %v896
    %v4455 = vmul.f32 %v1393, %v1393
    %v4456 = vmul.f32 %v1889, %v1889
    %v4457 = vmul.f32 %v2385, %v2385
    %v4458 = vmul.f32 %v2881, %v2881
    %v4459 = vmul.f32 %v3377, %v3377
    %v4460 = vsub.f32 %v884, %v3872
    %v4461 = vsub.f32 %v1381, %v3875
    %v4462 = vsub.f32 %v1877, %v3880
    %v4463 = vsub.f32 %v2373, %v3883
    %v4464 = vsub.f32 %v2869, %v3888
    %v4465 = vsub.f32 %v3365, %v3891
    %v4466 = vmul.f32 %v4460, %v4460
    %v4467 = vmul.f32 %v4461, %v4461
    %v4468 = vmul.f32 %v4462, %v4462
    %v4469 = vmul.f32 %v4463, %v4463
    %v4470 = vmul.f32 %v4464, %v4464
    %v4471 = vmul.f32 %v4465, %v4465
    %4478 = vrot.lane.b32.xlu0 %v4466, 16
    %v4479 = vpop.permute.xlu0 %4478
    %4480 = vrot.lane.b32.xlu0 %v4467, 16
    %v4481 = vpop.permute.xlu0 %4480
    %4482 = vrot.lane.b32.xlu0 %v4468, 16
    %v4483 = vpop.permute.xlu0 %4482
    %4484 = vrot.lane.b32.xlu0 %v4469, 16
    %v4485 = vpop.permute.xlu0 %4484
    %4486 = vrot.lane.b32.xlu0 %v4470, 16
    %v4487 = vpop.permute.xlu0 %4486
    %4488 = vrot.lane.b32.xlu0 %v4471, 16
    %v4489 = vpop.permute.xlu0 %4488
    %v4496 = vadd.f32 %v4454, %v4479
    %v4497 = vadd.f32 %v4455, %v4481
    %v4498 = vadd.f32 %v4456, %v4483
    %v4499 = vadd.f32 %v4457, %v4485
    %v4500 = vadd.f32 %v4458, %v4487
    %v4501 = vadd.f32 %v4459, %v4489
    %v4502 = vmul.f32 %v3936, %v3936
    %v4503 = vmul.f32 %v3937, %v3937
    %v4504 = vmul.f32 %v3938, %v3938
    %v4505 = vmul.f32 %v3939, %v3939
    %v4506 = vmul.f32 %v3940, %v3940
    %v4507 = vmul.f32 %v3941, %v3941
    %v4508 = vrcp.pop %v4502
    %v4509 = vmul.f32 %v4496, %v4508
    %v4510 = vrcp.pop %v4503
    %v4511 = vmul.f32 %v4497, %v4510
    %v4512 = vrcp.pop %v4504
    %v4513 = vmul.f32 %v4498, %v4512
    %v4514 = vrcp.pop %v4505
    %v4515 = vmul.f32 %v4499, %v4514
    %v4516 = vrcp.pop %v4506
    %v4517 = vmul.f32 %v4500, %v4516
    %v4518 = vrcp.pop %v4507
    %v4519 = vmul.f32 %v4501, %v4518
    %v4520 = vadd.f32 %v4448, %v4509
    %v4521 = vadd.f32 %v4449, %v4511
    %v4522 = vadd.f32 %v4450, %v4513
    %v4523 = vadd.f32 %v4451, %v4515
    %v4524 = vadd.f32 %v4452, %v4517
    %v4525 = vadd.f32 %v4453, %v4519
    %v4526 = vsub.f32 %v4520, 1.0
    %v4527 = vsub.f32 %v4521, 1.0
    %v4528 = vsub.f32 %v4522, 1.0
    %v4529 = vsub.f32 %v4523, 1.0
    %v4530 = vsub.f32 %v4524, 1.0
    %v4531 = vsub.f32 %v4525, 1.0
    %v4532 = vsub.f32 %v4418, %v257
    %v4533 = vsub.f32 %v4419, %v258
    %v4534 = vsub.f32 %v4420, %v259
    %v4535 = vsub.f32 %v4421, %v260
    %v4536 = vsub.f32 %v4422, %v261
    %v4537 = vsub.f32 %v4423, %v262
    %v4538 = vlaneseq
    %v4539 = vshrl.u32 %v4538, 7
    %v4540 = vsub.s32 0, %v4539
    %v4541 = vrot.slane %v256, %v4540
    %v4542 = vmul.f32 %v4532, %v4541
    %v4543 = vmul.f32 %v4533, %v4541
    %v4544 = vmul.f32 %v4534, %v4541
    %v4545 = vmul.f32 %v4535, %v4541
    %v4546 = vmul.f32 %v4536, %v4541
    %v4547 = vmul.f32 %v4537, %v4541
    %4554 = vrot.lane.b32.xlu0 %v4526, 112
    %v4555 = vpop.permute.xlu0 %4554
    %4556 = vrot.lane.b32.xlu0 %v4527, 112
    %v4557 = vpop.permute.xlu0 %4556
    %4558 = vrot.lane.b32.xlu0 %v4528, 112
    %v4559 = vpop.permute.xlu0 %4558
    %4560 = vrot.lane.b32.xlu0 %v4529, 112
    %v4561 = vpop.permute.xlu0 %4560
    %4562 = vrot.lane.b32.xlu0 %v4530, 112
    %v4563 = vpop.permute.xlu0 %4562
    %4564 = vrot.lane.b32.xlu0 %v4531, 112
    %v4565 = vpop.permute.xlu0 %4564
    %v4572 = vsel %vm904, %v4555, 0.0
    %v4573 = vsel %vm904, %v4557, 0.0
    %v4574 = vadd.f32 %v4572, %v4573
    %v4575 = vsel %vm904, %v4559, 0.0
    %v4576 = vadd.f32 %v4574, %v4575
    %v4577 = vsel %vm904, %v4561, 0.0
    %v4578 = vadd.f32 %v4576, %v4577
    %v4579 = vsel %vm904, %v4563, 0.0
    %v4580 = vadd.f32 %v4578, %v4579
    %v4581 = vsel %vm904, %v4565, 0.0
    %v4582 = vadd.f32 %v4580, %v4581
    %4583 = vadd.xlane.f32.xlu0 %v4582
    %v4584 = vpop.xlane.xlu0 %4583
    %v4585 = vrot.slane %v4584, 4
    %v4586 = vadd.f32 %v4584, %v4585
    %v4587 = vrot.slane %v4586, 2
    %v4588 = vadd.f32 %v4586, %v4587
    %v4589 = vrot.slane %v4588, 1
    %v4590 = vadd.f32 %v4588, %v4589
    %s4591 = vtos %v4590
    %v4592 = vstv %s4591
    %v4593 = vmul.f32 %v4592, 0.5
    %v4594 = vmul.f32 %v4542, %v4542
    %v4595 = vmul.f32 %v4543, %v4543
    %v4596 = vmul.f32 %v4544, %v4544
    %v4597 = vmul.f32 %v4545, %v4545
    %v4598 = vmul.f32 %v4546, %v4546
    %v4599 = vmul.f32 %v4547, %v4547
    %v4600 = vsel %vm276, %v4594, 0.0
    %v4601 = vsel %vm276, %v4595, 0.0
    %v4602 = vadd.f32 %v4600, %v4601
    %v4603 = vsel %vm276, %v4596, 0.0
    %v4604 = vadd.f32 %v4602, %v4603
    %v4605 = vsel %vm276, %v4597, 0.0
    %v4606 = vadd.f32 %v4604, %v4605
    %v4607 = vsel %vm276, %v4598, 0.0
    %v4608 = vadd.f32 %v4606, %v4607
    %v4609 = vsel %vm276, %v4599, 0.0
    %v4610 = vadd.f32 %v4608, %v4609
    %4611 = vadd.xlane.f32.xlu0 %v4610
    %v4612 = vpop.xlane.xlu0 %4611
    %v4613 = vrot.slane %v4612, 4
    %v4614 = vadd.f32 %v4612, %v4613
    %v4615 = vrot.slane %v4614, 2
    %v4616 = vadd.f32 %v4614, %v4615
    %v4617 = vrot.slane %v4616, 1
    %v4618 = vadd.f32 %v4616, %v4617
    %s4619 = vtos %v4618
    %v4620 = vstv %s4619
    %v4621 = vrcp.pop 64.0
    %v4622 = vmul.f32 %v4620, %v4621
    %4623 = vst [vmem:[#allocation5] sm:$0x1] %v4593
    %4624 = vst [vmem:[#allocation5 + $0x1] sm:$0x1] %v4622
    // Predicated region
    $region18: #{tpu_custom_call.1} parent=1 // pred_check
      _
    $region19: #{tpu_custom_call.1} parent=1 // pred_check_branch
      %4626 = sbr.rel (0) target = $region21
    $region20: #{tpu_custom_call.1} parent=1 // pred_region
      %s4628 = ssub.s32 32, 32
      %4629 = vsyncadd [#allocation4], %s4628
      %s4631 = sshll.u32 [#allocation5], 4
      %s4632 = int_to_ptr.vmem [resolvable:$true] %s4631
      %4634 = dma.vmem_to_hbm [thread:$0]  %s4632, 32, %s3, [#allocation4]
    $region21: #{tpu_custom_call.1} parent=1 // pred_fallthru
      _
    // Predicated region
    $region22: #{tpu_custom_call.1} parent=1 // pred_check
      _
    $region23: #{tpu_custom_call.1} parent=1 // pred_check_branch
      %4636 = sbr.rel (0) target = $region25
    $region24: #{tpu_custom_call.1} parent=1 // pred_region
      %4637 = dma.done [#allocation4], 32
    $region25: #{tpu_custom_call.1} parent=1 // pred_fallthru
      _
    %4638 = vsyncpa [#allocation3], 1
    %4639 = vsyncpa [#allocation4], 1

</llo_original>
